<compile_context>
chip_gen: v5e
topology: v5e:2x2
jax: 0.10.0
libtpu: 0.0.40
codegen_flags: <defaults>
</compile_context>

<pallas_src>
import functools

import jax
import jax.numpy as jnp
import numpy as np
from jax import lax
from jax.experimental import pallas as pl
from jax.experimental.pallas import tpu as pltpu


def _round_up(x, m):
    return (x + m - 1) // m * m


def _lstm_classifier_kernel(num_layers, S, Bp, Hp, unroll,
                            t_last_ref, mask_ref, x_ref, *refs):
    """refs = [(w_ih_T, w_hh_T, bias) * num_layers, w_head, b_head,
               out_ref, seq_scr, gates_scr]"""
    layer_refs = refs[: 3 * num_layers]
    w_head_ref, b_head_ref, out_ref, seq_scr, gates_scr = refs[3 * num_layers:]

    for layer in range(num_layers):
        w_ih_ref = layer_refs[3 * layer]      # (in_pad, 4*Hp)  bf16
        w_hh_ref = layer_refs[3 * layer + 1]  # (Hp, 4*Hp)      bf16
        b_ref = layer_refs[3 * layer + 2]     # (1, 4*Hp)       f32

        # (1) Hoisted input projection: one big MXU matmul for all timesteps.
        src_ref = x_ref if layer == 0 else seq_scr
        gates_scr[...] = (
            jnp.dot(src_ref[...], w_ih_ref[...],
                    preferred_element_type=jnp.float32)
            + b_ref[...])                     # (S*Bp, 4*Hp) f32, bias folded in

        # (2) Time recurrence: only h @ W_hh per step; unrolled for LLO overlap.
        def step_block(blk, carry, _w_hh_ref=w_hh_ref):
            h, c = carry                      # f32 (Bp, Hp) each
            for u in range(unroll):
                t = blk * unroll + u
                row = pl.multiple_of(t * Bp, Bp)
                g = gates_scr[pl.ds(row, Bp), :] + jnp.dot(
                    h.astype(jnp.bfloat16), _w_hh_ref[...],
                    preferred_element_type=jnp.float32)
                i_g = jax.nn.sigmoid(g[:, 0 * Hp:1 * Hp])
                f_g = jax.nn.sigmoid(g[:, 1 * Hp:2 * Hp])
                g_g = jnp.tanh(g[:, 2 * Hp:3 * Hp])
                o_g = jax.nn.sigmoid(g[:, 3 * Hp:4 * Hp])
                c = f_g * c + i_g * g_g
                h = o_g * jnp.tanh(c)
                # lane/sublane-aligned dense store of this layer's output at t
                seq_scr[pl.ds(row, Bp), :] = h.astype(jnp.bfloat16)
            return (h, c)

        h0 = jnp.zeros((Bp, Hp), jnp.float32)
        c0 = jnp.zeros((Bp, Hp), jnp.float32)
        lax.fori_loop(0, S // unroll, step_block, (h0, c0))

    # ---- padded last-timestep selection + fused (fc @ fc2) head ----
    row_last = pl.multiple_of(t_last_ref[0] * Bp, Bp)
    h_last = seq_scr[pl.ds(row_last, Bp), :].astype(jnp.float32) * mask_ref[...]
    out_ref[...] = (
        jnp.dot(h_last.astype(jnp.bfloat16), w_head_ref[...],
                preferred_element_type=jnp.float32)
        + b_head_ref[...])


def rnn_classifier_forward(x, params, *, num_layers, hidden_size, num_classes):
    """x: (B, S, input_size) float32 (batch_first, like the PyTorch module)."""
    B, S, I = x.shape
    H = hidden_size
    C1 = num_classes - 1

    Bp = _round_up(B, 16)    # sublane pad (16 also covers bf16 sublane packing)
    Hp = _round_up(H, 128)   # lane-align each gate block
    Ip = _round_up(I, 128)   # lane-align the input features
    Cp = _round_up(C1, 128)  # lane-dense output store

    x = x.astype(jnp.float32)
    # length_of_sequence = (x != 0).any(dim=2).sum(dim=1)
    lengths = jnp.sum(jnp.any(x != 0, axis=2), axis=1).astype(jnp.int32)  # (B,)
    max_len = jnp.max(lengths)
    t_last = (max_len - 1).astype(jnp.int32).reshape(1)                    # SMEM
    mask = jnp.zeros((Bp, 1), jnp.float32).at[:B, 0].set(
        (lengths == max_len).astype(jnp.float32))

    # Time-major, batch/lane padded, folded to (S*Bp, Ip), bf16 for the MXU.
    x_t = jnp.transpose(x, (1, 0, 2))                                      # (S,B,I)
    x_t = jnp.pad(x_t, ((0, 0), (0, Bp - B), (0, Ip - I)))
    x2d = x_t.reshape(S * Bp, Ip).astype(jnp.bfloat16)

    def pad_gates_T(w, in_dim, in_pad):
        # (4H, in_dim) -> (in_pad, 4*Hp), each (i,f,g,o) block lane-padded.
        wT = w.T.reshape(in_dim, 4, H)
        wT = jnp.pad(wT, ((0, in_pad - in_dim), (0, 0), (0, Hp - H)))
        return wT.reshape(in_pad, 4 * Hp)

    args = [t_last, mask, x2d]
    in_specs = [
        pl.BlockSpec(memory_space=pltpu.MemorySpace.SMEM),
        pl.BlockSpec(memory_space=pltpu.MemorySpace.VMEM),
        pl.BlockSpec(memory_space=pltpu.MemorySpace.VMEM),
    ]
    for l in range(num_layers):
        w_ih, w_hh, b_ih, b_hh = params["lstm"][l]
        in_dim = I if l == 0 else H
        in_pad = Ip if l == 0 else Hp
        bias = jnp.pad((b_ih + b_hh).reshape(4, H), ((0, 0), (0, Hp - H)))
        args += [
            pad_gates_T(w_ih, in_dim, in_pad).astype(jnp.bfloat16),
            pad_gates_T(w_hh, H, Hp).astype(jnp.bfloat16),
            bias.reshape(1, 4 * Hp).astype(jnp.float32),
        ]
        in_specs += [pl.BlockSpec(memory_space=pltpu.MemorySpace.VMEM)] * 3

    # Fused head: fc -> fc2 is a single affine map (no nonlinearity between).
    w_head = params["fc_w"].T @ params["fc2_w"].T                    # (H, C1)
    b_head = params["fc_b"] @ params["fc2_w"].T + params["fc2_b"]    # (C1,)
    w_head = jnp.pad(w_head, ((0, Hp - H), (0, Cp - C1))).astype(jnp.bfloat16)
    b_head = jnp.pad(b_head.reshape(1, C1),
                     ((0, 0), (0, Cp - C1))).astype(jnp.float32)
    args += [w_head, b_head]
    in_specs += [pl.BlockSpec(memory_space=pltpu.MemorySpace.VMEM)] * 2

    unroll = 1
    for cand in (4, 2):
        if S % cand == 0:
            unroll = cand
            break

    kernel = functools.partial(_lstm_classifier_kernel,
                               num_layers, S, Bp, Hp, unroll)

    scratch_shapes = [
        pltpu.VMEM((S * Bp, Hp), jnp.bfloat16),      # per-layer output sequence
        pltpu.VMEM((S * Bp, 4 * Hp), jnp.float32),   # precomputed input gates
    ]

    # VMEM budget + cost estimate (advisory, lets XLA schedule the prologue).
    in_bytes = sum(int(np.prod(a.shape)) * a.dtype.itemsize for a in args)
    scratch_bytes = S * Bp * Hp * 2 + S * Bp * 4 * Hp * 4
    out_bytes = Bp * Cp * 4
    total_bytes = in_bytes + scratch_bytes + out_bytes
    vmem_limit = int(min(96 * 2**20, max(32 * 2**20, 2 * total_bytes + (4 << 20))))

    flops = 2 * Bp * Hp * Cp
    for l in range(num_layers):
        in_pad = Ip if l == 0 else Hp
        flops += 2 * S * Bp * in_pad * 4 * Hp   # input projection
        flops += 2 * S * Bp * Hp * 4 * Hp       # recurrent matmuls
    cost = pl.CostEstimate(
        flops=int(flops),
        transcendentals=int(num_layers * S * Bp * Hp * 5),
        bytes_accessed=int(in_bytes + out_bytes))

    out = pl.pallas_call(
        kernel,
        out_shape=jax.ShapeDtypeStruct((Bp, Cp), jnp.float32),
        in_specs=in_specs,
        out_specs=pl.BlockSpec(memory_space=pltpu.MemorySpace.VMEM),
        scratch_shapes=scratch_shapes,
        compiler_params=pltpu.CompilerParams(vmem_limit_bytes=vmem_limit),
        cost_estimate=cost,
    )(*args)

    # out.flatten(start_dim=0) -> (B * (num_classes-1),)
    return out[:B, :C1].reshape(-1)


# ------------------------- deterministic parameter init ----------------------
def init_params(key, input_size, hidden_size, num_layers, num_classes):
    H, H2, C1 = hidden_size, hidden_size // 2, num_classes - 1
    keys = jax.random.split(key, 4 * num_layers + 4)
    idx = 0
    params = {"lstm": []}
    k = 1.0 / np.sqrt(H)
    for l in range(num_layers):
        in_dim = input_size if l == 0 else H
        w_ih = jax.random.uniform(keys[idx], (4 * H, in_dim), jnp.float32, -k, k); idx += 1
        w_hh = jax.random.uniform(keys[idx], (4 * H, H), jnp.float32, -k, k); idx += 1
        b_ih = jax.random.uniform(keys[idx], (4 * H,), jnp.float32, -k, k); idx += 1
        b_hh = jax.random.uniform(keys[idx], (4 * H,), jnp.float32, -k, k); idx += 1
        params["lstm"].append((w_ih, w_hh, b_ih, b_hh))
    kf = 1.0 / np.sqrt(H)
    params["fc_w"] = jax.random.uniform(keys[idx], (H2, H), jnp.float32, -kf, kf); idx += 1
    params["fc_b"] = jax.random.uniform(keys[idx], (H2,), jnp.float32, -kf, kf); idx += 1
    kf2 = 1.0 / np.sqrt(H2)
    params["fc2_w"] = jax.random.uniform(keys[idx], (C1, H2), jnp.float32, -kf2, kf2); idx += 1
    params["fc2_b"] = jax.random.uniform(keys[idx], (C1,), jnp.float32, -kf2, kf2); idx += 1
    return params


# ----------------------------- pure-JAX reference ----------------------------
def reference_forward(x, params, *, num_layers, hidden_size, num_classes):
    B, S, I = x.shape
    H = hidden_size
    lengths = jnp.sum(jnp.any(x != 0, axis=2), axis=1)
    max_len = jnp.max(lengths)
    seq = x
    for l in range(num_layers):
        w_ih, w_hh, b_ih, b_hh = params["lstm"][l]
        h = jnp.zeros((B, H), jnp.float32)
        c = jnp.zeros((B, H), jnp.float32)
        outs = []
        for t in range(S):
            gates = seq[:, t, :] @ w_ih.T + h @ w_hh.T + b_ih + b_hh
            i = jax.nn.sigmoid(gates[:, :H]); f = jax.nn.sigmoid(gates[:, H:2 * H])
            g = jnp.tanh(gates[:, 2 * H:3 * H]); o = jax.nn.sigmoid(gates[:, 3 * H:])
            c = f * c + i * g
            h = o * jnp.tanh(c)
            outs.append(h)
        seq = jnp.stack(outs, axis=1)
    h_last = seq[:, max_len - 1, :] * (lengths == max_len)[:, None].astype(jnp.float32)
    z1 = h_last @ params["fc_w"].T + params["fc_b"]
    z2 = z1 @ params["fc2_w"].T + params["fc2_b"]
    return z2.reshape(-1)


if __name__ == "__main__":
    # small shapes consistent with the module's forward
    B, S, input_size, hidden_size, num_layers, num_classes = 2, 8, 16, 32, 2, 5

    key = jax.random.PRNGKey(0)
    k_x, k_p = jax.random.split(key)
    x = jax.random.normal(k_x, (B, S, input_size), jnp.float32)
    # make the second sequence shorter (trailing zero padding), length = 6 vs 8
    x = x.at[1, 6:, :].set(0.0)

    params = init_params(k_p, input_size, hidden_size, num_layers, num_classes)

    fwd = jax.jit(functools.partial(
        rnn_classifier_forward, num_layers=num_layers,
        hidden_size=hidden_size, num_classes=num_classes))

    out = jax.block_until_ready(fwd(x, params))
    assert out.shape == (B * (num_classes - 1),), out.shape

    ref = reference_forward(x, params, num_layers=num_layers,
                            hidden_size=hidden_size, num_classes=num_classes)
    # bf16 matmul operands (f32 accumulate / f32 state) => slightly looser tol
    np.testing.assert_allclose(np.asarray(out), np.asarray(ref),
                               rtol=2e-2, atol=2e-2)

    print("KERNEL_OK")
</pallas_src>

<mosaic_0001>
module attributes {stable_mosaic.version = 11 : i64} {
  func.func @_lstm_classifier_kernel(%arg0: memref<1xi32, #tpu.memory_space<smem>>, %arg1: memref<16x1xf32, #tpu.memory_space<vmem>>, %arg2: memref<128x128xbf16, #tpu.memory_space<vmem>>, %arg3: memref<128x512xbf16, #tpu.memory_space<vmem>>, %arg4: memref<128x512xbf16, #tpu.memory_space<vmem>>, %arg5: memref<1x512xf32, #tpu.memory_space<vmem>>, %arg6: memref<128x512xbf16, #tpu.memory_space<vmem>>, %arg7: memref<128x512xbf16, #tpu.memory_space<vmem>>, %arg8: memref<1x512xf32, #tpu.memory_space<vmem>>, %arg9: memref<128x128xbf16, #tpu.memory_space<vmem>>, %arg10: memref<1x128xf32, #tpu.memory_space<vmem>>, %arg11: memref<16x128xf32, #tpu.memory_space<vmem>>, %arg12: memref<128x128xbf16, #tpu.memory_space<vmem>>, %arg13: memref<128x512xf32, #tpu.memory_space<vmem>>) attributes {dimension_semantics = [], scalar_prefetch = 0 : i64, scratch_operands = 2 : i64, tpu.core_type = #tpu.core_type<tc>} {
    %c0 = arith.constant 0 : index
    %c0_0 = arith.constant 0 : index
    %0 = vector.load %arg2[%c0, %c0_0] : memref<128x128xbf16, #tpu.memory_space<vmem>>, vector<128x128xbf16>
    %c0_1 = arith.constant 0 : index
    %c0_2 = arith.constant 0 : index
    %1 = vector.load %arg3[%c0_1, %c0_2] : memref<128x512xbf16, #tpu.memory_space<vmem>>, vector<128x512xbf16>
    %cst = arith.constant dense<0.000000e+00> : vector<128x512xf32>
    %2 = tpu.matmul %0, %1, %cst {dimension_numbers = #tpu.dot_dimension_numbers<[1], [0], [0], [1], [0, 0, 1, 1], [], []>} : vector<128x128xbf16>, vector<128x512xbf16>, vector<128x512xf32> -> vector<128x512xf32>
    %c0_3 = arith.constant 0 : index
    %c0_4 = arith.constant 0 : index
    %3 = vector.load %arg5[%c0_3, %c0_4] : memref<1x512xf32, #tpu.memory_space<vmem>>, vector<1x512xf32>
    %4 = vector.broadcast %3 : vector<1x512xf32> to vector<128x512xf32>
    %5 = arith.addf %2, %4 : vector<128x512xf32>
    %c0_5 = arith.constant 0 : index
    %c0_6 = arith.constant 0 : index
    %6 = vector.load %arg13[%c0_5, %c0_6] : memref<128x512xf32, #tpu.memory_space<vmem>>, vector<128x512xf32>
    tpu.vector_store %arg13[%c0_5, %c0_6], %5 {strides = array<i32>} : memref<128x512xf32, #tpu.memory_space<vmem>>, vector<128x512xf32>,
    %cst_7 = arith.constant 0.000000e+00 : f32
    %7 = vector.broadcast %cst_7 : f32 to vector<16x128xf32>
    %cst_8 = arith.constant 0.000000e+00 : f32
    %8 = vector.broadcast %cst_8 : f32 to vector<16x128xf32>
    %c0_i32 = arith.constant 0 : i32
    %c2_i32 = arith.constant 2 : i32
    %9 = arith.addi %c0_i32, %c2_i32 : i32
    %c1_i32 = arith.constant 1 : i32
    %10:2 = scf.for %arg14 = %c0_i32 to %9 step %c1_i32 iter_args(%arg15 = %7, %arg16 = %8) -> (vector<16x128xf32>, vector<16x128xf32>)  : i32 {
      %c4_i32 = arith.constant 4 : i32
      %38 = arith.muli %arg14, %c4_i32 : i32
      %c0_i32_36 = arith.constant 0 : i32
      %39 = arith.addi %38, %c0_i32_36 : i32
      %c16_i32_37 = arith.constant 16 : i32
      %40 = arith.muli %39, %c16_i32_37 : i32
      %41 = tpu.assume_multiple %40, 16 : i32
      %42 = arith.index_cast %41 : i32 to index
      %c0_38 = arith.constant 0 : index
      %43 = vector.load %arg13[%42, %c0_38] : memref<128x512xf32, #tpu.memory_space<vmem>>, vector<16x512xf32>
      %44 = arith.truncf %arg15 : vector<16x128xf32> to vector<16x128xbf16>
      %c0_39 = arith.constant 0 : index
      %c0_40 = arith.constant 0 : index
      %45 = vector.load %arg4[%c0_39, %c0_40] : memref<128x512xbf16, #tpu.memory_space<vmem>>, vector<128x512xbf16>
      %cst_41 = arith.constant dense<0.000000e+00> : vector<16x512xf32>
      %46 = tpu.matmul %44, %45, %cst_41 {dimension_numbers = #tpu.dot_dimension_numbers<[1], [0], [0], [1], [0, 0, 1, 1], [], []>} : vector<16x128xbf16>, vector<128x512xbf16>, vector<16x512xf32> -> vector<16x512xf32>
      %47 = arith.addf %43, %46 : vector<16x512xf32>
      %48 = vector.extract_strided_slice %47 {offsets = [0, 0], sizes = [16, 128], strides = [1, 1]} : vector<16x512xf32> to vector<16x128xf32>
      %49 = arith.negf %48 : vector<16x128xf32>
      %50 = math.exp %49 : vector<16x128xf32>
      %cst_42 = arith.constant 1.000000e+00 : f32
      %51 = vector.broadcast %cst_42 : f32 to vector<16x128xf32>
      %52 = arith.addf %51, %50 : vector<16x128xf32>
      %53 = arith.divf %51, %52 : vector<16x128xf32>
      %54 = vector.extract_strided_slice %47 {offsets = [0, 128], sizes = [16, 128], strides = [1, 1]} : vector<16x512xf32> to vector<16x128xf32>
      %55 = arith.negf %54 : vector<16x128xf32>
      %56 = math.exp %55 : vector<16x128xf32>
      %cst_43 = arith.constant 1.000000e+00 : f32
      %57 = vector.broadcast %cst_43 : f32 to vector<16x128xf32>
      %58 = arith.addf %57, %56 : vector<16x128xf32>
      %59 = arith.divf %57, %58 : vector<16x128xf32>
      %60 = vector.extract_strided_slice %47 {offsets = [0, 256], sizes = [16, 128], strides = [1, 1]} : vector<16x512xf32> to vector<16x128xf32>
      %61 = math.tanh %60 : vector<16x128xf32>
      %62 = vector.extract_strided_slice %47 {offsets = [0, 384], sizes = [16, 128], strides = [1, 1]} : vector<16x512xf32> to vector<16x128xf32>
      %63 = arith.negf %62 : vector<16x128xf32>
      %64 = math.exp %63 : vector<16x128xf32>
      %cst_44 = arith.constant 1.000000e+00 : f32
      %65 = vector.broadcast %cst_44 : f32 to vector<16x128xf32>
      %66 = arith.addf %65, %64 : vector<16x128xf32>
      %67 = arith.divf %65, %66 : vector<16x128xf32>
      %68 = arith.mulf %59, %arg16 : vector<16x128xf32>
      %69 = arith.mulf %53, %61 : vector<16x128xf32>
      %70 = arith.addf %68, %69 : vector<16x128xf32>
      %71 = math.tanh %70 : vector<16x128xf32>
      %72 = arith.mulf %67, %71 : vector<16x128xf32>
      %73 = arith.truncf %72 : vector<16x128xf32> to vector<16x128xbf16>
      %74 = arith.index_cast %41 : i32 to index
      %c0_45 = arith.constant 0 : index
      %75 = vector.load %arg12[%74, %c0_45] : memref<128x128xbf16, #tpu.memory_space<vmem>>, vector<16x128xbf16>
      tpu.vector_store %arg12[%74, %c0_45], %73 {strides = array<i32>} : memref<128x128xbf16, #tpu.memory_space<vmem>>, vector<16x128xbf16>,
      %c4_i32_46 = arith.constant 4 : i32
      %76 = arith.muli %arg14, %c4_i32_46 : i32
      %c1_i32_47 = arith.constant 1 : i32
      %77 = arith.addi %76, %c1_i32_47 : i32
      %c16_i32_48 = arith.constant 16 : i32
      %78 = arith.muli %77, %c16_i32_48 : i32
      %79 = tpu.assume_multiple %78, 16 : i32
      %80 = arith.index_cast %79 : i32 to index
      %c0_49 = arith.constant 0 : index
      %81 = vector.load %arg13[%80, %c0_49] : memref<128x512xf32, #tpu.memory_space<vmem>>, vector<16x512xf32>
      %82 = arith.truncf %72 : vector<16x128xf32> to vector<16x128xbf16>
      %c0_50 = arith.constant 0 : index
      %c0_51 = arith.constant 0 : index
      %83 = vector.load %arg4[%c0_50, %c0_51] : memref<128x512xbf16, #tpu.memory_space<vmem>>, vector<128x512xbf16>
      %cst_52 = arith.constant dense<0.000000e+00> : vector<16x512xf32>
      %84 = tpu.matmul %82, %83, %cst_52 {dimension_numbers = #tpu.dot_dimension_numbers<[1], [0], [0], [1], [0, 0, 1, 1], [], []>} : vector<16x128xbf16>, vector<128x512xbf16>, vector<16x512xf32> -> vector<16x512xf32>
      %85 = arith.addf %81, %84 : vector<16x512xf32>
      %86 = vector.extract_strided_slice %85 {offsets = [0, 0], sizes = [16, 128], strides = [1, 1]} : vector<16x512xf32> to vector<16x128xf32>
      %87 = arith.negf %86 : vector<16x128xf32>
      %88 = math.exp %87 : vector<16x128xf32>
      %cst_53 = arith.constant 1.000000e+00 : f32
      %89 = vector.broadcast %cst_53 : f32 to vector<16x128xf32>
      %90 = arith.addf %89, %88 : vector<16x128xf32>
      %91 = arith.divf %89, %90 : vector<16x128xf32>
      %92 = vector.extract_strided_slice %85 {offsets = [0, 128], sizes = [16, 128], strides = [1, 1]} : vector<16x512xf32> to vector<16x128xf32>
      %93 = arith.negf %92 : vector<16x128xf32>
      %94 = math.exp %93 : vector<16x128xf32>
      %cst_54 = arith.constant 1.000000e+00 : f32
      %95 = vector.broadcast %cst_54 : f32 to vector<16x128xf32>
      %96 = arith.addf %95, %94 : vector<16x128xf32>
      %97 = arith.divf %95, %96 : vector<16x128xf32>
      %98 = vector.extract_strided_slice %85 {offsets = [0, 256], sizes = [16, 128], strides = [1, 1]} : vector<16x512xf32> to vector<16x128xf32>
      %99 = math.tanh %98 : vector<16x128xf32>
      %100 = vector.extract_strided_slice %85 {offsets = [0, 384], sizes = [16, 128], strides = [1, 1]} : vector<16x512xf32> to vector<16x128xf32>
      %101 = arith.negf %100 : vector<16x128xf32>
      %102 = math.exp %101 : vector<16x128xf32>
      %cst_55 = arith.constant 1.000000e+00 : f32
      %103 = vector.broadcast %cst_55 : f32 to vector<16x128xf32>
      %104 = arith.addf %103, %102 : vector<16x128xf32>
      %105 = arith.divf %103, %104 : vector<16x128xf32>
      %106 = arith.mulf %97, %70 : vector<16x128xf32>
      %107 = arith.mulf %91, %99 : vector<16x128xf32>
      %108 = arith.addf %106, %107 : vector<16x128xf32>
      %109 = math.tanh %108 : vector<16x128xf32>
      %110 = arith.mulf %105, %109 : vector<16x128xf32>
      %111 = arith.truncf %110 : vector<16x128xf32> to vector<16x128xbf16>
      %112 = arith.index_cast %79 : i32 to index
      %c0_56 = arith.constant 0 : index
      %113 = vector.load %arg12[%112, %c0_56] : memref<128x128xbf16, #tpu.memory_space<vmem>>, vector<16x128xbf16>
      tpu.vector_store %arg12[%112, %c0_56], %111 {strides = array<i32>} : memref<128x128xbf16, #tpu.memory_space<vmem>>, vector<16x128xbf16>,
      %c4_i32_57 = arith.constant 4 : i32
      %114 = arith.muli %arg14, %c4_i32_57 : i32
      %c2_i32_58 = arith.constant 2 : i32
      %115 = arith.addi %114, %c2_i32_58 : i32
      %c16_i32_59 = arith.constant 16 : i32
      %116 = arith.muli %115, %c16_i32_59 : i32
      %117 = tpu.assume_multiple %116, 16 : i32
      %118 = arith.index_cast %117 : i32 to index
      %c0_60 = arith.constant 0 : index
      %119 = vector.load %arg13[%118, %c0_60] : memref<128x512xf32, #tpu.memory_space<vmem>>, vector<16x512xf32>
      %120 = arith.truncf %110 : vector<16x128xf32> to vector<16x128xbf16>
      %c0_61 = arith.constant 0 : index
      %c0_62 = arith.constant 0 : index
      %121 = vector.load %arg4[%c0_61, %c0_62] : memref<128x512xbf16, #tpu.memory_space<vmem>>, vector<128x512xbf16>
      %cst_63 = arith.constant dense<0.000000e+00> : vector<16x512xf32>
      %122 = tpu.matmul %120, %121, %cst_63 {dimension_numbers = #tpu.dot_dimension_numbers<[1], [0], [0], [1], [0, 0, 1, 1], [], []>} : vector<16x128xbf16>, vector<128x512xbf16>, vector<16x512xf32> -> vector<16x512xf32>
      %123 = arith.addf %119, %122 : vector<16x512xf32>
      %124 = vector.extract_strided_slice %123 {offsets = [0, 0], sizes = [16, 128], strides = [1, 1]} : vector<16x512xf32> to vector<16x128xf32>
      %125 = arith.negf %124 : vector<16x128xf32>
      %126 = math.exp %125 : vector<16x128xf32>
      %cst_64 = arith.constant 1.000000e+00 : f32
      %127 = vector.broadcast %cst_64 : f32 to vector<16x128xf32>
      %128 = arith.addf %127, %126 : vector<16x128xf32>
      %129 = arith.divf %127, %128 : vector<16x128xf32>
      %130 = vector.extract_strided_slice %123 {offsets = [0, 128], sizes = [16, 128], strides = [1, 1]} : vector<16x512xf32> to vector<16x128xf32>
      %131 = arith.negf %130 : vector<16x128xf32>
      %132 = math.exp %131 : vector<16x128xf32>
      %cst_65 = arith.constant 1.000000e+00 : f32
      %133 = vector.broadcast %cst_65 : f32 to vector<16x128xf32>
      %134 = arith.addf %133, %132 : vector<16x128xf32>
      %135 = arith.divf %133, %134 : vector<16x128xf32>
      %136 = vector.extract_strided_slice %123 {offsets = [0, 256], sizes = [16, 128], strides = [1, 1]} : vector<16x512xf32> to vector<16x128xf32>
      %137 = math.tanh %136 : vector<16x128xf32>
      %138 = vector.extract_strided_slice %123 {offsets = [0, 384], sizes = [16, 128], strides = [1, 1]} : vector<16x512xf32> to vector<16x128xf32>
      %139 = arith.negf %138 : vector<16x128xf32>
      %140 = math.exp %139 : vector<16x128xf32>
      %cst_66 = arith.constant 1.000000e+00 : f32
      %141 = vector.broadcast %cst_66 : f32 to vector<16x128xf32>
      %142 = arith.addf %141, %140 : vector<16x128xf32>
      %143 = arith.divf %141, %142 : vector<16x128xf32>
      %144 = arith.mulf %135, %108 : vector<16x128xf32>
      %145 = arith.mulf %129, %137 : vector<16x128xf32>
      %146 = arith.addf %144, %145 : vector<16x128xf32>
      %147 = math.tanh %146 : vector<16x128xf32>
      %148 = arith.mulf %143, %147 : vector<16x128xf32>
      %149 = arith.truncf %148 : vector<16x128xf32> to vector<16x128xbf16>
      %150 = arith.index_cast %117 : i32 to index
      %c0_67 = arith.constant 0 : index
      %151 = vector.load %arg12[%150, %c0_67] : memref<128x128xbf16, #tpu.memory_space<vmem>>, vector<16x128xbf16>
      tpu.vector_store %arg12[%150, %c0_67], %149 {strides = array<i32>} : memref<128x128xbf16, #tpu.memory_space<vmem>>, vector<16x128xbf16>,
      %c4_i32_68 = arith.constant 4 : i32
      %152 = arith.muli %arg14, %c4_i32_68 : i32
      %c3_i32 = arith.constant 3 : i32
      %153 = arith.addi %152, %c3_i32 : i32
      %c16_i32_69 = arith.constant 16 : i32
      %154 = arith.muli %153, %c16_i32_69 : i32
      %155 = tpu.assume_multiple %154, 16 : i32
      %156 = arith.index_cast %155 : i32 to index
      %c0_70 = arith.constant 0 : index
      %157 = vector.load %arg13[%156, %c0_70] : memref<128x512xf32, #tpu.memory_space<vmem>>, vector<16x512xf32>
      %158 = arith.truncf %148 : vector<16x128xf32> to vector<16x128xbf16>
      %c0_71 = arith.constant 0 : index
      %c0_72 = arith.constant 0 : index
      %159 = vector.load %arg4[%c0_71, %c0_72] : memref<128x512xbf16, #tpu.memory_space<vmem>>, vector<128x512xbf16>
      %cst_73 = arith.constant dense<0.000000e+00> : vector<16x512xf32>
      %160 = tpu.matmul %158, %159, %cst_73 {dimension_numbers = #tpu.dot_dimension_numbers<[1], [0], [0], [1], [0, 0, 1, 1], [], []>} : vector<16x128xbf16>, vector<128x512xbf16>, vector<16x512xf32> -> vector<16x512xf32>
      %161 = arith.addf %157, %160 : vector<16x512xf32>
      %162 = vector.extract_strided_slice %161 {offsets = [0, 0], sizes = [16, 128], strides = [1, 1]} : vector<16x512xf32> to vector<16x128xf32>
      %163 = arith.negf %162 : vector<16x128xf32>
      %164 = math.exp %163 : vector<16x128xf32>
      %cst_74 = arith.constant 1.000000e+00 : f32
      %165 = vector.broadcast %cst_74 : f32 to vector<16x128xf32>
      %166 = arith.addf %165, %164 : vector<16x128xf32>
      %167 = arith.divf %165, %166 : vector<16x128xf32>
      %168 = vector.extract_strided_slice %161 {offsets = [0, 128], sizes = [16, 128], strides = [1, 1]} : vector<16x512xf32> to vector<16x128xf32>
      %169 = arith.negf %168 : vector<16x128xf32>
      %170 = math.exp %169 : vector<16x128xf32>
      %cst_75 = arith.constant 1.000000e+00 : f32
      %171 = vector.broadcast %cst_75 : f32 to vector<16x128xf32>
      %172 = arith.addf %171, %170 : vector<16x128xf32>
      %173 = arith.divf %171, %172 : vector<16x128xf32>
      %174 = vector.extract_strided_slice %161 {offsets = [0, 256], sizes = [16, 128], strides = [1, 1]} : vector<16x512xf32> to vector<16x128xf32>
      %175 = math.tanh %174 : vector<16x128xf32>
      %176 = vector.extract_strided_slice %161 {offsets = [0, 384], sizes = [16, 128], strides = [1, 1]} : vector<16x512xf32> to vector<16x128xf32>
      %177 = arith.negf %176 : vector<16x128xf32>
      %178 = math.exp %177 : vector<16x128xf32>
      %cst_76 = arith.constant 1.000000e+00 : f32
      %179 = vector.broadcast %cst_76 : f32 to vector<16x128xf32>
      %180 = arith.addf %179, %178 : vector<16x128xf32>
      %181 = arith.divf %179, %180 : vector<16x128xf32>
      %182 = arith.mulf %173, %146 : vector<16x128xf32>
      %183 = arith.mulf %167, %175 : vector<16x128xf32>
      %184 = arith.addf %182, %183 : vector<16x128xf32>
      %185 = math.tanh %184 : vector<16x128xf32>
      %186 = arith.mulf %181, %185 : vector<16x128xf32>
      %187 = arith.truncf %186 : vector<16x128xf32> to vector<16x128xbf16>
      %188 = arith.index_cast %155 : i32 to index
      %c0_77 = arith.constant 0 : index
      %189 = vector.load %arg12[%188, %c0_77] : memref<128x128xbf16, #tpu.memory_space<vmem>>, vector<16x128xbf16>
      tpu.vector_store %arg12[%188, %c0_77], %187 {strides = array<i32>} : memref<128x128xbf16, #tpu.memory_space<vmem>>, vector<16x128xbf16>,
      scf.yield %186, %184 : vector<16x128xf32>, vector<16x128xf32>
    }
    %c2_i32_9 = arith.constant 2 : i32
    %c0_10 = arith.constant 0 : index
    %c0_11 = arith.constant 0 : index
    %11 = vector.load %arg12[%c0_10, %c0_11] : memref<128x128xbf16, #tpu.memory_space<vmem>>, vector<128x128xbf16>
    %c0_12 = arith.constant 0 : index
    %c0_13 = arith.constant 0 : index
    %12 = vector.load %arg6[%c0_12, %c0_13] : memref<128x512xbf16, #tpu.memory_space<vmem>>, vector<128x512xbf16>
    %cst_14 = arith.constant dense<0.000000e+00> : vector<128x512xf32>
    %13 = tpu.matmul %11, %12, %cst_14 {dimension_numbers = #tpu.dot_dimension_numbers<[1], [0], [0], [1], [0, 0, 1, 1], [], []>} : vector<128x128xbf16>, vector<128x512xbf16>, vector<128x512xf32> -> vector<128x512xf32>
    %c0_15 = arith.constant 0 : index
    %c0_16 = arith.constant 0 : index
    %14 = vector.load %arg8[%c0_15, %c0_16] : memref<1x512xf32, #tpu.memory_space<vmem>>, vector<1x512xf32>
    %15 = vector.broadcast %14 : vector<1x512xf32> to vector<128x512xf32>
    %16 = arith.addf %13, %15 : vector<128x512xf32>
    %c0_17 = arith.constant 0 : index
    %c0_18 = arith.constant 0 : index
    %17 = vector.load %arg13[%c0_17, %c0_18] : memref<128x512xf32, #tpu.memory_space<vmem>>, vector<128x512xf32>
    tpu.vector_store %arg13[%c0_17, %c0_18], %16 {strides = array<i32>} : memref<128x512xf32, #tpu.memory_space<vmem>>, vector<128x512xf32>,
    %cst_19 = arith.constant 0.000000e+00 : f32
    %18 = vector.broadcast %cst_19 : f32 to vector<16x128xf32>
    %cst_20 = arith.constant 0.000000e+00 : f32
    %19 = vector.broadcast %cst_20 : f32 to vector<16x128xf32>
    %c0_i32_21 = arith.constant 0 : i32
    %c2_i32_22 = arith.constant 2 : i32
    %20 = arith.addi %c0_i32_21, %c2_i32_22 : i32
    %c1_i32_23 = arith.constant 1 : i32
    %21:2 = scf.for %arg14 = %c0_i32_21 to %20 step %c1_i32_23 iter_args(%arg15 = %18, %arg16 = %19) -> (vector<16x128xf32>, vector<16x128xf32>)  : i32 {
      %c4_i32 = arith.constant 4 : i32
      %38 = arith.muli %arg14, %c4_i32 : i32
      %c0_i32_36 = arith.constant 0 : i32
      %39 = arith.addi %38, %c0_i32_36 : i32
      %c16_i32_37 = arith.constant 16 : i32
      %40 = arith.muli %39, %c16_i32_37 : i32
      %41 = tpu.assume_multiple %40, 16 : i32
      %42 = arith.index_cast %41 : i32 to index
      %c0_38 = arith.constant 0 : index
      %43 = vector.load %arg13[%42, %c0_38] : memref<128x512xf32, #tpu.memory_space<vmem>>, vector<16x512xf32>
      %44 = arith.truncf %arg15 : vector<16x128xf32> to vector<16x128xbf16>
      %c0_39 = arith.constant 0 : index
      %c0_40 = arith.constant 0 : index
      %45 = vector.load %arg7[%c0_39, %c0_40] : memref<128x512xbf16, #tpu.memory_space<vmem>>, vector<128x512xbf16>
      %cst_41 = arith.constant dense<0.000000e+00> : vector<16x512xf32>
      %46 = tpu.matmul %44, %45, %cst_41 {dimension_numbers = #tpu.dot_dimension_numbers<[1], [0], [0], [1], [0, 0, 1, 1], [], []>} : vector<16x128xbf16>, vector<128x512xbf16>, vector<16x512xf32> -> vector<16x512xf32>
      %47 = arith.addf %43, %46 : vector<16x512xf32>
      %48 = vector.extract_strided_slice %47 {offsets = [0, 0], sizes = [16, 128], strides = [1, 1]} : vector<16x512xf32> to vector<16x128xf32>
      %49 = arith.negf %48 : vector<16x128xf32>
      %50 = math.exp %49 : vector<16x128xf32>
      %cst_42 = arith.constant 1.000000e+00 : f32
      %51 = vector.broadcast %cst_42 : f32 to vector<16x128xf32>
      %52 = arith.addf %51, %50 : vector<16x128xf32>
      %53 = arith.divf %51, %52 : vector<16x128xf32>
      %54 = vector.extract_strided_slice %47 {offsets = [0, 128], sizes = [16, 128], strides = [1, 1]} : vector<16x512xf32> to vector<16x128xf32>
      %55 = arith.negf %54 : vector<16x128xf32>
      %56 = math.exp %55 : vector<16x128xf32>
      %cst_43 = arith.constant 1.000000e+00 : f32
      %57 = vector.broadcast %cst_43 : f32 to vector<16x128xf32>
      %58 = arith.addf %57, %56 : vector<16x128xf32>
      %59 = arith.divf %57, %58 : vector<16x128xf32>
      %60 = vector.extract_strided_slice %47 {offsets = [0, 256], sizes = [16, 128], strides = [1, 1]} : vector<16x512xf32> to vector<16x128xf32>
      %61 = math.tanh %60 : vector<16x128xf32>
      %62 = vector.extract_strided_slice %47 {offsets = [0, 384], sizes = [16, 128], strides = [1, 1]} : vector<16x512xf32> to vector<16x128xf32>
      %63 = arith.negf %62 : vector<16x128xf32>
      %64 = math.exp %63 : vector<16x128xf32>
      %cst_44 = arith.constant 1.000000e+00 : f32
      %65 = vector.broadcast %cst_44 : f32 to vector<16x128xf32>
      %66 = arith.addf %65, %64 : vector<16x128xf32>
      %67 = arith.divf %65, %66 : vector<16x128xf32>
      %68 = arith.mulf %59, %arg16 : vector<16x128xf32>
      %69 = arith.mulf %53, %61 : vector<16x128xf32>
      %70 = arith.addf %68, %69 : vector<16x128xf32>
      %71 = math.tanh %70 : vector<16x128xf32>
      %72 = arith.mulf %67, %71 : vector<16x128xf32>
      %73 = arith.truncf %72 : vector<16x128xf32> to vector<16x128xbf16>
      %74 = arith.index_cast %41 : i32 to index
      %c0_45 = arith.constant 0 : index
      %75 = vector.load %arg12[%74, %c0_45] : memref<128x128xbf16, #tpu.memory_space<vmem>>, vector<16x128xbf16>
      tpu.vector_store %arg12[%74, %c0_45], %73 {strides = array<i32>} : memref<128x128xbf16, #tpu.memory_space<vmem>>, vector<16x128xbf16>,
      %c4_i32_46 = arith.constant 4 : i32
      %76 = arith.muli %arg14, %c4_i32_46 : i32
      %c1_i32_47 = arith.constant 1 : i32
      %77 = arith.addi %76, %c1_i32_47 : i32
      %c16_i32_48 = arith.constant 16 : i32
      %78 = arith.muli %77, %c16_i32_48 : i32
      %79 = tpu.assume_multiple %78, 16 : i32
      %80 = arith.index_cast %79 : i32 to index
      %c0_49 = arith.constant 0 : index
      %81 = vector.load %arg13[%80, %c0_49] : memref<128x512xf32, #tpu.memory_space<vmem>>, vector<16x512xf32>
      %82 = arith.truncf %72 : vector<16x128xf32> to vector<16x128xbf16>
      %c0_50 = arith.constant 0 : index
      %c0_51 = arith.constant 0 : index
      %83 = vector.load %arg7[%c0_50, %c0_51] : memref<128x512xbf16, #tpu.memory_space<vmem>>, vector<128x512xbf16>
      %cst_52 = arith.constant dense<0.000000e+00> : vector<16x512xf32>
      %84 = tpu.matmul %82, %83, %cst_52 {dimension_numbers = #tpu.dot_dimension_numbers<[1], [0], [0], [1], [0, 0, 1, 1], [], []>} : vector<16x128xbf16>, vector<128x512xbf16>, vector<16x512xf32> -> vector<16x512xf32>
      %85 = arith.addf %81, %84 : vector<16x512xf32>
      %86 = vector.extract_strided_slice %85 {offsets = [0, 0], sizes = [16, 128], strides = [1, 1]} : vector<16x512xf32> to vector<16x128xf32>
      %87 = arith.negf %86 : vector<16x128xf32>
      %88 = math.exp %87 : vector<16x128xf32>
      %cst_53 = arith.constant 1.000000e+00 : f32
      %89 = vector.broadcast %cst_53 : f32 to vector<16x128xf32>
      %90 = arith.addf %89, %88 : vector<16x128xf32>
      %91 = arith.divf %89, %90 : vector<16x128xf32>
      %92 = vector.extract_strided_slice %85 {offsets = [0, 128], sizes = [16, 128], strides = [1, 1]} : vector<16x512xf32> to vector<16x128xf32>
      %93 = arith.negf %92 : vector<16x128xf32>
      %94 = math.exp %93 : vector<16x128xf32>
      %cst_54 = arith.constant 1.000000e+00 : f32
      %95 = vector.broadcast %cst_54 : f32 to vector<16x128xf32>
      %96 = arith.addf %95, %94 : vector<16x128xf32>
      %97 = arith.divf %95, %96 : vector<16x128xf32>
      %98 = vector.extract_strided_slice %85 {offsets = [0, 256], sizes = [16, 128], strides = [1, 1]} : vector<16x512xf32> to vector<16x128xf32>
      %99 = math.tanh %98 : vector<16x128xf32>
      %100 = vector.extract_strided_slice %85 {offsets = [0, 384], sizes = [16, 128], strides = [1, 1]} : vector<16x512xf32> to vector<16x128xf32>
      %101 = arith.negf %100 : vector<16x128xf32>
      %102 = math.exp %101 : vector<16x128xf32>
      %cst_55 = arith.constant 1.000000e+00 : f32
      %103 = vector.broadcast %cst_55 : f32 to vector<16x128xf32>
      %104 = arith.addf %103, %102 : vector<16x128xf32>
      %105 = arith.divf %103, %104 : vector<16x128xf32>
      %106 = arith.mulf %97, %70 : vector<16x128xf32>
      %107 = arith.mulf %91, %99 : vector<16x128xf32>
      %108 = arith.addf %106, %107 : vector<16x128xf32>
      %109 = math.tanh %108 : vector<16x128xf32>
      %110 = arith.mulf %105, %109 : vector<16x128xf32>
      %111 = arith.truncf %110 : vector<16x128xf32> to vector<16x128xbf16>
      %112 = arith.index_cast %79 : i32 to index
      %c0_56 = arith.constant 0 : index
      %113 = vector.load %arg12[%112, %c0_56] : memref<128x128xbf16, #tpu.memory_space<vmem>>, vector<16x128xbf16>
      tpu.vector_store %arg12[%112, %c0_56], %111 {strides = array<i32>} : memref<128x128xbf16, #tpu.memory_space<vmem>>, vector<16x128xbf16>,
      %c4_i32_57 = arith.constant 4 : i32
      %114 = arith.muli %arg14, %c4_i32_57 : i32
      %c2_i32_58 = arith.constant 2 : i32
      %115 = arith.addi %114, %c2_i32_58 : i32
      %c16_i32_59 = arith.constant 16 : i32
      %116 = arith.muli %115, %c16_i32_59 : i32
      %117 = tpu.assume_multiple %116, 16 : i32
      %118 = arith.index_cast %117 : i32 to index
      %c0_60 = arith.constant 0 : index
      %119 = vector.load %arg13[%118, %c0_60] : memref<128x512xf32, #tpu.memory_space<vmem>>, vector<16x512xf32>
      %120 = arith.truncf %110 : vector<16x128xf32> to vector<16x128xbf16>
      %c0_61 = arith.constant 0 : index
      %c0_62 = arith.constant 0 : index
      %121 = vector.load %arg7[%c0_61, %c0_62] : memref<128x512xbf16, #tpu.memory_space<vmem>>, vector<128x512xbf16>
      %cst_63 = arith.constant dense<0.000000e+00> : vector<16x512xf32>
      %122 = tpu.matmul %120, %121, %cst_63 {dimension_numbers = #tpu.dot_dimension_numbers<[1], [0], [0], [1], [0, 0, 1, 1], [], []>} : vector<16x128xbf16>, vector<128x512xbf16>, vector<16x512xf32> -> vector<16x512xf32>
      %123 = arith.addf %119, %122 : vector<16x512xf32>
      %124 = vector.extract_strided_slice %123 {offsets = [0, 0], sizes = [16, 128], strides = [1, 1]} : vector<16x512xf32> to vector<16x128xf32>
      %125 = arith.negf %124 : vector<16x128xf32>
      %126 = math.exp %125 : vector<16x128xf32>
      %cst_64 = arith.constant 1.000000e+00 : f32
      %127 = vector.broadcast %cst_64 : f32 to vector<16x128xf32>
      %128 = arith.addf %127, %126 : vector<16x128xf32>
      %129 = arith.divf %127, %128 : vector<16x128xf32>
      %130 = vector.extract_strided_slice %123 {offsets = [0, 128], sizes = [16, 128], strides = [1, 1]} : vector<16x512xf32> to vector<16x128xf32>
      %131 = arith.negf %130 : vector<16x128xf32>
      %132 = math.exp %131 : vector<16x128xf32>
      %cst_65 = arith.constant 1.000000e+00 : f32
      %133 = vector.broadcast %cst_65 : f32 to vector<16x128xf32>
      %134 = arith.addf %133, %132 : vector<16x128xf32>
      %135 = arith.divf %133, %134 : vector<16x128xf32>
      %136 = vector.extract_strided_slice %123 {offsets = [0, 256], sizes = [16, 128], strides = [1, 1]} : vector<16x512xf32> to vector<16x128xf32>
      %137 = math.tanh %136 : vector<16x128xf32>
      %138 = vector.extract_strided_slice %123 {offsets = [0, 384], sizes = [16, 128], strides = [1, 1]} : vector<16x512xf32> to vector<16x128xf32>
      %139 = arith.negf %138 : vector<16x128xf32>
      %140 = math.exp %139 : vector<16x128xf32>
      %cst_66 = arith.constant 1.000000e+00 : f32
      %141 = vector.broadcast %cst_66 : f32 to vector<16x128xf32>
      %142 = arith.addf %141, %140 : vector<16x128xf32>
      %143 = arith.divf %141, %142 : vector<16x128xf32>
      %144 = arith.mulf %135, %108 : vector<16x128xf32>
      %145 = arith.mulf %129, %137 : vector<16x128xf32>
      %146 = arith.addf %144, %145 : vector<16x128xf32>
      %147 = math.tanh %146 : vector<16x128xf32>
      %148 = arith.mulf %143, %147 : vector<16x128xf32>
      %149 = arith.truncf %148 : vector<16x128xf32> to vector<16x128xbf16>
      %150 = arith.index_cast %117 : i32 to index
      %c0_67 = arith.constant 0 : index
      %151 = vector.load %arg12[%150, %c0_67] : memref<128x128xbf16, #tpu.memory_space<vmem>>, vector<16x128xbf16>
      tpu.vector_store %arg12[%150, %c0_67], %149 {strides = array<i32>} : memref<128x128xbf16, #tpu.memory_space<vmem>>, vector<16x128xbf16>,
      %c4_i32_68 = arith.constant 4 : i32
      %152 = arith.muli %arg14, %c4_i32_68 : i32
      %c3_i32 = arith.constant 3 : i32
      %153 = arith.addi %152, %c3_i32 : i32
      %c16_i32_69 = arith.constant 16 : i32
      %154 = arith.muli %153, %c16_i32_69 : i32
      %155 = tpu.assume_multiple %154, 16 : i32
      %156 = arith.index_cast %155 : i32 to index
      %c0_70 = arith.constant 0 : index
      %157 = vector.load %arg13[%156, %c0_70] : memref<128x512xf32, #tpu.memory_space<vmem>>, vector<16x512xf32>
      %158 = arith.truncf %148 : vector<16x128xf32> to vector<16x128xbf16>
      %c0_71 = arith.constant 0 : index
      %c0_72 = arith.constant 0 : index
      %159 = vector.load %arg7[%c0_71, %c0_72] : memref<128x512xbf16, #tpu.memory_space<vmem>>, vector<128x512xbf16>
      %cst_73 = arith.constant dense<0.000000e+00> : vector<16x512xf32>
      %160 = tpu.matmul %158, %159, %cst_73 {dimension_numbers = #tpu.dot_dimension_numbers<[1], [0], [0], [1], [0, 0, 1, 1], [], []>} : vector<16x128xbf16>, vector<128x512xbf16>, vector<16x512xf32> -> vector<16x512xf32>
      %161 = arith.addf %157, %160 : vector<16x512xf32>
      %162 = vector.extract_strided_slice %161 {offsets = [0, 0], sizes = [16, 128], strides = [1, 1]} : vector<16x512xf32> to vector<16x128xf32>
      %163 = arith.negf %162 : vector<16x128xf32>
      %164 = math.exp %163 : vector<16x128xf32>
      %cst_74 = arith.constant 1.000000e+00 : f32
      %165 = vector.broadcast %cst_74 : f32 to vector<16x128xf32>
      %166 = arith.addf %165, %164 : vector<16x128xf32>
      %167 = arith.divf %165, %166 : vector<16x128xf32>
      %168 = vector.extract_strided_slice %161 {offsets = [0, 128], sizes = [16, 128], strides = [1, 1]} : vector<16x512xf32> to vector<16x128xf32>
      %169 = arith.negf %168 : vector<16x128xf32>
      %170 = math.exp %169 : vector<16x128xf32>
      %cst_75 = arith.constant 1.000000e+00 : f32
      %171 = vector.broadcast %cst_75 : f32 to vector<16x128xf32>
      %172 = arith.addf %171, %170 : vector<16x128xf32>
      %173 = arith.divf %171, %172 : vector<16x128xf32>
      %174 = vector.extract_strided_slice %161 {offsets = [0, 256], sizes = [16, 128], strides = [1, 1]} : vector<16x512xf32> to vector<16x128xf32>
      %175 = math.tanh %174 : vector<16x128xf32>
      %176 = vector.extract_strided_slice %161 {offsets = [0, 384], sizes = [16, 128], strides = [1, 1]} : vector<16x512xf32> to vector<16x128xf32>
      %177 = arith.negf %176 : vector<16x128xf32>
      %178 = math.exp %177 : vector<16x128xf32>
      %cst_76 = arith.constant 1.000000e+00 : f32
      %179 = vector.broadcast %cst_76 : f32 to vector<16x128xf32>
      %180 = arith.addf %179, %178 : vector<16x128xf32>
      %181 = arith.divf %179, %180 : vector<16x128xf32>
      %182 = arith.mulf %173, %146 : vector<16x128xf32>
      %183 = arith.mulf %167, %175 : vector<16x128xf32>
      %184 = arith.addf %182, %183 : vector<16x128xf32>
      %185 = math.tanh %184 : vector<16x128xf32>
      %186 = arith.mulf %181, %185 : vector<16x128xf32>
      %187 = arith.truncf %186 : vector<16x128xf32> to vector<16x128xbf16>
      %188 = arith.index_cast %155 : i32 to index
      %c0_77 = arith.constant 0 : index
      %189 = vector.load %arg12[%188, %c0_77] : memref<128x128xbf16, #tpu.memory_space<vmem>>, vector<16x128xbf16>
      tpu.vector_store %arg12[%188, %c0_77], %187 {strides = array<i32>} : memref<128x128xbf16, #tpu.memory_space<vmem>>, vector<16x128xbf16>,
      scf.yield %186, %184 : vector<16x128xf32>, vector<16x128xf32>
    }
    %c2_i32_24 = arith.constant 2 : i32
    %c0_25 = arith.constant 0 : index
    %22 = memref.load %arg0[%c0_25] : memref<1xi32, #tpu.memory_space<smem>>
    %c16_i32 = arith.constant 16 : i32
    %23 = arith.muli %22, %c16_i32 : i32
    %24 = tpu.assume_multiple %23, 16 : i32
    %25 = arith.index_cast %24 : i32 to index
    %c0_26 = arith.constant 0 : index
    %26 = vector.load %arg12[%25, %c0_26] : memref<128x128xbf16, #tpu.memory_space<vmem>>, vector<16x128xbf16>
    %27 = arith.extf %26 : vector<16x128xbf16> to vector<16x128xf32>
    %c0_27 = arith.constant 0 : index
    %c0_28 = arith.constant 0 : index
    %28 = vector.load %arg1[%c0_27, %c0_28] : memref<16x1xf32, #tpu.memory_space<vmem>>, vector<16x1xf32>
    %29 = vector.broadcast %28 : vector<16x1xf32> to vector<16x128xf32>
    %30 = arith.mulf %27, %29 : vector<16x128xf32>
    %31 = arith.truncf %30 : vector<16x128xf32> to vector<16x128xbf16>
    %c0_29 = arith.constant 0 : index
    %c0_30 = arith.constant 0 : index
    %32 = vector.load %arg9[%c0_29, %c0_30] : memref<128x128xbf16, #tpu.memory_space<vmem>>, vector<128x128xbf16>
    %cst_31 = arith.constant dense<0.000000e+00> : vector<16x128xf32>
    %33 = tpu.matmul %31, %32, %cst_31 {dimension_numbers = #tpu.dot_dimension_numbers<[1], [0], [0], [1], [0, 0, 1, 1], [], []>} : vector<16x128xbf16>, vector<128x128xbf16>, vector<16x128xf32> -> vector<16x128xf32>
    %c0_32 = arith.constant 0 : index
    %c0_33 = arith.constant 0 : index
    %34 = vector.load %arg10[%c0_32, %c0_33] : memref<1x128xf32, #tpu.memory_space<vmem>>, vector<1x128xf32>
    %35 = vector.broadcast %34 : vector<1x128xf32> to vector<16x128xf32>
    %36 = arith.addf %33, %35 : vector<16x128xf32>
    %c0_34 = arith.constant 0 : index
    %c0_35 = arith.constant 0 : index
    %37 = vector.load %arg11[%c0_34, %c0_35] : memref<16x128xf32, #tpu.memory_space<vmem>>, vector<16x128xf32>
    tpu.vector_store %arg11[%c0_34, %c0_35], %36 {strides = array<i32>} : memref<16x128xf32, #tpu.memory_space<vmem>>, vector<16x128xf32>,
    return
  }
}

</mosaic_0001>

<llo_original>
// kernel: rnn_classifier_forward.1
$region0: #{rnn_classifier_forward.1}
  #allocation0 [shape = 'u32[]', space=smem, size = 0x4, offset = 0x4, fixed_abs, tag = 'smem constant byte address 0x4 - core index']
  #allocation1 [shape = 'u32[72,128]{1,0:T(1,128)}', space=vmem, size = 0x9000, scoped, tag = 'internal scratch']
  #allocation2 [shape = 'bf16[128,128]{1,0:T(8,128)(2,1)}', space=vmem, size = 0x8000, scoped, tag = 'scratch operand']
  #allocation3 [shape = 'f32[128,512]{1,0:T(8,128)}', space=vmem, size = 0x40000, scoped, tag = 'scratch operand']
  #allocation4 [shape = 's32[1]{0:T(128)S(6)}', space=smem, size = 0x200, scoped, tag = 'scoped memory for rnn_classifier_forward.1']
  %s0 = inlined_call_operand.<no memory space> [shape: s32[1], index: 0, kind: input, shape index: {}]
  %s1 = inlined_call_operand.vmem [shape: f32[16,1], index: 1, kind: input, shape index: {}]
  %s2 = inlined_call_operand.vmem [shape: bf16[128,128], index: 2, kind: input, shape index: {}]
  %s3 = inlined_call_operand.vmem [shape: bf16[128,512], index: 3, kind: input, shape index: {}]
  %s4 = inlined_call_operand.vmem [shape: bf16[128,512], index: 4, kind: input, shape index: {}]
  %s5 = inlined_call_operand.vmem [shape: f32[1,512], index: 5, kind: input, shape index: {}]
  %s6 = inlined_call_operand.vmem [shape: bf16[128,512], index: 6, kind: input, shape index: {}]
  %s7 = inlined_call_operand.vmem [shape: bf16[128,512], index: 7, kind: input, shape index: {}]
  %s8 = inlined_call_operand.vmem [shape: f32[1,512], index: 8, kind: input, shape index: {}]
  %s9 = inlined_call_operand.vmem [shape: bf16[128,128], index: 9, kind: input, shape index: {}]
  %s10 = inlined_call_operand.vmem [shape: f32[1,128], index: 10, kind: input, shape index: {}]
  %s11 = inlined_call_operand.vmem [shape: f32[16,128], index: 11, kind: output, shape index: {}]
  %s12 = sld [smem:[#allocation0]]
  $region68: #{rnn_classifier_forward.1} parent=0
    _
  %s14 = ssub.s32 1, %s12
  %s15 = scalar_select 0, %s14, %s12
  %16 = sst [smem:[#allocation4]] %s0
  // Predicated region
  $region2: #{rnn_classifier_forward.1} parent=0 // pred_check
    _
  $region3: #{rnn_classifier_forward.1} parent=0 // pred_check_branch
    %18 = sbr.rel (0) target = $region5
  $region4: #{rnn_classifier_forward.1} parent=0 // pred_region
    _
  $region5: #{rnn_classifier_forward.1} parent=0 // pred_fallthru
    _
  // Predicated region
  $region6: #{rnn_classifier_forward.1} parent=0 // pred_check
    _
  $region7: #{rnn_classifier_forward.1} parent=0 // pred_check_branch
    %20 = sbr.rel (0) target = $region9
  $region8: #{rnn_classifier_forward.1} parent=0 // pred_region
    _
  $region9: #{rnn_classifier_forward.1} parent=0 // pred_fallthru
    _
  // Predicated region
  $region10: #{rnn_classifier_forward.1} parent=0 // pred_check
    _
  $region11: #{rnn_classifier_forward.1} parent=0 // pred_check_branch
    %22 = sbr.rel (0) target = $region13
  $region12: #{rnn_classifier_forward.1} parent=0 // pred_region
    _
  $region13: #{rnn_classifier_forward.1} parent=0 // pred_fallthru
    _
  // Predicated region
  $region14: #{rnn_classifier_forward.1} parent=0 // pred_check
    _
  $region15: #{rnn_classifier_forward.1} parent=0 // pred_check_branch
    %24 = sbr.rel (0) target = $region17
  $region16: #{rnn_classifier_forward.1} parent=0 // pred_region
    _
  $region17: #{rnn_classifier_forward.1} parent=0 // pred_fallthru
    _
  // Predicated region
  $region18: #{rnn_classifier_forward.1} parent=0 // pred_check
    _
  $region19: #{rnn_classifier_forward.1} parent=0 // pred_check_branch
    %26 = sbr.rel (0) target = $region21
  $region20: #{rnn_classifier_forward.1} parent=0 // pred_region
    _
  $region21: #{rnn_classifier_forward.1} parent=0 // pred_fallthru
    _
  // Predicated region
  $region22: #{rnn_classifier_forward.1} parent=0 // pred_check
    _
  $region23: #{rnn_classifier_forward.1} parent=0 // pred_check_branch
    %28 = sbr.rel (0) target = $region25
  $region24: #{rnn_classifier_forward.1} parent=0 // pred_region
    _
  $region25: #{rnn_classifier_forward.1} parent=0 // pred_fallthru
    _
  // Predicated region
  $region26: #{rnn_classifier_forward.1} parent=0 // pred_check
    _
  $region27: #{rnn_classifier_forward.1} parent=0 // pred_check_branch
    %30 = sbr.rel (0) target = $region29
  $region28: #{rnn_classifier_forward.1} parent=0 // pred_region
    _
  $region29: #{rnn_classifier_forward.1} parent=0 // pred_fallthru
    _
  // Predicated region
  $region30: #{rnn_classifier_forward.1} parent=0 // pred_check
    _
  $region31: #{rnn_classifier_forward.1} parent=0 // pred_check_branch
    %32 = sbr.rel (0) target = $region33
  $region32: #{rnn_classifier_forward.1} parent=0 // pred_region
    _
  $region33: #{rnn_classifier_forward.1} parent=0 // pred_fallthru
    _
  // Predicated region
  $region34: #{rnn_classifier_forward.1} parent=0 // pred_check
    _
  $region35: #{rnn_classifier_forward.1} parent=0 // pred_check_branch
    %34 = sbr.rel (0) target = $region37
  $region36: #{rnn_classifier_forward.1} parent=0 // pred_region
    _
  $region37: #{rnn_classifier_forward.1} parent=0 // pred_fallthru
    _
  // Predicated region
  $region38: #{rnn_classifier_forward.1} parent=0 // pred_check
    _
  $region39: #{rnn_classifier_forward.1} parent=0 // pred_check_branch
    %36 = sbr.rel (0) target = $region41
  $region40: #{rnn_classifier_forward.1} parent=0 // pred_region
    _
  $region41: #{rnn_classifier_forward.1} parent=0 // pred_fallthru
    _
  // Predicated region
  $region42: #{rnn_classifier_forward.1} parent=0 // pred_check
    _
  $region43: #{rnn_classifier_forward.1} parent=0 // pred_check_branch
    %38 = sbr.rel (0) target = $region45
  $region44: #{rnn_classifier_forward.1} parent=0 // pred_region
    _
  $region45: #{rnn_classifier_forward.1} parent=0 // pred_fallthru
    _
  %v39 = vld [vmem:[%s2] sm:$0xf]
  %v40 = vld [vmem:[%s2 + $0x4] sm:$0xf]
  %v41 = vld [vmem:[%s2 + $0x8] sm:$0xf]
  %v42 = vld [vmem:[%s2 + $0xc] sm:$0xf]
  %v43 = vld [vmem:[%s2 + $0x10] sm:$0xf]
  %v44 = vld [vmem:[%s2 + $0x14] sm:$0xf]
  %v45 = vld [vmem:[%s2 + $0x18] sm:$0xf]
  %v46 = vld [vmem:[%s2 + $0x1c] sm:$0xf]
  %v47 = vld [vmem:[%s2 + $0x20] sm:$0xf]
  %v48 = vld [vmem:[%s2 + $0x24] sm:$0xf]
  %v49 = vld [vmem:[%s2 + $0x28] sm:$0xf]
  %v50 = vld [vmem:[%s2 + $0x2c] sm:$0xf]
  %v51 = vld [vmem:[%s2 + $0x30] sm:$0xf]
  %v52 = vld [vmem:[%s2 + $0x34] sm:$0xf]
  %v53 = vld [vmem:[%s2 + $0x38] sm:$0xf]
  %v54 = vld [vmem:[%s2 + $0x3c] sm:$0xf]
  %v55 = vld [vmem:[%s3] sm:$0xff]
  %v56 = vld [vmem:[%s3 + $0x8] sm:$0xff]
  %v57 = vld [vmem:[%s3 + $0x10] sm:$0xff]
  %v58 = vld [vmem:[%s3 + $0x18] sm:$0xff]
  %v59 = vld [vmem:[%s3 + $0x20] sm:$0xff]
  %v60 = vld [vmem:[%s3 + $0x28] sm:$0xff]
  %v61 = vld [vmem:[%s3 + $0x30] sm:$0xff]
  %v62 = vld [vmem:[%s3 + $0x38] sm:$0xff]
  %v63 = vld [vmem:[%s3 + $0x40] sm:$0xff]
  %v64 = vld [vmem:[%s3 + $0x48] sm:$0xff]
  %v65 = vld [vmem:[%s3 + $0x50] sm:$0xff]
  %v66 = vld [vmem:[%s3 + $0x58] sm:$0xff]
  %v67 = vld [vmem:[%s3 + $0x60] sm:$0xff]
  %v68 = vld [vmem:[%s3 + $0x68] sm:$0xff]
  %v69 = vld [vmem:[%s3 + $0x70] sm:$0xff]
  %v70 = vld [vmem:[%s3 + $0x78] sm:$0xff]
  %v71 = vld [vmem:[%s3 + $0x80] sm:$0xff]
  %v72 = vld [vmem:[%s3 + $0x88] sm:$0xff]
  %v73 = vld [vmem:[%s3 + $0x90] sm:$0xff]
  %v74 = vld [vmem:[%s3 + $0x98] sm:$0xff]
  %v75 = vld [vmem:[%s3 + $0xa0] sm:$0xff]
  %v76 = vld [vmem:[%s3 + $0xa8] sm:$0xff]
  %v77 = vld [vmem:[%s3 + $0xb0] sm:$0xff]
  %v78 = vld [vmem:[%s3 + $0xb8] sm:$0xff]
  %v79 = vld [vmem:[%s3 + $0xc0] sm:$0xff]
  %v80 = vld [vmem:[%s3 + $0xc8] sm:$0xff]
  %v81 = vld [vmem:[%s3 + $0xd0] sm:$0xff]
  %v82 = vld [vmem:[%s3 + $0xd8] sm:$0xff]
  %v83 = vld [vmem:[%s3 + $0xe0] sm:$0xff]
  %v84 = vld [vmem:[%s3 + $0xe8] sm:$0xff]
  %v85 = vld [vmem:[%s3 + $0xf0] sm:$0xff]
  %v86 = vld [vmem:[%s3 + $0xf8] sm:$0xff]
  %v87 = vld [vmem:[%s5] sm:$0xf]
  %v89 = vperm.slane %v87, 0
  %v90 = vperm.slane %v87, 1
  %v91 = vperm.slane %v87, 2
  %v92 = vperm.slane %v87, 3
  %v113 = vunpack.c.l.b16 %v39
  %v114 = vunpack.c.l.b16 %v40
  %v115 = vunpack.c.l.b16 %v41
  %v116 = vunpack.c.l.b16 %v42
  %v117 = vunpack.c.l.b16 %v43
  %v118 = vunpack.c.l.b16 %v44
  %v119 = vunpack.c.l.b16 %v45
  %v120 = vunpack.c.l.b16 %v46
  %v121 = vunpack.c.l.b16 %v47
  %v122 = vunpack.c.l.b16 %v48
  %v123 = vunpack.c.l.b16 %v49
  %v124 = vunpack.c.l.b16 %v50
  %v125 = vunpack.c.l.b16 %v51
  %v126 = vunpack.c.l.b16 %v52
  %v127 = vunpack.c.l.b16 %v53
  %v128 = vunpack.c.l.b16 %v54
  %v129 = vpack.c.b16 %v114, %v113
  %v130 = vpack.c.b16 %v116, %v115
  %v131 = vpack.c.b16 %v118, %v117
  %v132 = vpack.c.b16 %v120, %v119
  %v133 = vpack.c.b16 %v122, %v121
  %v134 = vpack.c.b16 %v124, %v123
  %v135 = vpack.c.b16 %v126, %v125
  %v136 = vpack.c.b16 %v128, %v127
  %v177 = vunpack.c.l.b16 %v55
  %v178 = vunpack.c.h.b16 %v55
  %v179 = vunpack.c.l.b16 %v56
  %v180 = vunpack.c.h.b16 %v56
  %v181 = vunpack.c.l.b16 %v57
  %v182 = vunpack.c.h.b16 %v57
  %v183 = vunpack.c.l.b16 %v58
  %v184 = vunpack.c.h.b16 %v58
  %v185 = vunpack.c.l.b16 %v59
  %v186 = vunpack.c.h.b16 %v59
  %v187 = vunpack.c.l.b16 %v60
  %v188 = vunpack.c.h.b16 %v60
  %v189 = vunpack.c.l.b16 %v61
  %v190 = vunpack.c.h.b16 %v61
  %v191 = vunpack.c.l.b16 %v62
  %v192 = vunpack.c.h.b16 %v62
  %v193 = vunpack.c.l.b16 %v63
  %v194 = vunpack.c.h.b16 %v63
  %v195 = vunpack.c.l.b16 %v64
  %v196 = vunpack.c.h.b16 %v64
  %v197 = vunpack.c.l.b16 %v65
  %v198 = vunpack.c.h.b16 %v65
  %v199 = vunpack.c.l.b16 %v66
  %v200 = vunpack.c.h.b16 %v66
  %v201 = vunpack.c.l.b16 %v67
  %v202 = vunpack.c.h.b16 %v67
  %v203 = vunpack.c.l.b16 %v68
  %v204 = vunpack.c.h.b16 %v68
  %v205 = vunpack.c.l.b16 %v69
  %v206 = vunpack.c.h.b16 %v69
  %v207 = vunpack.c.l.b16 %v70
  %v208 = vunpack.c.h.b16 %v70
  %v209 = vunpack.c.l.b16 %v71
  %v210 = vunpack.c.h.b16 %v71
  %v211 = vunpack.c.l.b16 %v72
  %v212 = vunpack.c.h.b16 %v72
  %v213 = vunpack.c.l.b16 %v73
  %v214 = vunpack.c.h.b16 %v73
  %v215 = vunpack.c.l.b16 %v74
  %v216 = vunpack.c.h.b16 %v74
  %v217 = vunpack.c.l.b16 %v75
  %v218 = vunpack.c.h.b16 %v75
  %v219 = vunpack.c.l.b16 %v76
  %v220 = vunpack.c.h.b16 %v76
  %v221 = vunpack.c.l.b16 %v77
  %v222 = vunpack.c.h.b16 %v77
  %v223 = vunpack.c.l.b16 %v78
  %v224 = vunpack.c.h.b16 %v78
  %v225 = vunpack.c.l.b16 %v79
  %v226 = vunpack.c.h.b16 %v79
  %v227 = vunpack.c.l.b16 %v80
  %v228 = vunpack.c.h.b16 %v80
  %v229 = vunpack.c.l.b16 %v81
  %v230 = vunpack.c.h.b16 %v81
  %v231 = vunpack.c.l.b16 %v82
  %v232 = vunpack.c.h.b16 %v82
  %v233 = vunpack.c.l.b16 %v83
  %v234 = vunpack.c.h.b16 %v83
  %v235 = vunpack.c.l.b16 %v84
  %v236 = vunpack.c.h.b16 %v84
  %v237 = vunpack.c.l.b16 %v85
  %v238 = vunpack.c.h.b16 %v85
  %v239 = vunpack.c.l.b16 %v86
  %v240 = vunpack.c.h.b16 %v86
  %v241 = vpack.c.b16 %v181, %v177
  %v242 = vpack.c.b16 %v182, %v178
  %v243 = vpack.c.b16 %v183, %v179
  %v244 = vpack.c.b16 %v184, %v180
  %v245 = vpack.c.b16 %v189, %v185
  %v246 = vpack.c.b16 %v190, %v186
  %v247 = vpack.c.b16 %v191, %v187
  %v248 = vpack.c.b16 %v192, %v188
  %v249 = vpack.c.b16 %v197, %v193
  %v250 = vpack.c.b16 %v198, %v194
  %v251 = vpack.c.b16 %v199, %v195
  %v252 = vpack.c.b16 %v200, %v196
  %v253 = vpack.c.b16 %v205, %v201
  %v254 = vpack.c.b16 %v206, %v202
  %v255 = vpack.c.b16 %v207, %v203
  %v256 = vpack.c.b16 %v208, %v204
  %v257 = vpack.c.b16 %v213, %v209
  %v258 = vpack.c.b16 %v214, %v210
  %v259 = vpack.c.b16 %v215, %v211
  %v260 = vpack.c.b16 %v216, %v212
  %v261 = vpack.c.b16 %v221, %v217
  %v262 = vpack.c.b16 %v222, %v218
  %v263 = vpack.c.b16 %v223, %v219
  %v264 = vpack.c.b16 %v224, %v220
  %v265 = vpack.c.b16 %v229, %v225
  %v266 = vpack.c.b16 %v230, %v226
  %v267 = vpack.c.b16 %v231, %v227
  %v268 = vpack.c.b16 %v232, %v228
  %v269 = vpack.c.b16 %v237, %v233
  %v270 = vpack.c.b16 %v238, %v234
  %v271 = vpack.c.b16 %v239, %v235
  %v272 = vpack.c.b16 %v240, %v236
  %305 = vmatpush.bf16.msra.mxu0 %v269
  %306 = vmatpush.bf16.msra.mxu0 %v265
  %307 = vmatpush.bf16.msra.mxu0 %v261
  %308 = vmatpush.bf16.msra.mxu0 %v257
  %309 = vmatpush.bf16.msra.mxu0 %v253
  %310 = vmatpush.bf16.msra.mxu0 %v249
  %311 = vmatpush.bf16.msra.mxu0 %v245
  %312 = vmatpush.bf16.msra.mxu0 %v241
  %313 = vmatmul.bf16.gmra.mxu0 %v129
  %v314 = vpop.f32.mrf.mxu0
  %v315 = vadd.f32 %v89, %v314
  %v316 = vpop.f32.mrf.mxu0
  %v317 = vadd.f32 %v89, %v316
  %318 = vmatmul.bf16.gmra.mxu0 %v130
  %v319 = vpop.f32.mrf.mxu0
  %v320 = vadd.f32 %v89, %v319
  %v321 = vpop.f32.mrf.mxu0
  %v322 = vadd.f32 %v89, %v321
  %323 = vmatmul.bf16.gmra.mxu0 %v131
  %v324 = vpop.f32.mrf.mxu0
  %v325 = vadd.f32 %v89, %v324
  %v326 = vpop.f32.mrf.mxu0
  %v327 = vadd.f32 %v89, %v326
  %328 = vmatmul.bf16.gmra.mxu0 %v132
  %v329 = vpop.f32.mrf.mxu0
  %v330 = vadd.f32 %v89, %v329
  %v331 = vpop.f32.mrf.mxu0
  %v332 = vadd.f32 %v89, %v331
  %333 = vmatmul.bf16.gmra.mxu0 %v133
  %v334 = vpop.f32.mrf.mxu0
  %v335 = vadd.f32 %v89, %v334
  %v336 = vpop.f32.mrf.mxu0
  %v337 = vadd.f32 %v89, %v336
  %338 = vmatmul.bf16.gmra.mxu0 %v134
  %v339 = vpop.f32.mrf.mxu0
  %v340 = vadd.f32 %v89, %v339
  %v341 = vpop.f32.mrf.mxu0
  %v342 = vadd.f32 %v89, %v341
  %343 = vmatmul.bf16.gmra.mxu0 %v135
  %v344 = vpop.f32.mrf.mxu0
  %v345 = vadd.f32 %v89, %v344
  %v346 = vpop.f32.mrf.mxu0
  %v347 = vadd.f32 %v89, %v346
  %348 = vmatmul.bf16.gmra.mxu0 %v136
  %v349 = vpop.f32.mrf.mxu0
  %v350 = vadd.f32 %v89, %v349
  %v351 = vpop.f32.mrf.mxu0
  %v352 = vadd.f32 %v89, %v351
  %353 = vdwg.mxu0
  %354 = vmatpush.bf16.msra.mxu0 %v270
  %355 = vmatpush.bf16.msra.mxu0 %v266
  %356 = vmatpush.bf16.msra.mxu0 %v262
  %357 = vmatpush.bf16.msra.mxu0 %v258
  %358 = vmatpush.bf16.msra.mxu0 %v254
  %359 = vmatpush.bf16.msra.mxu0 %v250
  %360 = vmatpush.bf16.msra.mxu0 %v246
  %361 = vmatpush.bf16.msra.mxu0 %v242
  %362 = vmatmul.bf16.gmra.mxu0 %v129
  %v363 = vpop.f32.mrf.mxu0
  %v364 = vadd.f32 %v90, %v363
  %v365 = vpop.f32.mrf.mxu0
  %v366 = vadd.f32 %v90, %v365
  %367 = vmatmul.bf16.gmra.mxu0 %v130
  %v368 = vpop.f32.mrf.mxu0
  %v369 = vadd.f32 %v90, %v368
  %v370 = vpop.f32.mrf.mxu0
  %v371 = vadd.f32 %v90, %v370
  %372 = vmatmul.bf16.gmra.mxu0 %v131
  %v373 = vpop.f32.mrf.mxu0
  %v374 = vadd.f32 %v90, %v373
  %v375 = vpop.f32.mrf.mxu0
  %v376 = vadd.f32 %v90, %v375
  %377 = vmatmul.bf16.gmra.mxu0 %v132
  %v378 = vpop.f32.mrf.mxu0
  %v379 = vadd.f32 %v90, %v378
  %v380 = vpop.f32.mrf.mxu0
  %v381 = vadd.f32 %v90, %v380
  %382 = vmatmul.bf16.gmra.mxu0 %v133
  %v383 = vpop.f32.mrf.mxu0
  %v384 = vadd.f32 %v90, %v383
  %v385 = vpop.f32.mrf.mxu0
  %v386 = vadd.f32 %v90, %v385
  %387 = vmatmul.bf16.gmra.mxu0 %v134
  %v388 = vpop.f32.mrf.mxu0
  %v389 = vadd.f32 %v90, %v388
  %v390 = vpop.f32.mrf.mxu0
  %v391 = vadd.f32 %v90, %v390
  %392 = vmatmul.bf16.gmra.mxu0 %v135
  %v393 = vpop.f32.mrf.mxu0
  %v394 = vadd.f32 %v90, %v393
  %v395 = vpop.f32.mrf.mxu0
  %v396 = vadd.f32 %v90, %v395
  %397 = vmatmul.bf16.gmra.mxu0 %v136
  %v398 = vpop.f32.mrf.mxu0
  %v399 = vadd.f32 %v90, %v398
  %v400 = vpop.f32.mrf.mxu0
  %v401 = vadd.f32 %v90, %v400
  %402 = vdwg.mxu0
  %403 = vmatpush.bf16.msra.mxu0 %v271
  %404 = vmatpush.bf16.msra.mxu0 %v267
  %405 = vmatpush.bf16.msra.mxu0 %v263
  %406 = vmatpush.bf16.msra.mxu0 %v259
  %407 = vmatpush.bf16.msra.mxu0 %v255
  %408 = vmatpush.bf16.msra.mxu0 %v251
  %409 = vmatpush.bf16.msra.mxu0 %v247
  %410 = vmatpush.bf16.msra.mxu0 %v243
  %411 = vmatmul.bf16.gmra.mxu0 %v129
  %v412 = vpop.f32.mrf.mxu0
  %v413 = vadd.f32 %v91, %v412
  %v414 = vpop.f32.mrf.mxu0
  %v415 = vadd.f32 %v91, %v414
  %416 = vmatmul.bf16.gmra.mxu0 %v130
  %v417 = vpop.f32.mrf.mxu0
  %v418 = vadd.f32 %v91, %v417
  %v419 = vpop.f32.mrf.mxu0
  %v420 = vadd.f32 %v91, %v419
  %421 = vmatmul.bf16.gmra.mxu0 %v131
  %v422 = vpop.f32.mrf.mxu0
  %v423 = vadd.f32 %v91, %v422
  %v424 = vpop.f32.mrf.mxu0
  %v425 = vadd.f32 %v91, %v424
  %426 = vmatmul.bf16.gmra.mxu0 %v132
  %v427 = vpop.f32.mrf.mxu0
  %v428 = vadd.f32 %v91, %v427
  %v429 = vpop.f32.mrf.mxu0
  %v430 = vadd.f32 %v91, %v429
  %431 = vmatmul.bf16.gmra.mxu0 %v133
  %v432 = vpop.f32.mrf.mxu0
  %v433 = vadd.f32 %v91, %v432
  %v434 = vpop.f32.mrf.mxu0
  %v435 = vadd.f32 %v91, %v434
  %436 = vmatmul.bf16.gmra.mxu0 %v134
  %v437 = vpop.f32.mrf.mxu0
  %v438 = vadd.f32 %v91, %v437
  %v439 = vpop.f32.mrf.mxu0
  %v440 = vadd.f32 %v91, %v439
  %441 = vmatmul.bf16.gmra.mxu0 %v135
  %v442 = vpop.f32.mrf.mxu0
  %v443 = vadd.f32 %v91, %v442
  %v444 = vpop.f32.mrf.mxu0
  %v445 = vadd.f32 %v91, %v444
  %446 = vmatmul.bf16.gmra.mxu0 %v136
  %v447 = vpop.f32.mrf.mxu0
  %v448 = vadd.f32 %v91, %v447
  %v449 = vpop.f32.mrf.mxu0
  %v450 = vadd.f32 %v91, %v449
  %451 = vdwg.mxu0
  %452 = vmatpush.bf16.msra.mxu0 %v272
  %453 = vmatpush.bf16.msra.mxu0 %v268
  %454 = vmatpush.bf16.msra.mxu0 %v264
  %455 = vmatpush.bf16.msra.mxu0 %v260
  %456 = vmatpush.bf16.msra.mxu0 %v256
  %457 = vmatpush.bf16.msra.mxu0 %v252
  %458 = vmatpush.bf16.msra.mxu0 %v248
  %459 = vmatpush.bf16.msra.mxu0 %v244
  %460 = vmatmul.bf16.gmra.mxu0 %v129
  %v461 = vpop.f32.mrf.mxu0
  %v462 = vadd.f32 %v92, %v461
  %v463 = vpop.f32.mrf.mxu0
  %v464 = vadd.f32 %v92, %v463
  %465 = vmatmul.bf16.gmra.mxu0 %v130
  %v466 = vpop.f32.mrf.mxu0
  %v467 = vadd.f32 %v92, %v466
  %v468 = vpop.f32.mrf.mxu0
  %v469 = vadd.f32 %v92, %v468
  %470 = vmatmul.bf16.gmra.mxu0 %v131
  %v471 = vpop.f32.mrf.mxu0
  %v472 = vadd.f32 %v92, %v471
  %v473 = vpop.f32.mrf.mxu0
  %v474 = vadd.f32 %v92, %v473
  %475 = vmatmul.bf16.gmra.mxu0 %v132
  %v476 = vpop.f32.mrf.mxu0
  %v477 = vadd.f32 %v92, %v476
  %v478 = vpop.f32.mrf.mxu0
  %v479 = vadd.f32 %v92, %v478
  %480 = vmatmul.bf16.gmra.mxu0 %v133
  %v481 = vpop.f32.mrf.mxu0
  %v482 = vadd.f32 %v92, %v481
  %v483 = vpop.f32.mrf.mxu0
  %v484 = vadd.f32 %v92, %v483
  %485 = vmatmul.bf16.gmra.mxu0 %v134
  %v486 = vpop.f32.mrf.mxu0
  %v487 = vadd.f32 %v92, %v486
  %v488 = vpop.f32.mrf.mxu0
  %v489 = vadd.f32 %v92, %v488
  %490 = vmatmul.bf16.gmra.mxu0 %v135
  %v491 = vpop.f32.mrf.mxu0
  %v492 = vadd.f32 %v92, %v491
  %v493 = vpop.f32.mrf.mxu0
  %v494 = vadd.f32 %v92, %v493
  %495 = vmatmul.bf16.gmra.mxu0 %v136
  %v496 = vpop.f32.mrf.mxu0
  %v497 = vadd.f32 %v92, %v496
  %v498 = vpop.f32.mrf.mxu0
  %v499 = vadd.f32 %v92, %v498
  %500 = vdwg.mxu0
  %501 = vst [vmem:[#allocation3] sm:$0xff] %v315
  %502 = vst [vmem:[#allocation3 + $0x8] sm:$0xff] %v364
  %503 = vst [vmem:[#allocation3 + $0x10] sm:$0xff] %v413
  %504 = vst [vmem:[#allocation3 + $0x18] sm:$0xff] %v462
  %505 = vst [vmem:[#allocation3 + $0x20] sm:$0xff] %v317
  %506 = vst [vmem:[#allocation3 + $0x28] sm:$0xff] %v366
  %507 = vst [vmem:[#allocation3 + $0x30] sm:$0xff] %v415
  %508 = vst [vmem:[#allocation3 + $0x38] sm:$0xff] %v464
  %509 = vst [vmem:[#allocation3 + $0x40] sm:$0xff] %v320
  %510 = vst [vmem:[#allocation3 + $0x48] sm:$0xff] %v369
  %511 = vst [vmem:[#allocation3 + $0x50] sm:$0xff] %v418
  %512 = vst [vmem:[#allocation3 + $0x58] sm:$0xff] %v467
  %513 = vst [vmem:[#allocation3 + $0x60] sm:$0xff] %v322
  %514 = vst [vmem:[#allocation3 + $0x68] sm:$0xff] %v371
  %515 = vst [vmem:[#allocation3 + $0x70] sm:$0xff] %v420
  %516 = vst [vmem:[#allocation3 + $0x78] sm:$0xff] %v469
  %517 = vst [vmem:[#allocation3 + $0x80] sm:$0xff] %v325
  %518 = vst [vmem:[#allocation3 + $0x88] sm:$0xff] %v374
  %519 = vst [vmem:[#allocation3 + $0x90] sm:$0xff] %v423
  %520 = vst [vmem:[#allocation3 + $0x98] sm:$0xff] %v472
  %521 = vst [vmem:[#allocation3 + $0xa0] sm:$0xff] %v327
  %522 = vst [vmem:[#allocation3 + $0xa8] sm:$0xff] %v376
  %523 = vst [vmem:[#allocation3 + $0xb0] sm:$0xff] %v425
  %524 = vst [vmem:[#allocation3 + $0xb8] sm:$0xff] %v474
  %525 = vst [vmem:[#allocation3 + $0xc0] sm:$0xff] %v330
  %526 = vst [vmem:[#allocation3 + $0xc8] sm:$0xff] %v379
  %527 = vst [vmem:[#allocation3 + $0xd0] sm:$0xff] %v428
  %528 = vst [vmem:[#allocation3 + $0xd8] sm:$0xff] %v477
  %529 = vst [vmem:[#allocation3 + $0xe0] sm:$0xff] %v332
  %530 = vst [vmem:[#allocation3 + $0xe8] sm:$0xff] %v381
  %531 = vst [vmem:[#allocation3 + $0xf0] sm:$0xff] %v430
  %532 = vst [vmem:[#allocation3 + $0xf8] sm:$0xff] %v479
  %533 = vst [vmem:[#allocation3 + $0x100] sm:$0xff] %v335
  %534 = vst [vmem:[#allocation3 + $0x108] sm:$0xff] %v384
  %535 = vst [vmem:[#allocation3 + $0x110] sm:$0xff] %v433
  %536 = vst [vmem:[#allocation3 + $0x118] sm:$0xff] %v482
  %537 = vst [vmem:[#allocation3 + $0x120] sm:$0xff] %v337
  %538 = vst [vmem:[#allocation3 + $0x128] sm:$0xff] %v386
  %539 = vst [vmem:[#allocation3 + $0x130] sm:$0xff] %v435
  %540 = vst [vmem:[#allocation3 + $0x138] sm:$0xff] %v484
  %541 = vst [vmem:[#allocation3 + $0x140] sm:$0xff] %v340
  %542 = vst [vmem:[#allocation3 + $0x148] sm:$0xff] %v389
  %543 = vst [vmem:[#allocation3 + $0x150] sm:$0xff] %v438
  %544 = vst [vmem:[#allocation3 + $0x158] sm:$0xff] %v487
  %545 = vst [vmem:[#allocation3 + $0x160] sm:$0xff] %v342
  %546 = vst [vmem:[#allocation3 + $0x168] sm:$0xff] %v391
  %547 = vst [vmem:[#allocation3 + $0x170] sm:$0xff] %v440
  %548 = vst [vmem:[#allocation3 + $0x178] sm:$0xff] %v489
  %549 = vst [vmem:[#allocation3 + $0x180] sm:$0xff] %v345
  %550 = vst [vmem:[#allocation3 + $0x188] sm:$0xff] %v394
  %551 = vst [vmem:[#allocation3 + $0x190] sm:$0xff] %v443
  %552 = vst [vmem:[#allocation3 + $0x198] sm:$0xff] %v492
  %553 = vst [vmem:[#allocation3 + $0x1a0] sm:$0xff] %v347
  %554 = vst [vmem:[#allocation3 + $0x1a8] sm:$0xff] %v396
  %555 = vst [vmem:[#allocation3 + $0x1b0] sm:$0xff] %v445
  %556 = vst [vmem:[#allocation3 + $0x1b8] sm:$0xff] %v494
  %557 = vst [vmem:[#allocation3 + $0x1c0] sm:$0xff] %v350
  %558 = vst [vmem:[#allocation3 + $0x1c8] sm:$0xff] %v399
  %559 = vst [vmem:[#allocation3 + $0x1d0] sm:$0xff] %v448
  %560 = vst [vmem:[#allocation3 + $0x1d8] sm:$0xff] %v497
  %561 = vst [vmem:[#allocation3 + $0x1e0] sm:$0xff] %v352
  %562 = vst [vmem:[#allocation3 + $0x1e8] sm:$0xff] %v401
  %563 = vst [vmem:[#allocation3 + $0x1f0] sm:$0xff] %v450
  %564 = vst [vmem:[#allocation3 + $0x1f8] sm:$0xff] %v499
  loop: start=0, step=1, limit=2
  $region46: #{rnn_classifier_forward.1} parent=0 // loop_pre_header
    _
  $region47: #{rnn_classifier_forward.1} parent=0 // loop_header
    %s566 = sphi 0, %s570
    %p567 = scmp.ge.s32.totalorder %s566, 2
    %v571 = vphi 0.0, %v2198
    %v572 = vphi 0.0, %v2199
    %v573 = vphi 0.0, %v2194
    %v574 = vphi 0.0, %v2195
  $region48: #{rnn_classifier_forward.1} parent=0 // loop_header_branch
    %569 = sbr.rel (%p567) target = $region52
  $region49: #{rnn_classifier_forward.1} parent=0 // loop_body
    %s575 = smul.u32 %s566, 64
    %s576 = sshra.s32 %s575, 3
    %s577 = sand.u32 %s575, 7
    %s578 = smul.u32 %s576, 4
    %s579 = smul.addr %s578, 8
    %s580 = scalar_lea.vmem [#allocation3], %s579
    %v581 = vld [vmem:[%s580] sm:$0xff]
    %v582 = vld [vmem:[%s580 + $0x8] sm:$0xff]
    %v583 = vld [vmem:[%s580 + $0x10] sm:$0xff]
    %v584 = vld [vmem:[%s580 + $0x18] sm:$0xff]
    %v585 = vld [vmem:[%s580 + $0x20] sm:$0xff]
    %v586 = vld [vmem:[%s580 + $0x28] sm:$0xff]
    %v587 = vld [vmem:[%s580 + $0x30] sm:$0xff]
    %v588 = vld [vmem:[%s580 + $0x38] sm:$0xff]
    %v589 = vpack.c.bf16 %v572, %v571
    %v590 = vld [vmem:[%s4] sm:$0xff]
    %v591 = vld [vmem:[%s4 + $0x8] sm:$0xff]
    %v592 = vld [vmem:[%s4 + $0x10] sm:$0xff]
    %v593 = vld [vmem:[%s4 + $0x18] sm:$0xff]
    %v594 = vld [vmem:[%s4 + $0x20] sm:$0xff]
    %v595 = vld [vmem:[%s4 + $0x28] sm:$0xff]
    %v596 = vld [vmem:[%s4 + $0x30] sm:$0xff]
    %v597 = vld [vmem:[%s4 + $0x38] sm:$0xff]
    %v598 = vld [vmem:[%s4 + $0x40] sm:$0xff]
    %v599 = vld [vmem:[%s4 + $0x48] sm:$0xff]
    %v600 = vld [vmem:[%s4 + $0x50] sm:$0xff]
    %v601 = vld [vmem:[%s4 + $0x58] sm:$0xff]
    %v602 = vld [vmem:[%s4 + $0x60] sm:$0xff]
    %v603 = vld [vmem:[%s4 + $0x68] sm:$0xff]
    %v604 = vld [vmem:[%s4 + $0x70] sm:$0xff]
    %v605 = vld [vmem:[%s4 + $0x78] sm:$0xff]
    %v606 = vld [vmem:[%s4 + $0x80] sm:$0xff]
    %v607 = vld [vmem:[%s4 + $0x88] sm:$0xff]
    %v608 = vld [vmem:[%s4 + $0x90] sm:$0xff]
    %v609 = vld [vmem:[%s4 + $0x98] sm:$0xff]
    %v610 = vld [vmem:[%s4 + $0xa0] sm:$0xff]
    %v611 = vld [vmem:[%s4 + $0xa8] sm:$0xff]
    %v612 = vld [vmem:[%s4 + $0xb0] sm:$0xff]
    %v613 = vld [vmem:[%s4 + $0xb8] sm:$0xff]
    %v614 = vld [vmem:[%s4 + $0xc0] sm:$0xff]
    %v615 = vld [vmem:[%s4 + $0xc8] sm:$0xff]
    %v616 = vld [vmem:[%s4 + $0xd0] sm:$0xff]
    %v617 = vld [vmem:[%s4 + $0xd8] sm:$0xff]
    %v618 = vld [vmem:[%s4 + $0xe0] sm:$0xff]
    %v619 = vld [vmem:[%s4 + $0xe8] sm:$0xff]
    %v620 = vld [vmem:[%s4 + $0xf0] sm:$0xff]
    %v621 = vld [vmem:[%s4 + $0xf8] sm:$0xff]
    %v654 = vunpack.c.l.b16 %v590
    %v655 = vunpack.c.h.b16 %v590
    %v656 = vunpack.c.l.b16 %v591
    %v657 = vunpack.c.h.b16 %v591
    %v658 = vunpack.c.l.b16 %v592
    %v659 = vunpack.c.h.b16 %v592
    %v660 = vunpack.c.l.b16 %v593
    %v661 = vunpack.c.h.b16 %v593
    %v662 = vunpack.c.l.b16 %v594
    %v663 = vunpack.c.h.b16 %v594
    %v664 = vunpack.c.l.b16 %v595
    %v665 = vunpack.c.h.b16 %v595
    %v666 = vunpack.c.l.b16 %v596
    %v667 = vunpack.c.h.b16 %v596
    %v668 = vunpack.c.l.b16 %v597
    %v669 = vunpack.c.h.b16 %v597
    %v670 = vunpack.c.l.b16 %v598
    %v671 = vunpack.c.h.b16 %v598
    %v672 = vunpack.c.l.b16 %v599
    %v673 = vunpack.c.h.b16 %v599
    %v674 = vunpack.c.l.b16 %v600
    %v675 = vunpack.c.h.b16 %v600
    %v676 = vunpack.c.l.b16 %v601
    %v677 = vunpack.c.h.b16 %v601
    %v678 = vunpack.c.l.b16 %v602
    %v679 = vunpack.c.h.b16 %v602
    %v680 = vunpack.c.l.b16 %v603
    %v681 = vunpack.c.h.b16 %v603
    %v682 = vunpack.c.l.b16 %v604
    %v683 = vunpack.c.h.b16 %v604
    %v684 = vunpack.c.l.b16 %v605
    %v685 = vunpack.c.h.b16 %v605
    %v686 = vunpack.c.l.b16 %v606
    %v687 = vunpack.c.h.b16 %v606
    %v688 = vunpack.c.l.b16 %v607
    %v689 = vunpack.c.h.b16 %v607
    %v690 = vunpack.c.l.b16 %v608
    %v691 = vunpack.c.h.b16 %v608
    %v692 = vunpack.c.l.b16 %v609
    %v693 = vunpack.c.h.b16 %v609
    %v694 = vunpack.c.l.b16 %v610
    %v695 = vunpack.c.h.b16 %v610
    %v696 = vunpack.c.l.b16 %v611
    %v697 = vunpack.c.h.b16 %v611
    %v698 = vunpack.c.l.b16 %v612
    %v699 = vunpack.c.h.b16 %v612
    %v700 = vunpack.c.l.b16 %v613
    %v701 = vunpack.c.h.b16 %v613
    %v702 = vunpack.c.l.b16 %v614
    %v703 = vunpack.c.h.b16 %v614
    %v704 = vunpack.c.l.b16 %v615
    %v705 = vunpack.c.h.b16 %v615
    %v706 = vunpack.c.l.b16 %v616
    %v707 = vunpack.c.h.b16 %v616
    %v708 = vunpack.c.l.b16 %v617
    %v709 = vunpack.c.h.b16 %v617
    %v710 = vunpack.c.l.b16 %v618
    %v711 = vunpack.c.h.b16 %v618
    %v712 = vunpack.c.l.b16 %v619
    %v713 = vunpack.c.h.b16 %v619
    %v714 = vunpack.c.l.b16 %v620
    %v715 = vunpack.c.h.b16 %v620
    %v716 = vunpack.c.l.b16 %v621
    %v717 = vunpack.c.h.b16 %v621
    %v718 = vpack.c.b16 %v658, %v654
    %v719 = vpack.c.b16 %v659, %v655
    %v720 = vpack.c.b16 %v660, %v656
    %v721 = vpack.c.b16 %v661, %v657
    %v722 = vpack.c.b16 %v666, %v662
    %v723 = vpack.c.b16 %v667, %v663
    %v724 = vpack.c.b16 %v668, %v664
    %v725 = vpack.c.b16 %v669, %v665
    %v726 = vpack.c.b16 %v674, %v670
    %v727 = vpack.c.b16 %v675, %v671
    %v728 = vpack.c.b16 %v676, %v672
    %v729 = vpack.c.b16 %v677, %v673
    %v730 = vpack.c.b16 %v682, %v678
    %v731 = vpack.c.b16 %v683, %v679
    %v732 = vpack.c.b16 %v684, %v680
    %v733 = vpack.c.b16 %v685, %v681
    %v734 = vpack.c.b16 %v690, %v686
    %v735 = vpack.c.b16 %v691, %v687
    %v736 = vpack.c.b16 %v692, %v688
    %v737 = vpack.c.b16 %v693, %v689
    %v738 = vpack.c.b16 %v698, %v694
    %v739 = vpack.c.b16 %v699, %v695
    %v740 = vpack.c.b16 %v700, %v696
    %v741 = vpack.c.b16 %v701, %v697
    %v742 = vpack.c.b16 %v706, %v702
    %v743 = vpack.c.b16 %v707, %v703
    %v744 = vpack.c.b16 %v708, %v704
    %v745 = vpack.c.b16 %v709, %v705
    %v746 = vpack.c.b16 %v714, %v710
    %v747 = vpack.c.b16 %v715, %v711
    %v748 = vpack.c.b16 %v716, %v712
    %v749 = vpack.c.b16 %v717, %v713
    %782 = vmatpush.bf16.msra.mxu0 %v746
    %783 = vmatpush.bf16.msra.mxu0 %v742
    %784 = vmatpush.bf16.msra.mxu0 %v738
    %785 = vmatpush.bf16.msra.mxu0 %v734
    %786 = vmatpush.bf16.msra.mxu0 %v730
    %787 = vmatpush.bf16.msra.mxu0 %v726
    %788 = vmatpush.bf16.msra.mxu0 %v722
    %789 = vmatpush.bf16.msra.mxu0 %v718
    %790 = vmatmul.bf16.gmra.mxu0 %v589
    %v791 = vpop.f32.mrf.mxu0
    %v792 = vadd.f32 0.0, %v791
    %v793 = vpop.f32.mrf.mxu0
    %v794 = vadd.f32 0.0, %v793
    %795 = vdwg.mxu0
    %796 = vmatpush.bf16.msra.mxu0 %v747
    %797 = vmatpush.bf16.msra.mxu0 %v743
    %798 = vmatpush.bf16.msra.mxu0 %v739
    %799 = vmatpush.bf16.msra.mxu0 %v735
    %800 = vmatpush.bf16.msra.mxu0 %v731
    %801 = vmatpush.bf16.msra.mxu0 %v727
    %802 = vmatpush.bf16.msra.mxu0 %v723
    %803 = vmatpush.bf16.msra.mxu0 %v719
    %804 = vmatmul.bf16.gmra.mxu0 %v589
    %v805 = vpop.f32.mrf.mxu0
    %v806 = vadd.f32 0.0, %v805
    %v807 = vpop.f32.mrf.mxu0
    %v808 = vadd.f32 0.0, %v807
    %809 = vdwg.mxu0
    %810 = vmatpush.bf16.msra.mxu0 %v748
    %811 = vmatpush.bf16.msra.mxu0 %v744
    %812 = vmatpush.bf16.msra.mxu0 %v740
    %813 = vmatpush.bf16.msra.mxu0 %v736
    %814 = vmatpush.bf16.msra.mxu0 %v732
    %815 = vmatpush.bf16.msra.mxu0 %v728
    %816 = vmatpush.bf16.msra.mxu0 %v724
    %817 = vmatpush.bf16.msra.mxu0 %v720
    %818 = vmatmul.bf16.gmra.mxu0 %v589
    %v819 = vpop.f32.mrf.mxu0
    %v820 = vadd.f32 0.0, %v819
    %v821 = vpop.f32.mrf.mxu0
    %v822 = vadd.f32 0.0, %v821
    %823 = vdwg.mxu0
    %824 = vmatpush.bf16.msra.mxu0 %v749
    %825 = vmatpush.bf16.msra.mxu0 %v745
    %826 = vmatpush.bf16.msra.mxu0 %v741
    %827 = vmatpush.bf16.msra.mxu0 %v737
    %828 = vmatpush.bf16.msra.mxu0 %v733
    %829 = vmatpush.bf16.msra.mxu0 %v729
    %830 = vmatpush.bf16.msra.mxu0 %v725
    %831 = vmatpush.bf16.msra.mxu0 %v721
    %832 = vmatmul.bf16.gmra.mxu0 %v589
    %v833 = vpop.f32.mrf.mxu0
    %v834 = vadd.f32 0.0, %v833
    %v835 = vpop.f32.mrf.mxu0
    %v836 = vadd.f32 0.0, %v835
    %837 = vdwg.mxu0
    %v838 = vadd.f32 %v581, %v792
    %v839 = vadd.f32 %v582, %v806
    %v840 = vadd.f32 %v583, %v820
    %v841 = vadd.f32 %v584, %v834
    %v842 = vadd.f32 %v585, %v794
    %v843 = vadd.f32 %v586, %v808
    %v844 = vadd.f32 %v587, %v822
    %v845 = vadd.f32 %v588, %v836
    %v846 = vxor.u32 %v838, 2147483648
    %v847 = vxor.u32 %v842, 2147483648
    %v848 = vmul.f32 %v846, 1.442695
    %v849 = vpow.pop %v848
    %v850 = vmul.f32 %v847, 1.442695
    %v851 = vpow.pop %v850
    %v852 = vadd.f32 %v849, 1.0
    %v853 = vadd.f32 %v851, 1.0
    %v854 = vrcp.pop %v852
    %v855 = vmul.f32 %v852, %v854
    %v856 = vsub.f32 1.0, %v855
    %v857 = vmul.f32 %v854, %v856
    %v858 = vadd.f32 %v854, %v857
    %vm859 = vweird.f32 %v852
    %vm860 = vweird.f32 %v854
    %vm861 = vmor %vm859, %vm860
    %v862 = vsel %vm861, %v854, %v858
    %v863 = vand.u32 2147483647, %v852
    %vm864 = vcmp.eq.f32.partialorder %v863, 8.507059e+37
    %v865 = vand.u32 %v852, 2147483648
    %v866 = vor.u32 1.1754944e-38, %v865
    %v867 = vsel %vm864, %v866, %v862
    %v868 = vmul.f32 1.0, %v867
    %v869 = vrcp.pop %v853
    %v870 = vmul.f32 %v853, %v869
    %v871 = vsub.f32 1.0, %v870
    %v872 = vmul.f32 %v869, %v871
    %v873 = vadd.f32 %v869, %v872
    %vm874 = vweird.f32 %v853
    %vm875 = vweird.f32 %v869
    %vm876 = vmor %vm874, %vm875
    %v877 = vsel %vm876, %v869, %v873
    %v878 = vand.u32 2147483647, %v853
    %vm879 = vcmp.eq.f32.partialorder %v878, 8.507059e+37
    %v880 = vand.u32 %v853, 2147483648
    %v881 = vor.u32 1.1754944e-38, %v880
    %v882 = vsel %vm879, %v881, %v877
    %v883 = vmul.f32 1.0, %v882
    %v884 = vxor.u32 %v839, 2147483648
    %v885 = vxor.u32 %v843, 2147483648
    %v886 = vmul.f32 %v884, 1.442695
    %v887 = vpow.pop %v886
    %v888 = vmul.f32 %v885, 1.442695
    %v889 = vpow.pop %v888
    %v890 = vadd.f32 %v887, 1.0
    %v891 = vadd.f32 %v889, 1.0
    %v892 = vrcp.pop %v890
    %v893 = vmul.f32 %v890, %v892
    %v894 = vsub.f32 1.0, %v893
    %v895 = vmul.f32 %v892, %v894
    %v896 = vadd.f32 %v892, %v895
    %vm897 = vweird.f32 %v890
    %vm898 = vweird.f32 %v892
    %vm899 = vmor %vm897, %vm898
    %v900 = vsel %vm899, %v892, %v896
    %v901 = vand.u32 2147483647, %v890
    %vm902 = vcmp.eq.f32.partialorder %v901, 8.507059e+37
    %v903 = vand.u32 %v890, 2147483648
    %v904 = vor.u32 1.1754944e-38, %v903
    %v905 = vsel %vm902, %v904, %v900
    %v906 = vmul.f32 1.0, %v905
    %v907 = vrcp.pop %v891
    %v908 = vmul.f32 %v891, %v907
    %v909 = vsub.f32 1.0, %v908
    %v910 = vmul.f32 %v907, %v909
    %v911 = vadd.f32 %v907, %v910
    %vm912 = vweird.f32 %v891
    %vm913 = vweird.f32 %v907
    %vm914 = vmor %vm912, %vm913
    %v915 = vsel %vm914, %v907, %v911
    %v916 = vand.u32 2147483647, %v891
    %vm917 = vcmp.eq.f32.partialorder %v916, 8.507059e+37
    %v918 = vand.u32 %v891, 2147483648
    %v919 = vor.u32 1.1754944e-38, %v918
    %v920 = vsel %vm917, %v919, %v915
    %v921 = vmul.f32 1.0, %v920
    %v922 = vtanh.pop %v840
    %v923 = vtanh.pop %v844
    %v924 = vxor.u32 %v841, 2147483648
    %v925 = vxor.u32 %v845, 2147483648
    %v926 = vmul.f32 %v924, 1.442695
    %v927 = vpow.pop %v926
    %v928 = vmul.f32 %v925, 1.442695
    %v929 = vpow.pop %v928
    %v930 = vadd.f32 %v927, 1.0
    %v931 = vadd.f32 %v929, 1.0
    %v932 = vrcp.pop %v930
    %v933 = vmul.f32 %v930, %v932
    %v934 = vsub.f32 1.0, %v933
    %v935 = vmul.f32 %v932, %v934
    %v936 = vadd.f32 %v932, %v935
    %vm937 = vweird.f32 %v930
    %vm938 = vweird.f32 %v932
    %vm939 = vmor %vm937, %vm938
    %v940 = vsel %vm939, %v932, %v936
    %v941 = vand.u32 2147483647, %v930
    %vm942 = vcmp.eq.f32.partialorder %v941, 8.507059e+37
    %v943 = vand.u32 %v930, 2147483648
    %v944 = vor.u32 1.1754944e-38, %v943
    %v945 = vsel %vm942, %v944, %v940
    %v946 = vmul.f32 1.0, %v945
    %v947 = vrcp.pop %v931
    %v948 = vmul.f32 %v931, %v947
    %v949 = vsub.f32 1.0, %v948
    %v950 = vmul.f32 %v947, %v949
    %v951 = vadd.f32 %v947, %v950
    %vm952 = vweird.f32 %v931
    %vm953 = vweird.f32 %v947
    %vm954 = vmor %vm952, %vm953
    %v955 = vsel %vm954, %v947, %v951
    %v956 = vand.u32 2147483647, %v931
    %vm957 = vcmp.eq.f32.partialorder %v956, 8.507059e+37
    %v958 = vand.u32 %v931, 2147483648
    %v959 = vor.u32 1.1754944e-38, %v958
    %v960 = vsel %vm957, %v959, %v955
    %v961 = vmul.f32 1.0, %v960
    %v962 = vmul.f32 %v906, %v573
    %v963 = vmul.f32 %v921, %v574
    %v964 = vmul.f32 %v868, %v922
    %v965 = vmul.f32 %v883, %v923
    %v966 = vadd.f32 %v962, %v964
    %v967 = vadd.f32 %v963, %v965
    %v968 = vtanh.pop %v966
    %v969 = vtanh.pop %v967
    %v970 = vmul.f32 %v946, %v968
    %v971 = vmul.f32 %v961, %v969
    %v972 = vpack.c.bf16 %v970, %v970
    %v973 = vpack.c.bf16 %v971, %v971
    %s974 = smul.addr %s576, 4
    %s975 = scalar_lea.vmem [#allocation2], %s974
    %976 = vst [vmem:[%s975] sm:$0xf] %v972
    %977 = vst [vmem:[%s975 + $0x4] sm:$0xf] %v973
    %s978 = smul.u32 %s566, 4
    %s979 = sadd.s32 %s978, 1
    %s980 = smul.u32 %s979, 16
    %s981 = sshra.s32 %s980, 3
    %s982 = sand.u32 %s980, 7
    %s983 = smul.u32 %s981, 4
    %s984 = smul.addr %s983, 8
    %s985 = scalar_lea.vmem [#allocation3], %s984
    %v986 = vld [vmem:[%s985] sm:$0xff]
    %v987 = vld [vmem:[%s985 + $0x8] sm:$0xff]
    %v988 = vld [vmem:[%s985 + $0x10] sm:$0xff]
    %v989 = vld [vmem:[%s985 + $0x18] sm:$0xff]
    %v990 = vld [vmem:[%s985 + $0x20] sm:$0xff]
    %v991 = vld [vmem:[%s985 + $0x28] sm:$0xff]
    %v992 = vld [vmem:[%s985 + $0x30] sm:$0xff]
    %v993 = vld [vmem:[%s985 + $0x38] sm:$0xff]
    %v994 = vld [vmem:[%s4] sm:$0xff]
    %v995 = vld [vmem:[%s4 + $0x8] sm:$0xff]
    %v996 = vld [vmem:[%s4 + $0x10] sm:$0xff]
    %v997 = vld [vmem:[%s4 + $0x18] sm:$0xff]
    %v998 = vld [vmem:[%s4 + $0x20] sm:$0xff]
    %v999 = vld [vmem:[%s4 + $0x28] sm:$0xff]
    %v1000 = vld [vmem:[%s4 + $0x30] sm:$0xff]
    %v1001 = vld [vmem:[%s4 + $0x38] sm:$0xff]
    %v1002 = vld [vmem:[%s4 + $0x40] sm:$0xff]
    %v1003 = vld [vmem:[%s4 + $0x48] sm:$0xff]
    %v1004 = vld [vmem:[%s4 + $0x50] sm:$0xff]
    %v1005 = vld [vmem:[%s4 + $0x58] sm:$0xff]
    %v1006 = vld [vmem:[%s4 + $0x60] sm:$0xff]
    %v1007 = vld [vmem:[%s4 + $0x68] sm:$0xff]
    %v1008 = vld [vmem:[%s4 + $0x70] sm:$0xff]
    %v1009 = vld [vmem:[%s4 + $0x78] sm:$0xff]
    %v1010 = vld [vmem:[%s4 + $0x80] sm:$0xff]
    %v1011 = vld [vmem:[%s4 + $0x88] sm:$0xff]
    %v1012 = vld [vmem:[%s4 + $0x90] sm:$0xff]
    %v1013 = vld [vmem:[%s4 + $0x98] sm:$0xff]
    %v1014 = vld [vmem:[%s4 + $0xa0] sm:$0xff]
    %v1015 = vld [vmem:[%s4 + $0xa8] sm:$0xff]
    %v1016 = vld [vmem:[%s4 + $0xb0] sm:$0xff]
    %v1017 = vld [vmem:[%s4 + $0xb8] sm:$0xff]
    %v1018 = vld [vmem:[%s4 + $0xc0] sm:$0xff]
    %v1019 = vld [vmem:[%s4 + $0xc8] sm:$0xff]
    %v1020 = vld [vmem:[%s4 + $0xd0] sm:$0xff]
    %v1021 = vld [vmem:[%s4 + $0xd8] sm:$0xff]
    %v1022 = vld [vmem:[%s4 + $0xe0] sm:$0xff]
    %v1023 = vld [vmem:[%s4 + $0xe8] sm:$0xff]
    %v1024 = vld [vmem:[%s4 + $0xf0] sm:$0xff]
    %v1025 = vld [vmem:[%s4 + $0xf8] sm:$0xff]
    %v1028 = vunpack.c.l.b16 %v972
    %v1029 = vunpack.c.l.b16 %v973
    %v1030 = vpack.c.b16 %v1029, %v1028
    %v1064 = vunpack.c.l.b16 %v994
    %v1065 = vunpack.c.h.b16 %v994
    %v1066 = vunpack.c.l.b16 %v995
    %v1067 = vunpack.c.h.b16 %v995
    %v1068 = vunpack.c.l.b16 %v996
    %v1069 = vunpack.c.h.b16 %v996
    %v1070 = vunpack.c.l.b16 %v997
    %v1071 = vunpack.c.h.b16 %v997
    %v1072 = vunpack.c.l.b16 %v998
    %v1073 = vunpack.c.h.b16 %v998
    %v1074 = vunpack.c.l.b16 %v999
    %v1075 = vunpack.c.h.b16 %v999
    %v1076 = vunpack.c.l.b16 %v1000
    %v1077 = vunpack.c.h.b16 %v1000
    %v1078 = vunpack.c.l.b16 %v1001
    %v1079 = vunpack.c.h.b16 %v1001
    %v1080 = vunpack.c.l.b16 %v1002
    %v1081 = vunpack.c.h.b16 %v1002
    %v1082 = vunpack.c.l.b16 %v1003
    %v1083 = vunpack.c.h.b16 %v1003
    %v1084 = vunpack.c.l.b16 %v1004
    %v1085 = vunpack.c.h.b16 %v1004
    %v1086 = vunpack.c.l.b16 %v1005
    %v1087 = vunpack.c.h.b16 %v1005
    %v1088 = vunpack.c.l.b16 %v1006
    %v1089 = vunpack.c.h.b16 %v1006
    %v1090 = vunpack.c.l.b16 %v1007
    %v1091 = vunpack.c.h.b16 %v1007
    %v1092 = vunpack.c.l.b16 %v1008
    %v1093 = vunpack.c.h.b16 %v1008
    %v1094 = vunpack.c.l.b16 %v1009
    %v1095 = vunpack.c.h.b16 %v1009
    %v1096 = vunpack.c.l.b16 %v1010
    %v1097 = vunpack.c.h.b16 %v1010
    %v1098 = vunpack.c.l.b16 %v1011
    %v1099 = vunpack.c.h.b16 %v1011
    %v1100 = vunpack.c.l.b16 %v1012
    %v1101 = vunpack.c.h.b16 %v1012
    %v1102 = vunpack.c.l.b16 %v1013
    %v1103 = vunpack.c.h.b16 %v1013
    %v1104 = vunpack.c.l.b16 %v1014
    %v1105 = vunpack.c.h.b16 %v1014
    %v1106 = vunpack.c.l.b16 %v1015
    %v1107 = vunpack.c.h.b16 %v1015
    %v1108 = vunpack.c.l.b16 %v1016
    %v1109 = vunpack.c.h.b16 %v1016
    %v1110 = vunpack.c.l.b16 %v1017
    %v1111 = vunpack.c.h.b16 %v1017
    %v1112 = vunpack.c.l.b16 %v1018
    %v1113 = vunpack.c.h.b16 %v1018
    %v1114 = vunpack.c.l.b16 %v1019
    %v1115 = vunpack.c.h.b16 %v1019
    %v1116 = vunpack.c.l.b16 %v1020
    %v1117 = vunpack.c.h.b16 %v1020
    %v1118 = vunpack.c.l.b16 %v1021
    %v1119 = vunpack.c.h.b16 %v1021
    %v1120 = vunpack.c.l.b16 %v1022
    %v1121 = vunpack.c.h.b16 %v1022
    %v1122 = vunpack.c.l.b16 %v1023
    %v1123 = vunpack.c.h.b16 %v1023
    %v1124 = vunpack.c.l.b16 %v1024
    %v1125 = vunpack.c.h.b16 %v1024
    %v1126 = vunpack.c.l.b16 %v1025
    %v1127 = vunpack.c.h.b16 %v1025
    %v1128 = vpack.c.b16 %v1068, %v1064
    %v1129 = vpack.c.b16 %v1069, %v1065
    %v1130 = vpack.c.b16 %v1070, %v1066
    %v1131 = vpack.c.b16 %v1071, %v1067
    %v1132 = vpack.c.b16 %v1076, %v1072
    %v1133 = vpack.c.b16 %v1077, %v1073
    %v1134 = vpack.c.b16 %v1078, %v1074
    %v1135 = vpack.c.b16 %v1079, %v1075
    %v1136 = vpack.c.b16 %v1084, %v1080
    %v1137 = vpack.c.b16 %v1085, %v1081
    %v1138 = vpack.c.b16 %v1086, %v1082
    %v1139 = vpack.c.b16 %v1087, %v1083
    %v1140 = vpack.c.b16 %v1092, %v1088
    %v1141 = vpack.c.b16 %v1093, %v1089
    %v1142 = vpack.c.b16 %v1094, %v1090
    %v1143 = vpack.c.b16 %v1095, %v1091
    %v1144 = vpack.c.b16 %v1100, %v1096
    %v1145 = vpack.c.b16 %v1101, %v1097
    %v1146 = vpack.c.b16 %v1102, %v1098
    %v1147 = vpack.c.b16 %v1103, %v1099
    %v1148 = vpack.c.b16 %v1108, %v1104
    %v1149 = vpack.c.b16 %v1109, %v1105
    %v1150 = vpack.c.b16 %v1110, %v1106
    %v1151 = vpack.c.b16 %v1111, %v1107
    %v1152 = vpack.c.b16 %v1116, %v1112
    %v1153 = vpack.c.b16 %v1117, %v1113
    %v1154 = vpack.c.b16 %v1118, %v1114
    %v1155 = vpack.c.b16 %v1119, %v1115
    %v1156 = vpack.c.b16 %v1124, %v1120
    %v1157 = vpack.c.b16 %v1125, %v1121
    %v1158 = vpack.c.b16 %v1126, %v1122
    %v1159 = vpack.c.b16 %v1127, %v1123
    %1192 = vmatpush.bf16.msra.mxu0 %v1156
    %1193 = vmatpush.bf16.msra.mxu0 %v1152
    %1194 = vmatpush.bf16.msra.mxu0 %v1148
    %1195 = vmatpush.bf16.msra.mxu0 %v1144
    %1196 = vmatpush.bf16.msra.mxu0 %v1140
    %1197 = vmatpush.bf16.msra.mxu0 %v1136
    %1198 = vmatpush.bf16.msra.mxu0 %v1132
    %1199 = vmatpush.bf16.msra.mxu0 %v1128
    %1200 = vmatmul.bf16.gmra.mxu0 %v1030
    %v1201 = vpop.f32.mrf.mxu0
    %v1202 = vadd.f32 0.0, %v1201
    %v1203 = vpop.f32.mrf.mxu0
    %v1204 = vadd.f32 0.0, %v1203
    %1205 = vdwg.mxu0
    %1206 = vmatpush.bf16.msra.mxu0 %v1157
    %1207 = vmatpush.bf16.msra.mxu0 %v1153
    %1208 = vmatpush.bf16.msra.mxu0 %v1149
    %1209 = vmatpush.bf16.msra.mxu0 %v1145
    %1210 = vmatpush.bf16.msra.mxu0 %v1141
    %1211 = vmatpush.bf16.msra.mxu0 %v1137
    %1212 = vmatpush.bf16.msra.mxu0 %v1133
    %1213 = vmatpush.bf16.msra.mxu0 %v1129
    %1214 = vmatmul.bf16.gmra.mxu0 %v1030
    %v1215 = vpop.f32.mrf.mxu0
    %v1216 = vadd.f32 0.0, %v1215
    %v1217 = vpop.f32.mrf.mxu0
    %v1218 = vadd.f32 0.0, %v1217
    %1219 = vdwg.mxu0
    %1220 = vmatpush.bf16.msra.mxu0 %v1158
    %1221 = vmatpush.bf16.msra.mxu0 %v1154
    %1222 = vmatpush.bf16.msra.mxu0 %v1150
    %1223 = vmatpush.bf16.msra.mxu0 %v1146
    %1224 = vmatpush.bf16.msra.mxu0 %v1142
    %1225 = vmatpush.bf16.msra.mxu0 %v1138
    %1226 = vmatpush.bf16.msra.mxu0 %v1134
    %1227 = vmatpush.bf16.msra.mxu0 %v1130
    %1228 = vmatmul.bf16.gmra.mxu0 %v1030
    %v1229 = vpop.f32.mrf.mxu0
    %v1230 = vadd.f32 0.0, %v1229
    %v1231 = vpop.f32.mrf.mxu0
    %v1232 = vadd.f32 0.0, %v1231
    %1233 = vdwg.mxu0
    %1234 = vmatpush.bf16.msra.mxu0 %v1159
    %1235 = vmatpush.bf16.msra.mxu0 %v1155
    %1236 = vmatpush.bf16.msra.mxu0 %v1151
    %1237 = vmatpush.bf16.msra.mxu0 %v1147
    %1238 = vmatpush.bf16.msra.mxu0 %v1143
    %1239 = vmatpush.bf16.msra.mxu0 %v1139
    %1240 = vmatpush.bf16.msra.mxu0 %v1135
    %1241 = vmatpush.bf16.msra.mxu0 %v1131
    %1242 = vmatmul.bf16.gmra.mxu0 %v1030
    %v1243 = vpop.f32.mrf.mxu0
    %v1244 = vadd.f32 0.0, %v1243
    %v1245 = vpop.f32.mrf.mxu0
    %v1246 = vadd.f32 0.0, %v1245
    %1247 = vdwg.mxu0
    %v1248 = vadd.f32 %v986, %v1202
    %v1249 = vadd.f32 %v987, %v1216
    %v1250 = vadd.f32 %v988, %v1230
    %v1251 = vadd.f32 %v989, %v1244
    %v1252 = vadd.f32 %v990, %v1204
    %v1253 = vadd.f32 %v991, %v1218
    %v1254 = vadd.f32 %v992, %v1232
    %v1255 = vadd.f32 %v993, %v1246
    %v1256 = vxor.u32 %v1248, 2147483648
    %v1257 = vxor.u32 %v1252, 2147483648
    %v1258 = vmul.f32 %v1256, 1.442695
    %v1259 = vpow.pop %v1258
    %v1260 = vmul.f32 %v1257, 1.442695
    %v1261 = vpow.pop %v1260
    %v1262 = vadd.f32 %v1259, 1.0
    %v1263 = vadd.f32 %v1261, 1.0
    %v1264 = vrcp.pop %v1262
    %v1265 = vmul.f32 %v1262, %v1264
    %v1266 = vsub.f32 1.0, %v1265
    %v1267 = vmul.f32 %v1264, %v1266
    %v1268 = vadd.f32 %v1264, %v1267
    %vm1269 = vweird.f32 %v1262
    %vm1270 = vweird.f32 %v1264
    %vm1271 = vmor %vm1269, %vm1270
    %v1272 = vsel %vm1271, %v1264, %v1268
    %v1273 = vand.u32 2147483647, %v1262
    %vm1274 = vcmp.eq.f32.partialorder %v1273, 8.507059e+37
    %v1275 = vand.u32 %v1262, 2147483648
    %v1276 = vor.u32 1.1754944e-38, %v1275
    %v1277 = vsel %vm1274, %v1276, %v1272
    %v1278 = vmul.f32 1.0, %v1277
    %v1279 = vrcp.pop %v1263
    %v1280 = vmul.f32 %v1263, %v1279
    %v1281 = vsub.f32 1.0, %v1280
    %v1282 = vmul.f32 %v1279, %v1281
    %v1283 = vadd.f32 %v1279, %v1282
    %vm1284 = vweird.f32 %v1263
    %vm1285 = vweird.f32 %v1279
    %vm1286 = vmor %vm1284, %vm1285
    %v1287 = vsel %vm1286, %v1279, %v1283
    %v1288 = vand.u32 2147483647, %v1263
    %vm1289 = vcmp.eq.f32.partialorder %v1288, 8.507059e+37
    %v1290 = vand.u32 %v1263, 2147483648
    %v1291 = vor.u32 1.1754944e-38, %v1290
    %v1292 = vsel %vm1289, %v1291, %v1287
    %v1293 = vmul.f32 1.0, %v1292
    %v1294 = vxor.u32 %v1249, 2147483648
    %v1295 = vxor.u32 %v1253, 2147483648
    %v1296 = vmul.f32 %v1294, 1.442695
    %v1297 = vpow.pop %v1296
    %v1298 = vmul.f32 %v1295, 1.442695
    %v1299 = vpow.pop %v1298
    %v1300 = vadd.f32 %v1297, 1.0
    %v1301 = vadd.f32 %v1299, 1.0
    %v1302 = vrcp.pop %v1300
    %v1303 = vmul.f32 %v1300, %v1302
    %v1304 = vsub.f32 1.0, %v1303
    %v1305 = vmul.f32 %v1302, %v1304
    %v1306 = vadd.f32 %v1302, %v1305
    %vm1307 = vweird.f32 %v1300
    %vm1308 = vweird.f32 %v1302
    %vm1309 = vmor %vm1307, %vm1308
    %v1310 = vsel %vm1309, %v1302, %v1306
    %v1311 = vand.u32 2147483647, %v1300
    %vm1312 = vcmp.eq.f32.partialorder %v1311, 8.507059e+37
    %v1313 = vand.u32 %v1300, 2147483648
    %v1314 = vor.u32 1.1754944e-38, %v1313
    %v1315 = vsel %vm1312, %v1314, %v1310
    %v1316 = vmul.f32 1.0, %v1315
    %v1317 = vrcp.pop %v1301
    %v1318 = vmul.f32 %v1301, %v1317
    %v1319 = vsub.f32 1.0, %v1318
    %v1320 = vmul.f32 %v1317, %v1319
    %v1321 = vadd.f32 %v1317, %v1320
    %vm1322 = vweird.f32 %v1301
    %vm1323 = vweird.f32 %v1317
    %vm1324 = vmor %vm1322, %vm1323
    %v1325 = vsel %vm1324, %v1317, %v1321
    %v1326 = vand.u32 2147483647, %v1301
    %vm1327 = vcmp.eq.f32.partialorder %v1326, 8.507059e+37
    %v1328 = vand.u32 %v1301, 2147483648
    %v1329 = vor.u32 1.1754944e-38, %v1328
    %v1330 = vsel %vm1327, %v1329, %v1325
    %v1331 = vmul.f32 1.0, %v1330
    %v1332 = vtanh.pop %v1250
    %v1333 = vtanh.pop %v1254
    %v1334 = vxor.u32 %v1251, 2147483648
    %v1335 = vxor.u32 %v1255, 2147483648
    %v1336 = vmul.f32 %v1334, 1.442695
    %v1337 = vpow.pop %v1336
    %v1338 = vmul.f32 %v1335, 1.442695
    %v1339 = vpow.pop %v1338
    %v1340 = vadd.f32 %v1337, 1.0
    %v1341 = vadd.f32 %v1339, 1.0
    %v1342 = vrcp.pop %v1340
    %v1343 = vmul.f32 %v1340, %v1342
    %v1344 = vsub.f32 1.0, %v1343
    %v1345 = vmul.f32 %v1342, %v1344
    %v1346 = vadd.f32 %v1342, %v1345
    %vm1347 = vweird.f32 %v1340
    %vm1348 = vweird.f32 %v1342
    %vm1349 = vmor %vm1347, %vm1348
    %v1350 = vsel %vm1349, %v1342, %v1346
    %v1351 = vand.u32 2147483647, %v1340
    %vm1352 = vcmp.eq.f32.partialorder %v1351, 8.507059e+37
    %v1353 = vand.u32 %v1340, 2147483648
    %v1354 = vor.u32 1.1754944e-38, %v1353
    %v1355 = vsel %vm1352, %v1354, %v1350
    %v1356 = vmul.f32 1.0, %v1355
    %v1357 = vrcp.pop %v1341
    %v1358 = vmul.f32 %v1341, %v1357
    %v1359 = vsub.f32 1.0, %v1358
    %v1360 = vmul.f32 %v1357, %v1359
    %v1361 = vadd.f32 %v1357, %v1360
    %vm1362 = vweird.f32 %v1341
    %vm1363 = vweird.f32 %v1357
    %vm1364 = vmor %vm1362, %vm1363
    %v1365 = vsel %vm1364, %v1357, %v1361
    %v1366 = vand.u32 2147483647, %v1341
    %vm1367 = vcmp.eq.f32.partialorder %v1366, 8.507059e+37
    %v1368 = vand.u32 %v1341, 2147483648
    %v1369 = vor.u32 1.1754944e-38, %v1368
    %v1370 = vsel %vm1367, %v1369, %v1365
    %v1371 = vmul.f32 1.0, %v1370
    %v1372 = vmul.f32 %v1316, %v966
    %v1373 = vmul.f32 %v1331, %v967
    %v1374 = vmul.f32 %v1278, %v1332
    %v1375 = vmul.f32 %v1293, %v1333
    %v1376 = vadd.f32 %v1372, %v1374
    %v1377 = vadd.f32 %v1373, %v1375
    %v1378 = vtanh.pop %v1376
    %v1379 = vtanh.pop %v1377
    %v1380 = vmul.f32 %v1356, %v1378
    %v1381 = vmul.f32 %v1371, %v1379
    %v1382 = vpack.c.bf16 %v1380, %v1380
    %v1383 = vpack.c.bf16 %v1381, %v1381
    %s1384 = smul.addr %s981, 4
    %s1385 = scalar_lea.vmem [#allocation2], %s1384
    %1386 = vst [vmem:[%s1385] sm:$0xf] %v1382
    %1387 = vst [vmem:[%s1385 + $0x4] sm:$0xf] %v1383
    %s1388 = sadd.s32 %s978, 2
    %s1389 = smul.u32 %s1388, 16
    %s1390 = sshra.s32 %s1389, 3
    %s1391 = sand.u32 %s1389, 7
    %s1392 = smul.u32 %s1390, 4
    %s1393 = smul.addr %s1392, 8
    %s1394 = scalar_lea.vmem [#allocation3], %s1393
    %v1395 = vld [vmem:[%s1394] sm:$0xff]
    %v1396 = vld [vmem:[%s1394 + $0x8] sm:$0xff]
    %v1397 = vld [vmem:[%s1394 + $0x10] sm:$0xff]
    %v1398 = vld [vmem:[%s1394 + $0x18] sm:$0xff]
    %v1399 = vld [vmem:[%s1394 + $0x20] sm:$0xff]
    %v1400 = vld [vmem:[%s1394 + $0x28] sm:$0xff]
    %v1401 = vld [vmem:[%s1394 + $0x30] sm:$0xff]
    %v1402 = vld [vmem:[%s1394 + $0x38] sm:$0xff]
    %v1403 = vld [vmem:[%s4] sm:$0xff]
    %v1404 = vld [vmem:[%s4 + $0x8] sm:$0xff]
    %v1405 = vld [vmem:[%s4 + $0x10] sm:$0xff]
    %v1406 = vld [vmem:[%s4 + $0x18] sm:$0xff]
    %v1407 = vld [vmem:[%s4 + $0x20] sm:$0xff]
    %v1408 = vld [vmem:[%s4 + $0x28] sm:$0xff]
    %v1409 = vld [vmem:[%s4 + $0x30] sm:$0xff]
    %v1410 = vld [vmem:[%s4 + $0x38] sm:$0xff]
    %v1411 = vld [vmem:[%s4 + $0x40] sm:$0xff]
    %v1412 = vld [vmem:[%s4 + $0x48] sm:$0xff]
    %v1413 = vld [vmem:[%s4 + $0x50] sm:$0xff]
    %v1414 = vld [vmem:[%s4 + $0x58] sm:$0xff]
    %v1415 = vld [vmem:[%s4 + $0x60] sm:$0xff]
    %v1416 = vld [vmem:[%s4 + $0x68] sm:$0xff]
    %v1417 = vld [vmem:[%s4 + $0x70] sm:$0xff]
    %v1418 = vld [vmem:[%s4 + $0x78] sm:$0xff]
    %v1419 = vld [vmem:[%s4 + $0x80] sm:$0xff]
    %v1420 = vld [vmem:[%s4 + $0x88] sm:$0xff]
    %v1421 = vld [vmem:[%s4 + $0x90] sm:$0xff]
    %v1422 = vld [vmem:[%s4 + $0x98] sm:$0xff]
    %v1423 = vld [vmem:[%s4 + $0xa0] sm:$0xff]
    %v1424 = vld [vmem:[%s4 + $0xa8] sm:$0xff]
    %v1425 = vld [vmem:[%s4 + $0xb0] sm:$0xff]
    %v1426 = vld [vmem:[%s4 + $0xb8] sm:$0xff]
    %v1427 = vld [vmem:[%s4 + $0xc0] sm:$0xff]
    %v1428 = vld [vmem:[%s4 + $0xc8] sm:$0xff]
    %v1429 = vld [vmem:[%s4 + $0xd0] sm:$0xff]
    %v1430 = vld [vmem:[%s4 + $0xd8] sm:$0xff]
    %v1431 = vld [vmem:[%s4 + $0xe0] sm:$0xff]
    %v1432 = vld [vmem:[%s4 + $0xe8] sm:$0xff]
    %v1433 = vld [vmem:[%s4 + $0xf0] sm:$0xff]
    %v1434 = vld [vmem:[%s4 + $0xf8] sm:$0xff]
    %v1437 = vunpack.c.l.b16 %v1382
    %v1438 = vunpack.c.l.b16 %v1383
    %v1439 = vpack.c.b16 %v1438, %v1437
    %v1473 = vunpack.c.l.b16 %v1403
    %v1474 = vunpack.c.h.b16 %v1403
    %v1475 = vunpack.c.l.b16 %v1404
    %v1476 = vunpack.c.h.b16 %v1404
    %v1477 = vunpack.c.l.b16 %v1405
    %v1478 = vunpack.c.h.b16 %v1405
    %v1479 = vunpack.c.l.b16 %v1406
    %v1480 = vunpack.c.h.b16 %v1406
    %v1481 = vunpack.c.l.b16 %v1407
    %v1482 = vunpack.c.h.b16 %v1407
    %v1483 = vunpack.c.l.b16 %v1408
    %v1484 = vunpack.c.h.b16 %v1408
    %v1485 = vunpack.c.l.b16 %v1409
    %v1486 = vunpack.c.h.b16 %v1409
    %v1487 = vunpack.c.l.b16 %v1410
    %v1488 = vunpack.c.h.b16 %v1410
    %v1489 = vunpack.c.l.b16 %v1411
    %v1490 = vunpack.c.h.b16 %v1411
    %v1491 = vunpack.c.l.b16 %v1412
    %v1492 = vunpack.c.h.b16 %v1412
    %v1493 = vunpack.c.l.b16 %v1413
    %v1494 = vunpack.c.h.b16 %v1413
    %v1495 = vunpack.c.l.b16 %v1414
    %v1496 = vunpack.c.h.b16 %v1414
    %v1497 = vunpack.c.l.b16 %v1415
    %v1498 = vunpack.c.h.b16 %v1415
    %v1499 = vunpack.c.l.b16 %v1416
    %v1500 = vunpack.c.h.b16 %v1416
    %v1501 = vunpack.c.l.b16 %v1417
    %v1502 = vunpack.c.h.b16 %v1417
    %v1503 = vunpack.c.l.b16 %v1418
    %v1504 = vunpack.c.h.b16 %v1418
    %v1505 = vunpack.c.l.b16 %v1419
    %v1506 = vunpack.c.h.b16 %v1419
    %v1507 = vunpack.c.l.b16 %v1420
    %v1508 = vunpack.c.h.b16 %v1420
    %v1509 = vunpack.c.l.b16 %v1421
    %v1510 = vunpack.c.h.b16 %v1421
    %v1511 = vunpack.c.l.b16 %v1422
    %v1512 = vunpack.c.h.b16 %v1422
    %v1513 = vunpack.c.l.b16 %v1423
    %v1514 = vunpack.c.h.b16 %v1423
    %v1515 = vunpack.c.l.b16 %v1424
    %v1516 = vunpack.c.h.b16 %v1424
    %v1517 = vunpack.c.l.b16 %v1425
    %v1518 = vunpack.c.h.b16 %v1425
    %v1519 = vunpack.c.l.b16 %v1426
    %v1520 = vunpack.c.h.b16 %v1426
    %v1521 = vunpack.c.l.b16 %v1427
    %v1522 = vunpack.c.h.b16 %v1427
    %v1523 = vunpack.c.l.b16 %v1428
    %v1524 = vunpack.c.h.b16 %v1428
    %v1525 = vunpack.c.l.b16 %v1429
    %v1526 = vunpack.c.h.b16 %v1429
    %v1527 = vunpack.c.l.b16 %v1430
    %v1528 = vunpack.c.h.b16 %v1430
    %v1529 = vunpack.c.l.b16 %v1431
    %v1530 = vunpack.c.h.b16 %v1431
    %v1531 = vunpack.c.l.b16 %v1432
    %v1532 = vunpack.c.h.b16 %v1432
    %v1533 = vunpack.c.l.b16 %v1433
    %v1534 = vunpack.c.h.b16 %v1433
    %v1535 = vunpack.c.l.b16 %v1434
    %v1536 = vunpack.c.h.b16 %v1434
    %v1537 = vpack.c.b16 %v1477, %v1473
    %v1538 = vpack.c.b16 %v1478, %v1474
    %v1539 = vpack.c.b16 %v1479, %v1475
    %v1540 = vpack.c.b16 %v1480, %v1476
    %v1541 = vpack.c.b16 %v1485, %v1481
    %v1542 = vpack.c.b16 %v1486, %v1482
    %v1543 = vpack.c.b16 %v1487, %v1483
    %v1544 = vpack.c.b16 %v1488, %v1484
    %v1545 = vpack.c.b16 %v1493, %v1489
    %v1546 = vpack.c.b16 %v1494, %v1490
    %v1547 = vpack.c.b16 %v1495, %v1491
    %v1548 = vpack.c.b16 %v1496, %v1492
    %v1549 = vpack.c.b16 %v1501, %v1497
    %v1550 = vpack.c.b16 %v1502, %v1498
    %v1551 = vpack.c.b16 %v1503, %v1499
    %v1552 = vpack.c.b16 %v1504, %v1500
    %v1553 = vpack.c.b16 %v1509, %v1505
    %v1554 = vpack.c.b16 %v1510, %v1506
    %v1555 = vpack.c.b16 %v1511, %v1507
    %v1556 = vpack.c.b16 %v1512, %v1508
    %v1557 = vpack.c.b16 %v1517, %v1513
    %v1558 = vpack.c.b16 %v1518, %v1514
    %v1559 = vpack.c.b16 %v1519, %v1515
    %v1560 = vpack.c.b16 %v1520, %v1516
    %v1561 = vpack.c.b16 %v1525, %v1521
    %v1562 = vpack.c.b16 %v1526, %v1522
    %v1563 = vpack.c.b16 %v1527, %v1523
    %v1564 = vpack.c.b16 %v1528, %v1524
    %v1565 = vpack.c.b16 %v1533, %v1529
    %v1566 = vpack.c.b16 %v1534, %v1530
    %v1567 = vpack.c.b16 %v1535, %v1531
    %v1568 = vpack.c.b16 %v1536, %v1532
    %1601 = vmatpush.bf16.msra.mxu0 %v1565
    %1602 = vmatpush.bf16.msra.mxu0 %v1561
    %1603 = vmatpush.bf16.msra.mxu0 %v1557
    %1604 = vmatpush.bf16.msra.mxu0 %v1553
    %1605 = vmatpush.bf16.msra.mxu0 %v1549
    %1606 = vmatpush.bf16.msra.mxu0 %v1545
    %1607 = vmatpush.bf16.msra.mxu0 %v1541
    %1608 = vmatpush.bf16.msra.mxu0 %v1537
    %1609 = vmatmul.bf16.gmra.mxu0 %v1439
    %v1610 = vpop.f32.mrf.mxu0
    %v1611 = vadd.f32 0.0, %v1610
    %v1612 = vpop.f32.mrf.mxu0
    %v1613 = vadd.f32 0.0, %v1612
    %1614 = vdwg.mxu0
    %1615 = vmatpush.bf16.msra.mxu0 %v1566
    %1616 = vmatpush.bf16.msra.mxu0 %v1562
    %1617 = vmatpush.bf16.msra.mxu0 %v1558
    %1618 = vmatpush.bf16.msra.mxu0 %v1554
    %1619 = vmatpush.bf16.msra.mxu0 %v1550
    %1620 = vmatpush.bf16.msra.mxu0 %v1546
    %1621 = vmatpush.bf16.msra.mxu0 %v1542
    %1622 = vmatpush.bf16.msra.mxu0 %v1538
    %1623 = vmatmul.bf16.gmra.mxu0 %v1439
    %v1624 = vpop.f32.mrf.mxu0
    %v1625 = vadd.f32 0.0, %v1624
    %v1626 = vpop.f32.mrf.mxu0
    %v1627 = vadd.f32 0.0, %v1626
    %1628 = vdwg.mxu0
    %1629 = vmatpush.bf16.msra.mxu0 %v1567
    %1630 = vmatpush.bf16.msra.mxu0 %v1563
    %1631 = vmatpush.bf16.msra.mxu0 %v1559
    %1632 = vmatpush.bf16.msra.mxu0 %v1555
    %1633 = vmatpush.bf16.msra.mxu0 %v1551
    %1634 = vmatpush.bf16.msra.mxu0 %v1547
    %1635 = vmatpush.bf16.msra.mxu0 %v1543
    %1636 = vmatpush.bf16.msra.mxu0 %v1539
    %1637 = vmatmul.bf16.gmra.mxu0 %v1439
    %v1638 = vpop.f32.mrf.mxu0
    %v1639 = vadd.f32 0.0, %v1638
    %v1640 = vpop.f32.mrf.mxu0
    %v1641 = vadd.f32 0.0, %v1640
    %1642 = vdwg.mxu0
    %1643 = vmatpush.bf16.msra.mxu0 %v1568
    %1644 = vmatpush.bf16.msra.mxu0 %v1564
    %1645 = vmatpush.bf16.msra.mxu0 %v1560
    %1646 = vmatpush.bf16.msra.mxu0 %v1556
    %1647 = vmatpush.bf16.msra.mxu0 %v1552
    %1648 = vmatpush.bf16.msra.mxu0 %v1548
    %1649 = vmatpush.bf16.msra.mxu0 %v1544
    %1650 = vmatpush.bf16.msra.mxu0 %v1540
    %1651 = vmatmul.bf16.gmra.mxu0 %v1439
    %v1652 = vpop.f32.mrf.mxu0
    %v1653 = vadd.f32 0.0, %v1652
    %v1654 = vpop.f32.mrf.mxu0
    %v1655 = vadd.f32 0.0, %v1654
    %1656 = vdwg.mxu0
    %v1657 = vadd.f32 %v1395, %v1611
    %v1658 = vadd.f32 %v1396, %v1625
    %v1659 = vadd.f32 %v1397, %v1639
    %v1660 = vadd.f32 %v1398, %v1653
    %v1661 = vadd.f32 %v1399, %v1613
    %v1662 = vadd.f32 %v1400, %v1627
    %v1663 = vadd.f32 %v1401, %v1641
    %v1664 = vadd.f32 %v1402, %v1655
    %v1665 = vxor.u32 %v1657, 2147483648
    %v1666 = vxor.u32 %v1661, 2147483648
    %v1667 = vmul.f32 %v1665, 1.442695
    %v1668 = vpow.pop %v1667
    %v1669 = vmul.f32 %v1666, 1.442695
    %v1670 = vpow.pop %v1669
    %v1671 = vadd.f32 %v1668, 1.0
    %v1672 = vadd.f32 %v1670, 1.0
    %v1673 = vrcp.pop %v1671
    %v1674 = vmul.f32 %v1671, %v1673
    %v1675 = vsub.f32 1.0, %v1674
    %v1676 = vmul.f32 %v1673, %v1675
    %v1677 = vadd.f32 %v1673, %v1676
    %vm1678 = vweird.f32 %v1671
    %vm1679 = vweird.f32 %v1673
    %vm1680 = vmor %vm1678, %vm1679
    %v1681 = vsel %vm1680, %v1673, %v1677
    %v1682 = vand.u32 2147483647, %v1671
    %vm1683 = vcmp.eq.f32.partialorder %v1682, 8.507059e+37
    %v1684 = vand.u32 %v1671, 2147483648
    %v1685 = vor.u32 1.1754944e-38, %v1684
    %v1686 = vsel %vm1683, %v1685, %v1681
    %v1687 = vmul.f32 1.0, %v1686
    %v1688 = vrcp.pop %v1672
    %v1689 = vmul.f32 %v1672, %v1688
    %v1690 = vsub.f32 1.0, %v1689
    %v1691 = vmul.f32 %v1688, %v1690
    %v1692 = vadd.f32 %v1688, %v1691
    %vm1693 = vweird.f32 %v1672
    %vm1694 = vweird.f32 %v1688
    %vm1695 = vmor %vm1693, %vm1694
    %v1696 = vsel %vm1695, %v1688, %v1692
    %v1697 = vand.u32 2147483647, %v1672
    %vm1698 = vcmp.eq.f32.partialorder %v1697, 8.507059e+37
    %v1699 = vand.u32 %v1672, 2147483648
    %v1700 = vor.u32 1.1754944e-38, %v1699
    %v1701 = vsel %vm1698, %v1700, %v1696
    %v1702 = vmul.f32 1.0, %v1701
    %v1703 = vxor.u32 %v1658, 2147483648
    %v1704 = vxor.u32 %v1662, 2147483648
    %v1705 = vmul.f32 %v1703, 1.442695
    %v1706 = vpow.pop %v1705
    %v1707 = vmul.f32 %v1704, 1.442695
    %v1708 = vpow.pop %v1707
    %v1709 = vadd.f32 %v1706, 1.0
    %v1710 = vadd.f32 %v1708, 1.0
    %v1711 = vrcp.pop %v1709
    %v1712 = vmul.f32 %v1709, %v1711
    %v1713 = vsub.f32 1.0, %v1712
    %v1714 = vmul.f32 %v1711, %v1713
    %v1715 = vadd.f32 %v1711, %v1714
    %vm1716 = vweird.f32 %v1709
    %vm1717 = vweird.f32 %v1711
    %vm1718 = vmor %vm1716, %vm1717
    %v1719 = vsel %vm1718, %v1711, %v1715
    %v1720 = vand.u32 2147483647, %v1709
    %vm1721 = vcmp.eq.f32.partialorder %v1720, 8.507059e+37
    %v1722 = vand.u32 %v1709, 2147483648
    %v1723 = vor.u32 1.1754944e-38, %v1722
    %v1724 = vsel %vm1721, %v1723, %v1719
    %v1725 = vmul.f32 1.0, %v1724
    %v1726 = vrcp.pop %v1710
    %v1727 = vmul.f32 %v1710, %v1726
    %v1728 = vsub.f32 1.0, %v1727
    %v1729 = vmul.f32 %v1726, %v1728
    %v1730 = vadd.f32 %v1726, %v1729
    %vm1731 = vweird.f32 %v1710
    %vm1732 = vweird.f32 %v1726
    %vm1733 = vmor %vm1731, %vm1732
    %v1734 = vsel %vm1733, %v1726, %v1730
    %v1735 = vand.u32 2147483647, %v1710
    %vm1736 = vcmp.eq.f32.partialorder %v1735, 8.507059e+37
    %v1737 = vand.u32 %v1710, 2147483648
    %v1738 = vor.u32 1.1754944e-38, %v1737
    %v1739 = vsel %vm1736, %v1738, %v1734
    %v1740 = vmul.f32 1.0, %v1739
    %v1741 = vtanh.pop %v1659
    %v1742 = vtanh.pop %v1663
    %v1743 = vxor.u32 %v1660, 2147483648
    %v1744 = vxor.u32 %v1664, 2147483648
    %v1745 = vmul.f32 %v1743, 1.442695
    %v1746 = vpow.pop %v1745
    %v1747 = vmul.f32 %v1744, 1.442695
    %v1748 = vpow.pop %v1747
    %v1749 = vadd.f32 %v1746, 1.0
    %v1750 = vadd.f32 %v1748, 1.0
    %v1751 = vrcp.pop %v1749
    %v1752 = vmul.f32 %v1749, %v1751
    %v1753 = vsub.f32 1.0, %v1752
    %v1754 = vmul.f32 %v1751, %v1753
    %v1755 = vadd.f32 %v1751, %v1754
    %vm1756 = vweird.f32 %v1749
    %vm1757 = vweird.f32 %v1751
    %vm1758 = vmor %vm1756, %vm1757
    %v1759 = vsel %vm1758, %v1751, %v1755
    %v1760 = vand.u32 2147483647, %v1749
    %vm1761 = vcmp.eq.f32.partialorder %v1760, 8.507059e+37
    %v1762 = vand.u32 %v1749, 2147483648
    %v1763 = vor.u32 1.1754944e-38, %v1762
    %v1764 = vsel %vm1761, %v1763, %v1759
    %v1765 = vmul.f32 1.0, %v1764
    %v1766 = vrcp.pop %v1750
    %v1767 = vmul.f32 %v1750, %v1766
    %v1768 = vsub.f32 1.0, %v1767
    %v1769 = vmul.f32 %v1766, %v1768
    %v1770 = vadd.f32 %v1766, %v1769
    %vm1771 = vweird.f32 %v1750
    %vm1772 = vweird.f32 %v1766
    %vm1773 = vmor %vm1771, %vm1772
    %v1774 = vsel %vm1773, %v1766, %v1770
    %v1775 = vand.u32 2147483647, %v1750
    %vm1776 = vcmp.eq.f32.partialorder %v1775, 8.507059e+37
    %v1777 = vand.u32 %v1750, 2147483648
    %v1778 = vor.u32 1.1754944e-38, %v1777
    %v1779 = vsel %vm1776, %v1778, %v1774
    %v1780 = vmul.f32 1.0, %v1779
    %v1781 = vmul.f32 %v1725, %v1376
    %v1782 = vmul.f32 %v1740, %v1377
    %v1783 = vmul.f32 %v1687, %v1741
    %v1784 = vmul.f32 %v1702, %v1742
    %v1785 = vadd.f32 %v1781, %v1783
    %v1786 = vadd.f32 %v1782, %v1784
    %v1787 = vtanh.pop %v1785
    %v1788 = vtanh.pop %v1786
    %v1789 = vmul.f32 %v1765, %v1787
    %v1790 = vmul.f32 %v1780, %v1788
    %v1791 = vpack.c.bf16 %v1789, %v1789
    %v1792 = vpack.c.bf16 %v1790, %v1790
    %s1793 = smul.addr %s1390, 4
    %s1794 = scalar_lea.vmem [#allocation2], %s1793
    %1795 = vst [vmem:[%s1794] sm:$0xf] %v1791
    %1796 = vst [vmem:[%s1794 + $0x4] sm:$0xf] %v1792
    %s1797 = sadd.s32 %s978, 3
    %s1798 = smul.u32 %s1797, 16
    %s1799 = sshra.s32 %s1798, 3
    %s1800 = sand.u32 %s1798, 7
    %s1801 = smul.u32 %s1799, 4
    %s1802 = smul.addr %s1801, 8
    %s1803 = scalar_lea.vmem [#allocation3], %s1802
    %v1804 = vld [vmem:[%s1803] sm:$0xff]
    %v1805 = vld [vmem:[%s1803 + $0x8] sm:$0xff]
    %v1806 = vld [vmem:[%s1803 + $0x10] sm:$0xff]
    %v1807 = vld [vmem:[%s1803 + $0x18] sm:$0xff]
    %v1808 = vld [vmem:[%s1803 + $0x20] sm:$0xff]
    %v1809 = vld [vmem:[%s1803 + $0x28] sm:$0xff]
    %v1810 = vld [vmem:[%s1803 + $0x30] sm:$0xff]
    %v1811 = vld [vmem:[%s1803 + $0x38] sm:$0xff]
    %v1812 = vld [vmem:[%s4] sm:$0xff]
    %v1813 = vld [vmem:[%s4 + $0x8] sm:$0xff]
    %v1814 = vld [vmem:[%s4 + $0x10] sm:$0xff]
    %v1815 = vld [vmem:[%s4 + $0x18] sm:$0xff]
    %v1816 = vld [vmem:[%s4 + $0x20] sm:$0xff]
    %v1817 = vld [vmem:[%s4 + $0x28] sm:$0xff]
    %v1818 = vld [vmem:[%s4 + $0x30] sm:$0xff]
    %v1819 = vld [vmem:[%s4 + $0x38] sm:$0xff]
    %v1820 = vld [vmem:[%s4 + $0x40] sm:$0xff]
    %v1821 = vld [vmem:[%s4 + $0x48] sm:$0xff]
    %v1822 = vld [vmem:[%s4 + $0x50] sm:$0xff]
    %v1823 = vld [vmem:[%s4 + $0x58] sm:$0xff]
    %v1824 = vld [vmem:[%s4 + $0x60] sm:$0xff]
    %v1825 = vld [vmem:[%s4 + $0x68] sm:$0xff]
    %v1826 = vld [vmem:[%s4 + $0x70] sm:$0xff]
    %v1827 = vld [vmem:[%s4 + $0x78] sm:$0xff]
    %v1828 = vld [vmem:[%s4 + $0x80] sm:$0xff]
    %v1829 = vld [vmem:[%s4 + $0x88] sm:$0xff]
    %v1830 = vld [vmem:[%s4 + $0x90] sm:$0xff]
    %v1831 = vld [vmem:[%s4 + $0x98] sm:$0xff]
    %v1832 = vld [vmem:[%s4 + $0xa0] sm:$0xff]
    %v1833 = vld [vmem:[%s4 + $0xa8] sm:$0xff]
    %v1834 = vld [vmem:[%s4 + $0xb0] sm:$0xff]
    %v1835 = vld [vmem:[%s4 + $0xb8] sm:$0xff]
    %v1836 = vld [vmem:[%s4 + $0xc0] sm:$0xff]
    %v1837 = vld [vmem:[%s4 + $0xc8] sm:$0xff]
    %v1838 = vld [vmem:[%s4 + $0xd0] sm:$0xff]
    %v1839 = vld [vmem:[%s4 + $0xd8] sm:$0xff]
    %v1840 = vld [vmem:[%s4 + $0xe0] sm:$0xff]
    %v1841 = vld [vmem:[%s4 + $0xe8] sm:$0xff]
    %v1842 = vld [vmem:[%s4 + $0xf0] sm:$0xff]
    %v1843 = vld [vmem:[%s4 + $0xf8] sm:$0xff]
    %v1846 = vunpack.c.l.b16 %v1791
    %v1847 = vunpack.c.l.b16 %v1792
    %v1848 = vpack.c.b16 %v1847, %v1846
    %v1882 = vunpack.c.l.b16 %v1812
    %v1883 = vunpack.c.h.b16 %v1812
    %v1884 = vunpack.c.l.b16 %v1813
    %v1885 = vunpack.c.h.b16 %v1813
    %v1886 = vunpack.c.l.b16 %v1814
    %v1887 = vunpack.c.h.b16 %v1814
    %v1888 = vunpack.c.l.b16 %v1815
    %v1889 = vunpack.c.h.b16 %v1815
    %v1890 = vunpack.c.l.b16 %v1816
    %v1891 = vunpack.c.h.b16 %v1816
    %v1892 = vunpack.c.l.b16 %v1817
    %v1893 = vunpack.c.h.b16 %v1817
    %v1894 = vunpack.c.l.b16 %v1818
    %v1895 = vunpack.c.h.b16 %v1818
    %v1896 = vunpack.c.l.b16 %v1819
    %v1897 = vunpack.c.h.b16 %v1819
    %v1898 = vunpack.c.l.b16 %v1820
    %v1899 = vunpack.c.h.b16 %v1820
    %v1900 = vunpack.c.l.b16 %v1821
    %v1901 = vunpack.c.h.b16 %v1821
    %v1902 = vunpack.c.l.b16 %v1822
    %v1903 = vunpack.c.h.b16 %v1822
    %v1904 = vunpack.c.l.b16 %v1823
    %v1905 = vunpack.c.h.b16 %v1823
    %v1906 = vunpack.c.l.b16 %v1824
    %v1907 = vunpack.c.h.b16 %v1824
    %v1908 = vunpack.c.l.b16 %v1825
    %v1909 = vunpack.c.h.b16 %v1825
    %v1910 = vunpack.c.l.b16 %v1826
    %v1911 = vunpack.c.h.b16 %v1826
    %v1912 = vunpack.c.l.b16 %v1827
    %v1913 = vunpack.c.h.b16 %v1827
    %v1914 = vunpack.c.l.b16 %v1828
    %v1915 = vunpack.c.h.b16 %v1828
    %v1916 = vunpack.c.l.b16 %v1829
    %v1917 = vunpack.c.h.b16 %v1829
    %v1918 = vunpack.c.l.b16 %v1830
    %v1919 = vunpack.c.h.b16 %v1830
    %v1920 = vunpack.c.l.b16 %v1831
    %v1921 = vunpack.c.h.b16 %v1831
    %v1922 = vunpack.c.l.b16 %v1832
    %v1923 = vunpack.c.h.b16 %v1832
    %v1924 = vunpack.c.l.b16 %v1833
    %v1925 = vunpack.c.h.b16 %v1833
    %v1926 = vunpack.c.l.b16 %v1834
    %v1927 = vunpack.c.h.b16 %v1834
    %v1928 = vunpack.c.l.b16 %v1835
    %v1929 = vunpack.c.h.b16 %v1835
    %v1930 = vunpack.c.l.b16 %v1836
    %v1931 = vunpack.c.h.b16 %v1836
    %v1932 = vunpack.c.l.b16 %v1837
    %v1933 = vunpack.c.h.b16 %v1837
    %v1934 = vunpack.c.l.b16 %v1838
    %v1935 = vunpack.c.h.b16 %v1838
    %v1936 = vunpack.c.l.b16 %v1839
    %v1937 = vunpack.c.h.b16 %v1839
    %v1938 = vunpack.c.l.b16 %v1840
    %v1939 = vunpack.c.h.b16 %v1840
    %v1940 = vunpack.c.l.b16 %v1841
    %v1941 = vunpack.c.h.b16 %v1841
    %v1942 = vunpack.c.l.b16 %v1842
    %v1943 = vunpack.c.h.b16 %v1842
    %v1944 = vunpack.c.l.b16 %v1843
    %v1945 = vunpack.c.h.b16 %v1843
    %v1946 = vpack.c.b16 %v1886, %v1882
    %v1947 = vpack.c.b16 %v1887, %v1883
    %v1948 = vpack.c.b16 %v1888, %v1884
    %v1949 = vpack.c.b16 %v1889, %v1885
    %v1950 = vpack.c.b16 %v1894, %v1890
    %v1951 = vpack.c.b16 %v1895, %v1891
    %v1952 = vpack.c.b16 %v1896, %v1892
    %v1953 = vpack.c.b16 %v1897, %v1893
    %v1954 = vpack.c.b16 %v1902, %v1898
    %v1955 = vpack.c.b16 %v1903, %v1899
    %v1956 = vpack.c.b16 %v1904, %v1900
    %v1957 = vpack.c.b16 %v1905, %v1901
    %v1958 = vpack.c.b16 %v1910, %v1906
    %v1959 = vpack.c.b16 %v1911, %v1907
    %v1960 = vpack.c.b16 %v1912, %v1908
    %v1961 = vpack.c.b16 %v1913, %v1909
    %v1962 = vpack.c.b16 %v1918, %v1914
    %v1963 = vpack.c.b16 %v1919, %v1915
    %v1964 = vpack.c.b16 %v1920, %v1916
    %v1965 = vpack.c.b16 %v1921, %v1917
    %v1966 = vpack.c.b16 %v1926, %v1922
    %v1967 = vpack.c.b16 %v1927, %v1923
    %v1968 = vpack.c.b16 %v1928, %v1924
    %v1969 = vpack.c.b16 %v1929, %v1925
    %v1970 = vpack.c.b16 %v1934, %v1930
    %v1971 = vpack.c.b16 %v1935, %v1931
    %v1972 = vpack.c.b16 %v1936, %v1932
    %v1973 = vpack.c.b16 %v1937, %v1933
    %v1974 = vpack.c.b16 %v1942, %v1938
    %v1975 = vpack.c.b16 %v1943, %v1939
    %v1976 = vpack.c.b16 %v1944, %v1940
    %v1977 = vpack.c.b16 %v1945, %v1941
    %2010 = vmatpush.bf16.msra.mxu0 %v1974
    %2011 = vmatpush.bf16.msra.mxu0 %v1970
    %2012 = vmatpush.bf16.msra.mxu0 %v1966
    %2013 = vmatpush.bf16.msra.mxu0 %v1962
    %2014 = vmatpush.bf16.msra.mxu0 %v1958
    %2015 = vmatpush.bf16.msra.mxu0 %v1954
    %2016 = vmatpush.bf16.msra.mxu0 %v1950
    %2017 = vmatpush.bf16.msra.mxu0 %v1946
    %2018 = vmatmul.bf16.gmra.mxu0 %v1848
    %v2019 = vpop.f32.mrf.mxu0
    %v2020 = vadd.f32 0.0, %v2019
    %v2021 = vpop.f32.mrf.mxu0
    %v2022 = vadd.f32 0.0, %v2021
    %2023 = vdwg.mxu0
    %2024 = vmatpush.bf16.msra.mxu0 %v1975
    %2025 = vmatpush.bf16.msra.mxu0 %v1971
    %2026 = vmatpush.bf16.msra.mxu0 %v1967
    %2027 = vmatpush.bf16.msra.mxu0 %v1963
    %2028 = vmatpush.bf16.msra.mxu0 %v1959
    %2029 = vmatpush.bf16.msra.mxu0 %v1955
    %2030 = vmatpush.bf16.msra.mxu0 %v1951
    %2031 = vmatpush.bf16.msra.mxu0 %v1947
    %2032 = vmatmul.bf16.gmra.mxu0 %v1848
    %v2033 = vpop.f32.mrf.mxu0
    %v2034 = vadd.f32 0.0, %v2033
    %v2035 = vpop.f32.mrf.mxu0
    %v2036 = vadd.f32 0.0, %v2035
    %2037 = vdwg.mxu0
    %2038 = vmatpush.bf16.msra.mxu0 %v1976
    %2039 = vmatpush.bf16.msra.mxu0 %v1972
    %2040 = vmatpush.bf16.msra.mxu0 %v1968
    %2041 = vmatpush.bf16.msra.mxu0 %v1964
    %2042 = vmatpush.bf16.msra.mxu0 %v1960
    %2043 = vmatpush.bf16.msra.mxu0 %v1956
    %2044 = vmatpush.bf16.msra.mxu0 %v1952
    %2045 = vmatpush.bf16.msra.mxu0 %v1948
    %2046 = vmatmul.bf16.gmra.mxu0 %v1848
    %v2047 = vpop.f32.mrf.mxu0
    %v2048 = vadd.f32 0.0, %v2047
    %v2049 = vpop.f32.mrf.mxu0
    %v2050 = vadd.f32 0.0, %v2049
    %2051 = vdwg.mxu0
    %2052 = vmatpush.bf16.msra.mxu0 %v1977
    %2053 = vmatpush.bf16.msra.mxu0 %v1973
    %2054 = vmatpush.bf16.msra.mxu0 %v1969
    %2055 = vmatpush.bf16.msra.mxu0 %v1965
    %2056 = vmatpush.bf16.msra.mxu0 %v1961
    %2057 = vmatpush.bf16.msra.mxu0 %v1957
    %2058 = vmatpush.bf16.msra.mxu0 %v1953
    %2059 = vmatpush.bf16.msra.mxu0 %v1949
    %2060 = vmatmul.bf16.gmra.mxu0 %v1848
    %v2061 = vpop.f32.mrf.mxu0
    %v2062 = vadd.f32 0.0, %v2061
    %v2063 = vpop.f32.mrf.mxu0
    %v2064 = vadd.f32 0.0, %v2063
    %2065 = vdwg.mxu0
    %v2066 = vadd.f32 %v1804, %v2020
    %v2067 = vadd.f32 %v1805, %v2034
    %v2068 = vadd.f32 %v1806, %v2048
    %v2069 = vadd.f32 %v1807, %v2062
    %v2070 = vadd.f32 %v1808, %v2022
    %v2071 = vadd.f32 %v1809, %v2036
    %v2072 = vadd.f32 %v1810, %v2050
    %v2073 = vadd.f32 %v1811, %v2064
    %v2074 = vxor.u32 %v2066, 2147483648
    %v2075 = vxor.u32 %v2070, 2147483648
    %v2076 = vmul.f32 %v2074, 1.442695
    %v2077 = vpow.pop %v2076
    %v2078 = vmul.f32 %v2075, 1.442695
    %v2079 = vpow.pop %v2078
    %v2080 = vadd.f32 %v2077, 1.0
    %v2081 = vadd.f32 %v2079, 1.0
    %v2082 = vrcp.pop %v2080
    %v2083 = vmul.f32 %v2080, %v2082
    %v2084 = vsub.f32 1.0, %v2083
    %v2085 = vmul.f32 %v2082, %v2084
    %v2086 = vadd.f32 %v2082, %v2085
    %vm2087 = vweird.f32 %v2080
    %vm2088 = vweird.f32 %v2082
    %vm2089 = vmor %vm2087, %vm2088
    %v2090 = vsel %vm2089, %v2082, %v2086
    %v2091 = vand.u32 2147483647, %v2080
    %vm2092 = vcmp.eq.f32.partialorder %v2091, 8.507059e+37
    %v2093 = vand.u32 %v2080, 2147483648
    %v2094 = vor.u32 1.1754944e-38, %v2093
    %v2095 = vsel %vm2092, %v2094, %v2090
    %v2096 = vmul.f32 1.0, %v2095
    %v2097 = vrcp.pop %v2081
    %v2098 = vmul.f32 %v2081, %v2097
    %v2099 = vsub.f32 1.0, %v2098
    %v2100 = vmul.f32 %v2097, %v2099
    %v2101 = vadd.f32 %v2097, %v2100
    %vm2102 = vweird.f32 %v2081
    %vm2103 = vweird.f32 %v2097
    %vm2104 = vmor %vm2102, %vm2103
    %v2105 = vsel %vm2104, %v2097, %v2101
    %v2106 = vand.u32 2147483647, %v2081
    %vm2107 = vcmp.eq.f32.partialorder %v2106, 8.507059e+37
    %v2108 = vand.u32 %v2081, 2147483648
    %v2109 = vor.u32 1.1754944e-38, %v2108
    %v2110 = vsel %vm2107, %v2109, %v2105
    %v2111 = vmul.f32 1.0, %v2110
    %v2112 = vxor.u32 %v2067, 2147483648
    %v2113 = vxor.u32 %v2071, 2147483648
    %v2114 = vmul.f32 %v2112, 1.442695
    %v2115 = vpow.pop %v2114
    %v2116 = vmul.f32 %v2113, 1.442695
    %v2117 = vpow.pop %v2116
    %v2118 = vadd.f32 %v2115, 1.0
    %v2119 = vadd.f32 %v2117, 1.0
    %v2120 = vrcp.pop %v2118
    %v2121 = vmul.f32 %v2118, %v2120
    %v2122 = vsub.f32 1.0, %v2121
    %v2123 = vmul.f32 %v2120, %v2122
    %v2124 = vadd.f32 %v2120, %v2123
    %vm2125 = vweird.f32 %v2118
    %vm2126 = vweird.f32 %v2120
    %vm2127 = vmor %vm2125, %vm2126
    %v2128 = vsel %vm2127, %v2120, %v2124
    %v2129 = vand.u32 2147483647, %v2118
    %vm2130 = vcmp.eq.f32.partialorder %v2129, 8.507059e+37
    %v2131 = vand.u32 %v2118, 2147483648
    %v2132 = vor.u32 1.1754944e-38, %v2131
    %v2133 = vsel %vm2130, %v2132, %v2128
    %v2134 = vmul.f32 1.0, %v2133
    %v2135 = vrcp.pop %v2119
    %v2136 = vmul.f32 %v2119, %v2135
    %v2137 = vsub.f32 1.0, %v2136
    %v2138 = vmul.f32 %v2135, %v2137
    %v2139 = vadd.f32 %v2135, %v2138
    %vm2140 = vweird.f32 %v2119
    %vm2141 = vweird.f32 %v2135
    %vm2142 = vmor %vm2140, %vm2141
    %v2143 = vsel %vm2142, %v2135, %v2139
    %v2144 = vand.u32 2147483647, %v2119
    %vm2145 = vcmp.eq.f32.partialorder %v2144, 8.507059e+37
    %v2146 = vand.u32 %v2119, 2147483648
    %v2147 = vor.u32 1.1754944e-38, %v2146
    %v2148 = vsel %vm2145, %v2147, %v2143
    %v2149 = vmul.f32 1.0, %v2148
    %v2150 = vtanh.pop %v2068
    %v2151 = vtanh.pop %v2072
    %v2152 = vxor.u32 %v2069, 2147483648
    %v2153 = vxor.u32 %v2073, 2147483648
    %v2154 = vmul.f32 %v2152, 1.442695
    %v2155 = vpow.pop %v2154
    %v2156 = vmul.f32 %v2153, 1.442695
    %v2157 = vpow.pop %v2156
    %v2158 = vadd.f32 %v2155, 1.0
    %v2159 = vadd.f32 %v2157, 1.0
    %v2160 = vrcp.pop %v2158
    %v2161 = vmul.f32 %v2158, %v2160
    %v2162 = vsub.f32 1.0, %v2161
    %v2163 = vmul.f32 %v2160, %v2162
    %v2164 = vadd.f32 %v2160, %v2163
    %vm2165 = vweird.f32 %v2158
    %vm2166 = vweird.f32 %v2160
    %vm2167 = vmor %vm2165, %vm2166
    %v2168 = vsel %vm2167, %v2160, %v2164
    %v2169 = vand.u32 2147483647, %v2158
    %vm2170 = vcmp.eq.f32.partialorder %v2169, 8.507059e+37
    %v2171 = vand.u32 %v2158, 2147483648
    %v2172 = vor.u32 1.1754944e-38, %v2171
    %v2173 = vsel %vm2170, %v2172, %v2168
    %v2174 = vmul.f32 1.0, %v2173
    %v2175 = vrcp.pop %v2159
    %v2176 = vmul.f32 %v2159, %v2175
    %v2177 = vsub.f32 1.0, %v2176
    %v2178 = vmul.f32 %v2175, %v2177
    %v2179 = vadd.f32 %v2175, %v2178
    %vm2180 = vweird.f32 %v2159
    %vm2181 = vweird.f32 %v2175
    %vm2182 = vmor %vm2180, %vm2181
    %v2183 = vsel %vm2182, %v2175, %v2179
    %v2184 = vand.u32 2147483647, %v2159
    %vm2185 = vcmp.eq.f32.partialorder %v2184, 8.507059e+37
    %v2186 = vand.u32 %v2159, 2147483648
    %v2187 = vor.u32 1.1754944e-38, %v2186
    %v2188 = vsel %vm2185, %v2187, %v2183
    %v2189 = vmul.f32 1.0, %v2188
    %v2190 = vmul.f32 %v2134, %v1785
    %v2191 = vmul.f32 %v2149, %v1786
    %v2192 = vmul.f32 %v2096, %v2150
    %v2193 = vmul.f32 %v2111, %v2151
    %v2194 = vadd.f32 %v2190, %v2192
    %v2195 = vadd.f32 %v2191, %v2193
    %v2196 = vtanh.pop %v2194
    %v2197 = vtanh.pop %v2195
    %v2198 = vmul.f32 %v2174, %v2196
    %v2199 = vmul.f32 %v2189, %v2197
    %v2200 = vpack.c.bf16 %v2198, %v2198
    %v2201 = vpack.c.bf16 %v2199, %v2199
    %s2202 = smul.addr %s1799, 4
    %s2203 = scalar_lea.vmem [#allocation2], %s2202
    %2204 = vst [vmem:[%s2203] sm:$0xf] %v2200
    %2205 = vst [vmem:[%s2203 + $0x4] sm:$0xf] %v2201
  $region50: #{rnn_classifier_forward.1} parent=0 // loop_footer
    %s570 = sadd.s32 1, %s566
  $region51: #{rnn_classifier_forward.1} parent=0 // loop_footer_branch
    %565 = sbr.rel target = $region47
  $region52: #{rnn_classifier_forward.1} parent=0 // loop_exit
    _
  %v2206 = vld [vmem:[#allocation2] sm:$0xf]
  %v2207 = vld [vmem:[#allocation2 + $0x4] sm:$0xf]
  %v2208 = vld [vmem:[#allocation2 + $0x8] sm:$0xf]
  %v2209 = vld [vmem:[#allocation2 + $0xc] sm:$0xf]
  %v2210 = vld [vmem:[#allocation2 + $0x10] sm:$0xf]
  %v2211 = vld [vmem:[#allocation2 + $0x14] sm:$0xf]
  %v2212 = vld [vmem:[#allocation2 + $0x18] sm:$0xf]
  %v2213 = vld [vmem:[#allocation2 + $0x1c] sm:$0xf]
  %v2214 = vld [vmem:[#allocation2 + $0x20] sm:$0xf]
  %v2215 = vld [vmem:[#allocation2 + $0x24] sm:$0xf]
  %v2216 = vld [vmem:[#allocation2 + $0x28] sm:$0xf]
  %v2217 = vld [vmem:[#allocation2 + $0x2c] sm:$0xf]
  %v2218 = vld [vmem:[#allocation2 + $0x30] sm:$0xf]
  %v2219 = vld [vmem:[#allocation2 + $0x34] sm:$0xf]
  %v2220 = vld [vmem:[#allocation2 + $0x38] sm:$0xf]
  %v2221 = vld [vmem:[#allocation2 + $0x3c] sm:$0xf]
  %v2222 = vld [vmem:[%s6] sm:$0xff]
  %v2223 = vld [vmem:[%s6 + $0x8] sm:$0xff]
  %v2224 = vld [vmem:[%s6 + $0x10] sm:$0xff]
  %v2225 = vld [vmem:[%s6 + $0x18] sm:$0xff]
  %v2226 = vld [vmem:[%s6 + $0x20] sm:$0xff]
  %v2227 = vld [vmem:[%s6 + $0x28] sm:$0xff]
  %v2228 = vld [vmem:[%s6 + $0x30] sm:$0xff]
  %v2229 = vld [vmem:[%s6 + $0x38] sm:$0xff]
  %v2230 = vld [vmem:[%s6 + $0x40] sm:$0xff]
  %v2231 = vld [vmem:[%s6 + $0x48] sm:$0xff]
  %v2232 = vld [vmem:[%s6 + $0x50] sm:$0xff]
  %v2233 = vld [vmem:[%s6 + $0x58] sm:$0xff]
  %v2234 = vld [vmem:[%s6 + $0x60] sm:$0xff]
  %v2235 = vld [vmem:[%s6 + $0x68] sm:$0xff]
  %v2236 = vld [vmem:[%s6 + $0x70] sm:$0xff]
  %v2237 = vld [vmem:[%s6 + $0x78] sm:$0xff]
  %v2238 = vld [vmem:[%s6 + $0x80] sm:$0xff]
  %v2239 = vld [vmem:[%s6 + $0x88] sm:$0xff]
  %v2240 = vld [vmem:[%s6 + $0x90] sm:$0xff]
  %v2241 = vld [vmem:[%s6 + $0x98] sm:$0xff]
  %v2242 = vld [vmem:[%s6 + $0xa0] sm:$0xff]
  %v2243 = vld [vmem:[%s6 + $0xa8] sm:$0xff]
  %v2244 = vld [vmem:[%s6 + $0xb0] sm:$0xff]
  %v2245 = vld [vmem:[%s6 + $0xb8] sm:$0xff]
  %v2246 = vld [vmem:[%s6 + $0xc0] sm:$0xff]
  %v2247 = vld [vmem:[%s6 + $0xc8] sm:$0xff]
  %v2248 = vld [vmem:[%s6 + $0xd0] sm:$0xff]
  %v2249 = vld [vmem:[%s6 + $0xd8] sm:$0xff]
  %v2250 = vld [vmem:[%s6 + $0xe0] sm:$0xff]
  %v2251 = vld [vmem:[%s6 + $0xe8] sm:$0xff]
  %v2252 = vld [vmem:[%s6 + $0xf0] sm:$0xff]
  %v2253 = vld [vmem:[%s6 + $0xf8] sm:$0xff]
  %v2254 = vld [vmem:[%s8] sm:$0xf]
  %v2256 = vperm.slane %v2254, 0
  %v2257 = vperm.slane %v2254, 1
  %v2258 = vperm.slane %v2254, 2
  %v2259 = vperm.slane %v2254, 3
  %v2280 = vunpack.c.l.b16 %v2206
  %v2281 = vunpack.c.l.b16 %v2207
  %v2282 = vunpack.c.l.b16 %v2208
  %v2283 = vunpack.c.l.b16 %v2209
  %v2284 = vunpack.c.l.b16 %v2210
  %v2285 = vunpack.c.l.b16 %v2211
  %v2286 = vunpack.c.l.b16 %v2212
  %v2287 = vunpack.c.l.b16 %v2213
  %v2288 = vunpack.c.l.b16 %v2214
  %v2289 = vunpack.c.l.b16 %v2215
  %v2290 = vunpack.c.l.b16 %v2216
  %v2291 = vunpack.c.l.b16 %v2217
  %v2292 = vunpack.c.l.b16 %v2218
  %v2293 = vunpack.c.l.b16 %v2219
  %v2294 = vunpack.c.l.b16 %v2220
  %v2295 = vunpack.c.l.b16 %v2221
  %v2296 = vpack.c.b16 %v2281, %v2280
  %v2297 = vpack.c.b16 %v2283, %v2282
  %v2298 = vpack.c.b16 %v2285, %v2284
  %v2299 = vpack.c.b16 %v2287, %v2286
  %v2300 = vpack.c.b16 %v2289, %v2288
  %v2301 = vpack.c.b16 %v2291, %v2290
  %v2302 = vpack.c.b16 %v2293, %v2292
  %v2303 = vpack.c.b16 %v2295, %v2294
  %v2344 = vunpack.c.l.b16 %v2222
  %v2345 = vunpack.c.h.b16 %v2222
  %v2346 = vunpack.c.l.b16 %v2223
  %v2347 = vunpack.c.h.b16 %v2223
  %v2348 = vunpack.c.l.b16 %v2224
  %v2349 = vunpack.c.h.b16 %v2224
  %v2350 = vunpack.c.l.b16 %v2225
  %v2351 = vunpack.c.h.b16 %v2225
  %v2352 = vunpack.c.l.b16 %v2226
  %v2353 = vunpack.c.h.b16 %v2226
  %v2354 = vunpack.c.l.b16 %v2227
  %v2355 = vunpack.c.h.b16 %v2227
  %v2356 = vunpack.c.l.b16 %v2228
  %v2357 = vunpack.c.h.b16 %v2228
  %v2358 = vunpack.c.l.b16 %v2229
  %v2359 = vunpack.c.h.b16 %v2229
  %v2360 = vunpack.c.l.b16 %v2230
  %v2361 = vunpack.c.h.b16 %v2230
  %v2362 = vunpack.c.l.b16 %v2231
  %v2363 = vunpack.c.h.b16 %v2231
  %v2364 = vunpack.c.l.b16 %v2232
  %v2365 = vunpack.c.h.b16 %v2232
  %v2366 = vunpack.c.l.b16 %v2233
  %v2367 = vunpack.c.h.b16 %v2233
  %v2368 = vunpack.c.l.b16 %v2234
  %v2369 = vunpack.c.h.b16 %v2234
  %v2370 = vunpack.c.l.b16 %v2235
  %v2371 = vunpack.c.h.b16 %v2235
  %v2372 = vunpack.c.l.b16 %v2236
  %v2373 = vunpack.c.h.b16 %v2236
  %v2374 = vunpack.c.l.b16 %v2237
  %v2375 = vunpack.c.h.b16 %v2237
  %v2376 = vunpack.c.l.b16 %v2238
  %v2377 = vunpack.c.h.b16 %v2238
  %v2378 = vunpack.c.l.b16 %v2239
  %v2379 = vunpack.c.h.b16 %v2239
  %v2380 = vunpack.c.l.b16 %v2240
  %v2381 = vunpack.c.h.b16 %v2240
  %v2382 = vunpack.c.l.b16 %v2241
  %v2383 = vunpack.c.h.b16 %v2241
  %v2384 = vunpack.c.l.b16 %v2242
  %v2385 = vunpack.c.h.b16 %v2242
  %v2386 = vunpack.c.l.b16 %v2243
  %v2387 = vunpack.c.h.b16 %v2243
  %v2388 = vunpack.c.l.b16 %v2244
  %v2389 = vunpack.c.h.b16 %v2244
  %v2390 = vunpack.c.l.b16 %v2245
  %v2391 = vunpack.c.h.b16 %v2245
  %v2392 = vunpack.c.l.b16 %v2246
  %v2393 = vunpack.c.h.b16 %v2246
  %v2394 = vunpack.c.l.b16 %v2247
  %v2395 = vunpack.c.h.b16 %v2247
  %v2396 = vunpack.c.l.b16 %v2248
  %v2397 = vunpack.c.h.b16 %v2248
  %v2398 = vunpack.c.l.b16 %v2249
  %v2399 = vunpack.c.h.b16 %v2249
  %v2400 = vunpack.c.l.b16 %v2250
  %v2401 = vunpack.c.h.b16 %v2250
  %v2402 = vunpack.c.l.b16 %v2251
  %v2403 = vunpack.c.h.b16 %v2251
  %v2404 = vunpack.c.l.b16 %v2252
  %v2405 = vunpack.c.h.b16 %v2252
  %v2406 = vunpack.c.l.b16 %v2253
  %v2407 = vunpack.c.h.b16 %v2253
  %v2408 = vpack.c.b16 %v2348, %v2344
  %v2409 = vpack.c.b16 %v2349, %v2345
  %v2410 = vpack.c.b16 %v2350, %v2346
  %v2411 = vpack.c.b16 %v2351, %v2347
  %v2412 = vpack.c.b16 %v2356, %v2352
  %v2413 = vpack.c.b16 %v2357, %v2353
  %v2414 = vpack.c.b16 %v2358, %v2354
  %v2415 = vpack.c.b16 %v2359, %v2355
  %v2416 = vpack.c.b16 %v2364, %v2360
  %v2417 = vpack.c.b16 %v2365, %v2361
  %v2418 = vpack.c.b16 %v2366, %v2362
  %v2419 = vpack.c.b16 %v2367, %v2363
  %v2420 = vpack.c.b16 %v2372, %v2368
  %v2421 = vpack.c.b16 %v2373, %v2369
  %v2422 = vpack.c.b16 %v2374, %v2370
  %v2423 = vpack.c.b16 %v2375, %v2371
  %v2424 = vpack.c.b16 %v2380, %v2376
  %v2425 = vpack.c.b16 %v2381, %v2377
  %v2426 = vpack.c.b16 %v2382, %v2378
  %v2427 = vpack.c.b16 %v2383, %v2379
  %v2428 = vpack.c.b16 %v2388, %v2384
  %v2429 = vpack.c.b16 %v2389, %v2385
  %v2430 = vpack.c.b16 %v2390, %v2386
  %v2431 = vpack.c.b16 %v2391, %v2387
  %v2432 = vpack.c.b16 %v2396, %v2392
  %v2433 = vpack.c.b16 %v2397, %v2393
  %v2434 = vpack.c.b16 %v2398, %v2394
  %v2435 = vpack.c.b16 %v2399, %v2395
  %v2436 = vpack.c.b16 %v2404, %v2400
  %v2437 = vpack.c.b16 %v2405, %v2401
  %v2438 = vpack.c.b16 %v2406, %v2402
  %v2439 = vpack.c.b16 %v2407, %v2403
  %2472 = vmatpush.bf16.msra.mxu0 %v2436
  %2473 = vmatpush.bf16.msra.mxu0 %v2432
  %2474 = vmatpush.bf16.msra.mxu0 %v2428
  %2475 = vmatpush.bf16.msra.mxu0 %v2424
  %2476 = vmatpush.bf16.msra.mxu0 %v2420
  %2477 = vmatpush.bf16.msra.mxu0 %v2416
  %2478 = vmatpush.bf16.msra.mxu0 %v2412
  %2479 = vmatpush.bf16.msra.mxu0 %v2408
  %2480 = vmatmul.bf16.gmra.mxu0 %v2296
  %v2481 = vpop.f32.mrf.mxu0
  %v2482 = vadd.f32 %v2256, %v2481
  %v2483 = vpop.f32.mrf.mxu0
  %v2484 = vadd.f32 %v2256, %v2483
  %2485 = vmatmul.bf16.gmra.mxu0 %v2297
  %v2486 = vpop.f32.mrf.mxu0
  %v2487 = vadd.f32 %v2256, %v2486
  %v2488 = vpop.f32.mrf.mxu0
  %v2489 = vadd.f32 %v2256, %v2488
  %2490 = vmatmul.bf16.gmra.mxu0 %v2298
  %v2491 = vpop.f32.mrf.mxu0
  %v2492 = vadd.f32 %v2256, %v2491
  %v2493 = vpop.f32.mrf.mxu0
  %v2494 = vadd.f32 %v2256, %v2493
  %2495 = vmatmul.bf16.gmra.mxu0 %v2299
  %v2496 = vpop.f32.mrf.mxu0
  %v2497 = vadd.f32 %v2256, %v2496
  %v2498 = vpop.f32.mrf.mxu0
  %v2499 = vadd.f32 %v2256, %v2498
  %2500 = vmatmul.bf16.gmra.mxu0 %v2300
  %v2501 = vpop.f32.mrf.mxu0
  %v2502 = vadd.f32 %v2256, %v2501
  %v2503 = vpop.f32.mrf.mxu0
  %v2504 = vadd.f32 %v2256, %v2503
  %2505 = vmatmul.bf16.gmra.mxu0 %v2301
  %v2506 = vpop.f32.mrf.mxu0
  %v2507 = vadd.f32 %v2256, %v2506
  %v2508 = vpop.f32.mrf.mxu0
  %v2509 = vadd.f32 %v2256, %v2508
  %2510 = vmatmul.bf16.gmra.mxu0 %v2302
  %v2511 = vpop.f32.mrf.mxu0
  %v2512 = vadd.f32 %v2256, %v2511
  %v2513 = vpop.f32.mrf.mxu0
  %v2514 = vadd.f32 %v2256, %v2513
  %2515 = vmatmul.bf16.gmra.mxu0 %v2303
  %v2516 = vpop.f32.mrf.mxu0
  %v2517 = vadd.f32 %v2256, %v2516
  %v2518 = vpop.f32.mrf.mxu0
  %v2519 = vadd.f32 %v2256, %v2518
  %2520 = vdwg.mxu0
  %2521 = vmatpush.bf16.msra.mxu0 %v2437
  %2522 = vmatpush.bf16.msra.mxu0 %v2433
  %2523 = vmatpush.bf16.msra.mxu0 %v2429
  %2524 = vmatpush.bf16.msra.mxu0 %v2425
  %2525 = vmatpush.bf16.msra.mxu0 %v2421
  %2526 = vmatpush.bf16.msra.mxu0 %v2417
  %2527 = vmatpush.bf16.msra.mxu0 %v2413
  %2528 = vmatpush.bf16.msra.mxu0 %v2409
  %2529 = vmatmul.bf16.gmra.mxu0 %v2296
  %v2530 = vpop.f32.mrf.mxu0
  %v2531 = vadd.f32 %v2257, %v2530
  %v2532 = vpop.f32.mrf.mxu0
  %v2533 = vadd.f32 %v2257, %v2532
  %2534 = vmatmul.bf16.gmra.mxu0 %v2297
  %v2535 = vpop.f32.mrf.mxu0
  %v2536 = vadd.f32 %v2257, %v2535
  %v2537 = vpop.f32.mrf.mxu0
  %v2538 = vadd.f32 %v2257, %v2537
  %2539 = vmatmul.bf16.gmra.mxu0 %v2298
  %v2540 = vpop.f32.mrf.mxu0
  %v2541 = vadd.f32 %v2257, %v2540
  %v2542 = vpop.f32.mrf.mxu0
  %v2543 = vadd.f32 %v2257, %v2542
  %2544 = vmatmul.bf16.gmra.mxu0 %v2299
  %v2545 = vpop.f32.mrf.mxu0
  %v2546 = vadd.f32 %v2257, %v2545
  %v2547 = vpop.f32.mrf.mxu0
  %v2548 = vadd.f32 %v2257, %v2547
  %2549 = vmatmul.bf16.gmra.mxu0 %v2300
  %v2550 = vpop.f32.mrf.mxu0
  %v2551 = vadd.f32 %v2257, %v2550
  %v2552 = vpop.f32.mrf.mxu0
  %v2553 = vadd.f32 %v2257, %v2552
  %2554 = vmatmul.bf16.gmra.mxu0 %v2301
  %v2555 = vpop.f32.mrf.mxu0
  %v2556 = vadd.f32 %v2257, %v2555
  %v2557 = vpop.f32.mrf.mxu0
  %v2558 = vadd.f32 %v2257, %v2557
  %2559 = vmatmul.bf16.gmra.mxu0 %v2302
  %v2560 = vpop.f32.mrf.mxu0
  %v2561 = vadd.f32 %v2257, %v2560
  %v2562 = vpop.f32.mrf.mxu0
  %v2563 = vadd.f32 %v2257, %v2562
  %2564 = vmatmul.bf16.gmra.mxu0 %v2303
  %v2565 = vpop.f32.mrf.mxu0
  %v2566 = vadd.f32 %v2257, %v2565
  %v2567 = vpop.f32.mrf.mxu0
  %v2568 = vadd.f32 %v2257, %v2567
  %2569 = vdwg.mxu0
  %2570 = vmatpush.bf16.msra.mxu0 %v2438
  %2571 = vmatpush.bf16.msra.mxu0 %v2434
  %2572 = vmatpush.bf16.msra.mxu0 %v2430
  %2573 = vmatpush.bf16.msra.mxu0 %v2426
  %2574 = vmatpush.bf16.msra.mxu0 %v2422
  %2575 = vmatpush.bf16.msra.mxu0 %v2418
  %2576 = vmatpush.bf16.msra.mxu0 %v2414
  %2577 = vmatpush.bf16.msra.mxu0 %v2410
  %2578 = vmatmul.bf16.gmra.mxu0 %v2296
  %v2579 = vpop.f32.mrf.mxu0
  %v2580 = vadd.f32 %v2258, %v2579
  %v2581 = vpop.f32.mrf.mxu0
  %v2582 = vadd.f32 %v2258, %v2581
  %2583 = vmatmul.bf16.gmra.mxu0 %v2297
  %v2584 = vpop.f32.mrf.mxu0
  %v2585 = vadd.f32 %v2258, %v2584
  %v2586 = vpop.f32.mrf.mxu0
  %v2587 = vadd.f32 %v2258, %v2586
  %2588 = vmatmul.bf16.gmra.mxu0 %v2298
  %v2589 = vpop.f32.mrf.mxu0
  %v2590 = vadd.f32 %v2258, %v2589
  %v2591 = vpop.f32.mrf.mxu0
  %v2592 = vadd.f32 %v2258, %v2591
  %2593 = vmatmul.bf16.gmra.mxu0 %v2299
  %v2594 = vpop.f32.mrf.mxu0
  %v2595 = vadd.f32 %v2258, %v2594
  %v2596 = vpop.f32.mrf.mxu0
  %v2597 = vadd.f32 %v2258, %v2596
  %2598 = vmatmul.bf16.gmra.mxu0 %v2300
  %v2599 = vpop.f32.mrf.mxu0
  %v2600 = vadd.f32 %v2258, %v2599
  %v2601 = vpop.f32.mrf.mxu0
  %v2602 = vadd.f32 %v2258, %v2601
  %2603 = vmatmul.bf16.gmra.mxu0 %v2301
  %v2604 = vpop.f32.mrf.mxu0
  %v2605 = vadd.f32 %v2258, %v2604
  %v2606 = vpop.f32.mrf.mxu0
  %v2607 = vadd.f32 %v2258, %v2606
  %2608 = vmatmul.bf16.gmra.mxu0 %v2302
  %v2609 = vpop.f32.mrf.mxu0
  %v2610 = vadd.f32 %v2258, %v2609
  %v2611 = vpop.f32.mrf.mxu0
  %v2612 = vadd.f32 %v2258, %v2611
  %2613 = vmatmul.bf16.gmra.mxu0 %v2303
  %v2614 = vpop.f32.mrf.mxu0
  %v2615 = vadd.f32 %v2258, %v2614
  %v2616 = vpop.f32.mrf.mxu0
  %v2617 = vadd.f32 %v2258, %v2616
  %2618 = vdwg.mxu0
  %2619 = vmatpush.bf16.msra.mxu0 %v2439
  %2620 = vmatpush.bf16.msra.mxu0 %v2435
  %2621 = vmatpush.bf16.msra.mxu0 %v2431
  %2622 = vmatpush.bf16.msra.mxu0 %v2427
  %2623 = vmatpush.bf16.msra.mxu0 %v2423
  %2624 = vmatpush.bf16.msra.mxu0 %v2419
  %2625 = vmatpush.bf16.msra.mxu0 %v2415
  %2626 = vmatpush.bf16.msra.mxu0 %v2411
  %2627 = vmatmul.bf16.gmra.mxu0 %v2296
  %v2628 = vpop.f32.mrf.mxu0
  %v2629 = vadd.f32 %v2259, %v2628
  %v2630 = vpop.f32.mrf.mxu0
  %v2631 = vadd.f32 %v2259, %v2630
  %2632 = vmatmul.bf16.gmra.mxu0 %v2297
  %v2633 = vpop.f32.mrf.mxu0
  %v2634 = vadd.f32 %v2259, %v2633
  %v2635 = vpop.f32.mrf.mxu0
  %v2636 = vadd.f32 %v2259, %v2635
  %2637 = vmatmul.bf16.gmra.mxu0 %v2298
  %v2638 = vpop.f32.mrf.mxu0
  %v2639 = vadd.f32 %v2259, %v2638
  %v2640 = vpop.f32.mrf.mxu0
  %v2641 = vadd.f32 %v2259, %v2640
  %2642 = vmatmul.bf16.gmra.mxu0 %v2299
  %v2643 = vpop.f32.mrf.mxu0
  %v2644 = vadd.f32 %v2259, %v2643
  %v2645 = vpop.f32.mrf.mxu0
  %v2646 = vadd.f32 %v2259, %v2645
  %2647 = vmatmul.bf16.gmra.mxu0 %v2300
  %v2648 = vpop.f32.mrf.mxu0
  %v2649 = vadd.f32 %v2259, %v2648
  %v2650 = vpop.f32.mrf.mxu0
  %v2651 = vadd.f32 %v2259, %v2650
  %2652 = vmatmul.bf16.gmra.mxu0 %v2301
  %v2653 = vpop.f32.mrf.mxu0
  %v2654 = vadd.f32 %v2259, %v2653
  %v2655 = vpop.f32.mrf.mxu0
  %v2656 = vadd.f32 %v2259, %v2655
  %2657 = vmatmul.bf16.gmra.mxu0 %v2302
  %v2658 = vpop.f32.mrf.mxu0
  %v2659 = vadd.f32 %v2259, %v2658
  %v2660 = vpop.f32.mrf.mxu0
  %v2661 = vadd.f32 %v2259, %v2660
  %2662 = vmatmul.bf16.gmra.mxu0 %v2303
  %v2663 = vpop.f32.mrf.mxu0
  %v2664 = vadd.f32 %v2259, %v2663
  %v2665 = vpop.f32.mrf.mxu0
  %v2666 = vadd.f32 %v2259, %v2665
  %2667 = vdwg.mxu0
  %2668 = vst [vmem:[#allocation3] sm:$0xff] %v2482
  %2669 = vst [vmem:[#allocation3 + $0x8] sm:$0xff] %v2531
  %2670 = vst [vmem:[#allocation3 + $0x10] sm:$0xff] %v2580
  %2671 = vst [vmem:[#allocation3 + $0x18] sm:$0xff] %v2629
  %2672 = vst [vmem:[#allocation3 + $0x20] sm:$0xff] %v2484
  %2673 = vst [vmem:[#allocation3 + $0x28] sm:$0xff] %v2533
  %2674 = vst [vmem:[#allocation3 + $0x30] sm:$0xff] %v2582
  %2675 = vst [vmem:[#allocation3 + $0x38] sm:$0xff] %v2631
  %2676 = vst [vmem:[#allocation3 + $0x40] sm:$0xff] %v2487
  %2677 = vst [vmem:[#allocation3 + $0x48] sm:$0xff] %v2536
  %2678 = vst [vmem:[#allocation3 + $0x50] sm:$0xff] %v2585
  %2679 = vst [vmem:[#allocation3 + $0x58] sm:$0xff] %v2634
  %2680 = vst [vmem:[#allocation3 + $0x60] sm:$0xff] %v2489
  %2681 = vst [vmem:[#allocation3 + $0x68] sm:$0xff] %v2538
  %2682 = vst [vmem:[#allocation3 + $0x70] sm:$0xff] %v2587
  %2683 = vst [vmem:[#allocation3 + $0x78] sm:$0xff] %v2636
  %2684 = vst [vmem:[#allocation3 + $0x80] sm:$0xff] %v2492
  %2685 = vst [vmem:[#allocation3 + $0x88] sm:$0xff] %v2541
  %2686 = vst [vmem:[#allocation3 + $0x90] sm:$0xff] %v2590
  %2687 = vst [vmem:[#allocation3 + $0x98] sm:$0xff] %v2639
  %2688 = vst [vmem:[#allocation3 + $0xa0] sm:$0xff] %v2494
  %2689 = vst [vmem:[#allocation3 + $0xa8] sm:$0xff] %v2543
  %2690 = vst [vmem:[#allocation3 + $0xb0] sm:$0xff] %v2592
  %2691 = vst [vmem:[#allocation3 + $0xb8] sm:$0xff] %v2641
  %2692 = vst [vmem:[#allocation3 + $0xc0] sm:$0xff] %v2497
  %2693 = vst [vmem:[#allocation3 + $0xc8] sm:$0xff] %v2546
  %2694 = vst [vmem:[#allocation3 + $0xd0] sm:$0xff] %v2595
  %2695 = vst [vmem:[#allocation3 + $0xd8] sm:$0xff] %v2644
  %2696 = vst [vmem:[#allocation3 + $0xe0] sm:$0xff] %v2499
  %2697 = vst [vmem:[#allocation3 + $0xe8] sm:$0xff] %v2548
  %2698 = vst [vmem:[#allocation3 + $0xf0] sm:$0xff] %v2597
  %2699 = vst [vmem:[#allocation3 + $0xf8] sm:$0xff] %v2646
  %2700 = vst [vmem:[#allocation3 + $0x100] sm:$0xff] %v2502
  %2701 = vst [vmem:[#allocation3 + $0x108] sm:$0xff] %v2551
  %2702 = vst [vmem:[#allocation3 + $0x110] sm:$0xff] %v2600
  %2703 = vst [vmem:[#allocation3 + $0x118] sm:$0xff] %v2649
  %2704 = vst [vmem:[#allocation3 + $0x120] sm:$0xff] %v2504
  %2705 = vst [vmem:[#allocation3 + $0x128] sm:$0xff] %v2553
  %2706 = vst [vmem:[#allocation3 + $0x130] sm:$0xff] %v2602
  %2707 = vst [vmem:[#allocation3 + $0x138] sm:$0xff] %v2651
  %2708 = vst [vmem:[#allocation3 + $0x140] sm:$0xff] %v2507
  %2709 = vst [vmem:[#allocation3 + $0x148] sm:$0xff] %v2556
  %2710 = vst [vmem:[#allocation3 + $0x150] sm:$0xff] %v2605
  %2711 = vst [vmem:[#allocation3 + $0x158] sm:$0xff] %v2654
  %2712 = vst [vmem:[#allocation3 + $0x160] sm:$0xff] %v2509
  %2713 = vst [vmem:[#allocation3 + $0x168] sm:$0xff] %v2558
  %2714 = vst [vmem:[#allocation3 + $0x170] sm:$0xff] %v2607
  %2715 = vst [vmem:[#allocation3 + $0x178] sm:$0xff] %v2656
  %2716 = vst [vmem:[#allocation3 + $0x180] sm:$0xff] %v2512
  %2717 = vst [vmem:[#allocation3 + $0x188] sm:$0xff] %v2561
  %2718 = vst [vmem:[#allocation3 + $0x190] sm:$0xff] %v2610
  %2719 = vst [vmem:[#allocation3 + $0x198] sm:$0xff] %v2659
  %2720 = vst [vmem:[#allocation3 + $0x1a0] sm:$0xff] %v2514
  %2721 = vst [vmem:[#allocation3 + $0x1a8] sm:$0xff] %v2563
  %2722 = vst [vmem:[#allocation3 + $0x1b0] sm:$0xff] %v2612
  %2723 = vst [vmem:[#allocation3 + $0x1b8] sm:$0xff] %v2661
  %2724 = vst [vmem:[#allocation3 + $0x1c0] sm:$0xff] %v2517
  %2725 = vst [vmem:[#allocation3 + $0x1c8] sm:$0xff] %v2566
  %2726 = vst [vmem:[#allocation3 + $0x1d0] sm:$0xff] %v2615
  %2727 = vst [vmem:[#allocation3 + $0x1d8] sm:$0xff] %v2664
  %2728 = vst [vmem:[#allocation3 + $0x1e0] sm:$0xff] %v2519
  %2729 = vst [vmem:[#allocation3 + $0x1e8] sm:$0xff] %v2568
  %2730 = vst [vmem:[#allocation3 + $0x1f0] sm:$0xff] %v2617
  %2731 = vst [vmem:[#allocation3 + $0x1f8] sm:$0xff] %v2666
  loop: start=0, step=1, limit=2
  $region53: #{rnn_classifier_forward.1} parent=0 // loop_pre_header
    _
  $region54: #{rnn_classifier_forward.1} parent=0 // loop_header
    %s2733 = sphi 0, %s2737
    %p2734 = scmp.ge.s32.totalorder %s2733, 2
    %v2738 = vphi 0.0, %v4365
    %v2739 = vphi 0.0, %v4366
    %v2740 = vphi 0.0, %v4361
    %v2741 = vphi 0.0, %v4362
  $region55: #{rnn_classifier_forward.1} parent=0 // loop_header_branch
    %2736 = sbr.rel (%p2734) target = $region59
  $region56: #{rnn_classifier_forward.1} parent=0 // loop_body
    %s2742 = smul.u32 %s2733, 64
    %s2743 = sshra.s32 %s2742, 3
    %s2744 = sand.u32 %s2742, 7
    %s2745 = smul.u32 %s2743, 4
    %s2746 = smul.addr %s2745, 8
    %s2747 = scalar_lea.vmem [#allocation3], %s2746
    %v2748 = vld [vmem:[%s2747] sm:$0xff]
    %v2749 = vld [vmem:[%s2747 + $0x8] sm:$0xff]
    %v2750 = vld [vmem:[%s2747 + $0x10] sm:$0xff]
    %v2751 = vld [vmem:[%s2747 + $0x18] sm:$0xff]
    %v2752 = vld [vmem:[%s2747 + $0x20] sm:$0xff]
    %v2753 = vld [vmem:[%s2747 + $0x28] sm:$0xff]
    %v2754 = vld [vmem:[%s2747 + $0x30] sm:$0xff]
    %v2755 = vld [vmem:[%s2747 + $0x38] sm:$0xff]
    %v2756 = vpack.c.bf16 %v2739, %v2738
    %v2757 = vld [vmem:[%s7] sm:$0xff]
    %v2758 = vld [vmem:[%s7 + $0x8] sm:$0xff]
    %v2759 = vld [vmem:[%s7 + $0x10] sm:$0xff]
    %v2760 = vld [vmem:[%s7 + $0x18] sm:$0xff]
    %v2761 = vld [vmem:[%s7 + $0x20] sm:$0xff]
    %v2762 = vld [vmem:[%s7 + $0x28] sm:$0xff]
    %v2763 = vld [vmem:[%s7 + $0x30] sm:$0xff]
    %v2764 = vld [vmem:[%s7 + $0x38] sm:$0xff]
    %v2765 = vld [vmem:[%s7 + $0x40] sm:$0xff]
    %v2766 = vld [vmem:[%s7 + $0x48] sm:$0xff]
    %v2767 = vld [vmem:[%s7 + $0x50] sm:$0xff]
    %v2768 = vld [vmem:[%s7 + $0x58] sm:$0xff]
    %v2769 = vld [vmem:[%s7 + $0x60] sm:$0xff]
    %v2770 = vld [vmem:[%s7 + $0x68] sm:$0xff]
    %v2771 = vld [vmem:[%s7 + $0x70] sm:$0xff]
    %v2772 = vld [vmem:[%s7 + $0x78] sm:$0xff]
    %v2773 = vld [vmem:[%s7 + $0x80] sm:$0xff]
    %v2774 = vld [vmem:[%s7 + $0x88] sm:$0xff]
    %v2775 = vld [vmem:[%s7 + $0x90] sm:$0xff]
    %v2776 = vld [vmem:[%s7 + $0x98] sm:$0xff]
    %v2777 = vld [vmem:[%s7 + $0xa0] sm:$0xff]
    %v2778 = vld [vmem:[%s7 + $0xa8] sm:$0xff]
    %v2779 = vld [vmem:[%s7 + $0xb0] sm:$0xff]
    %v2780 = vld [vmem:[%s7 + $0xb8] sm:$0xff]
    %v2781 = vld [vmem:[%s7 + $0xc0] sm:$0xff]
    %v2782 = vld [vmem:[%s7 + $0xc8] sm:$0xff]
    %v2783 = vld [vmem:[%s7 + $0xd0] sm:$0xff]
    %v2784 = vld [vmem:[%s7 + $0xd8] sm:$0xff]
    %v2785 = vld [vmem:[%s7 + $0xe0] sm:$0xff]
    %v2786 = vld [vmem:[%s7 + $0xe8] sm:$0xff]
    %v2787 = vld [vmem:[%s7 + $0xf0] sm:$0xff]
    %v2788 = vld [vmem:[%s7 + $0xf8] sm:$0xff]
    %v2821 = vunpack.c.l.b16 %v2757
    %v2822 = vunpack.c.h.b16 %v2757
    %v2823 = vunpack.c.l.b16 %v2758
    %v2824 = vunpack.c.h.b16 %v2758
    %v2825 = vunpack.c.l.b16 %v2759
    %v2826 = vunpack.c.h.b16 %v2759
    %v2827 = vunpack.c.l.b16 %v2760
    %v2828 = vunpack.c.h.b16 %v2760
    %v2829 = vunpack.c.l.b16 %v2761
    %v2830 = vunpack.c.h.b16 %v2761
    %v2831 = vunpack.c.l.b16 %v2762
    %v2832 = vunpack.c.h.b16 %v2762
    %v2833 = vunpack.c.l.b16 %v2763
    %v2834 = vunpack.c.h.b16 %v2763
    %v2835 = vunpack.c.l.b16 %v2764
    %v2836 = vunpack.c.h.b16 %v2764
    %v2837 = vunpack.c.l.b16 %v2765
    %v2838 = vunpack.c.h.b16 %v2765
    %v2839 = vunpack.c.l.b16 %v2766
    %v2840 = vunpack.c.h.b16 %v2766
    %v2841 = vunpack.c.l.b16 %v2767
    %v2842 = vunpack.c.h.b16 %v2767
    %v2843 = vunpack.c.l.b16 %v2768
    %v2844 = vunpack.c.h.b16 %v2768
    %v2845 = vunpack.c.l.b16 %v2769
    %v2846 = vunpack.c.h.b16 %v2769
    %v2847 = vunpack.c.l.b16 %v2770
    %v2848 = vunpack.c.h.b16 %v2770
    %v2849 = vunpack.c.l.b16 %v2771
    %v2850 = vunpack.c.h.b16 %v2771
    %v2851 = vunpack.c.l.b16 %v2772
    %v2852 = vunpack.c.h.b16 %v2772
    %v2853 = vunpack.c.l.b16 %v2773
    %v2854 = vunpack.c.h.b16 %v2773
    %v2855 = vunpack.c.l.b16 %v2774
    %v2856 = vunpack.c.h.b16 %v2774
    %v2857 = vunpack.c.l.b16 %v2775
    %v2858 = vunpack.c.h.b16 %v2775
    %v2859 = vunpack.c.l.b16 %v2776
    %v2860 = vunpack.c.h.b16 %v2776
    %v2861 = vunpack.c.l.b16 %v2777
    %v2862 = vunpack.c.h.b16 %v2777
    %v2863 = vunpack.c.l.b16 %v2778
    %v2864 = vunpack.c.h.b16 %v2778
    %v2865 = vunpack.c.l.b16 %v2779
    %v2866 = vunpack.c.h.b16 %v2779
    %v2867 = vunpack.c.l.b16 %v2780
    %v2868 = vunpack.c.h.b16 %v2780
    %v2869 = vunpack.c.l.b16 %v2781
    %v2870 = vunpack.c.h.b16 %v2781
    %v2871 = vunpack.c.l.b16 %v2782
    %v2872 = vunpack.c.h.b16 %v2782
    %v2873 = vunpack.c.l.b16 %v2783
    %v2874 = vunpack.c.h.b16 %v2783
    %v2875 = vunpack.c.l.b16 %v2784
    %v2876 = vunpack.c.h.b16 %v2784
    %v2877 = vunpack.c.l.b16 %v2785
    %v2878 = vunpack.c.h.b16 %v2785
    %v2879 = vunpack.c.l.b16 %v2786
    %v2880 = vunpack.c.h.b16 %v2786
    %v2881 = vunpack.c.l.b16 %v2787
    %v2882 = vunpack.c.h.b16 %v2787
    %v2883 = vunpack.c.l.b16 %v2788
    %v2884 = vunpack.c.h.b16 %v2788
    %v2885 = vpack.c.b16 %v2825, %v2821
    %v2886 = vpack.c.b16 %v2826, %v2822
    %v2887 = vpack.c.b16 %v2827, %v2823
    %v2888 = vpack.c.b16 %v2828, %v2824
    %v2889 = vpack.c.b16 %v2833, %v2829
    %v2890 = vpack.c.b16 %v2834, %v2830
    %v2891 = vpack.c.b16 %v2835, %v2831
    %v2892 = vpack.c.b16 %v2836, %v2832
    %v2893 = vpack.c.b16 %v2841, %v2837
    %v2894 = vpack.c.b16 %v2842, %v2838
    %v2895 = vpack.c.b16 %v2843, %v2839
    %v2896 = vpack.c.b16 %v2844, %v2840
    %v2897 = vpack.c.b16 %v2849, %v2845
    %v2898 = vpack.c.b16 %v2850, %v2846
    %v2899 = vpack.c.b16 %v2851, %v2847
    %v2900 = vpack.c.b16 %v2852, %v2848
    %v2901 = vpack.c.b16 %v2857, %v2853
    %v2902 = vpack.c.b16 %v2858, %v2854
    %v2903 = vpack.c.b16 %v2859, %v2855
    %v2904 = vpack.c.b16 %v2860, %v2856
    %v2905 = vpack.c.b16 %v2865, %v2861
    %v2906 = vpack.c.b16 %v2866, %v2862
    %v2907 = vpack.c.b16 %v2867, %v2863
    %v2908 = vpack.c.b16 %v2868, %v2864
    %v2909 = vpack.c.b16 %v2873, %v2869
    %v2910 = vpack.c.b16 %v2874, %v2870
    %v2911 = vpack.c.b16 %v2875, %v2871
    %v2912 = vpack.c.b16 %v2876, %v2872
    %v2913 = vpack.c.b16 %v2881, %v2877
    %v2914 = vpack.c.b16 %v2882, %v2878
    %v2915 = vpack.c.b16 %v2883, %v2879
    %v2916 = vpack.c.b16 %v2884, %v2880
    %2949 = vmatpush.bf16.msra.mxu0 %v2913
    %2950 = vmatpush.bf16.msra.mxu0 %v2909
    %2951 = vmatpush.bf16.msra.mxu0 %v2905
    %2952 = vmatpush.bf16.msra.mxu0 %v2901
    %2953 = vmatpush.bf16.msra.mxu0 %v2897
    %2954 = vmatpush.bf16.msra.mxu0 %v2893
    %2955 = vmatpush.bf16.msra.mxu0 %v2889
    %2956 = vmatpush.bf16.msra.mxu0 %v2885
    %2957 = vmatmul.bf16.gmra.mxu0 %v2756
    %v2958 = vpop.f32.mrf.mxu0
    %v2959 = vadd.f32 0.0, %v2958
    %v2960 = vpop.f32.mrf.mxu0
    %v2961 = vadd.f32 0.0, %v2960
    %2962 = vdwg.mxu0
    %2963 = vmatpush.bf16.msra.mxu0 %v2914
    %2964 = vmatpush.bf16.msra.mxu0 %v2910
    %2965 = vmatpush.bf16.msra.mxu0 %v2906
    %2966 = vmatpush.bf16.msra.mxu0 %v2902
    %2967 = vmatpush.bf16.msra.mxu0 %v2898
    %2968 = vmatpush.bf16.msra.mxu0 %v2894
    %2969 = vmatpush.bf16.msra.mxu0 %v2890
    %2970 = vmatpush.bf16.msra.mxu0 %v2886
    %2971 = vmatmul.bf16.gmra.mxu0 %v2756
    %v2972 = vpop.f32.mrf.mxu0
    %v2973 = vadd.f32 0.0, %v2972
    %v2974 = vpop.f32.mrf.mxu0
    %v2975 = vadd.f32 0.0, %v2974
    %2976 = vdwg.mxu0
    %2977 = vmatpush.bf16.msra.mxu0 %v2915
    %2978 = vmatpush.bf16.msra.mxu0 %v2911
    %2979 = vmatpush.bf16.msra.mxu0 %v2907
    %2980 = vmatpush.bf16.msra.mxu0 %v2903
    %2981 = vmatpush.bf16.msra.mxu0 %v2899
    %2982 = vmatpush.bf16.msra.mxu0 %v2895
    %2983 = vmatpush.bf16.msra.mxu0 %v2891
    %2984 = vmatpush.bf16.msra.mxu0 %v2887
    %2985 = vmatmul.bf16.gmra.mxu0 %v2756
    %v2986 = vpop.f32.mrf.mxu0
    %v2987 = vadd.f32 0.0, %v2986
    %v2988 = vpop.f32.mrf.mxu0
    %v2989 = vadd.f32 0.0, %v2988
    %2990 = vdwg.mxu0
    %2991 = vmatpush.bf16.msra.mxu0 %v2916
    %2992 = vmatpush.bf16.msra.mxu0 %v2912
    %2993 = vmatpush.bf16.msra.mxu0 %v2908
    %2994 = vmatpush.bf16.msra.mxu0 %v2904
    %2995 = vmatpush.bf16.msra.mxu0 %v2900
    %2996 = vmatpush.bf16.msra.mxu0 %v2896
    %2997 = vmatpush.bf16.msra.mxu0 %v2892
    %2998 = vmatpush.bf16.msra.mxu0 %v2888
    %2999 = vmatmul.bf16.gmra.mxu0 %v2756
    %v3000 = vpop.f32.mrf.mxu0
    %v3001 = vadd.f32 0.0, %v3000
    %v3002 = vpop.f32.mrf.mxu0
    %v3003 = vadd.f32 0.0, %v3002
    %3004 = vdwg.mxu0
    %v3005 = vadd.f32 %v2748, %v2959
    %v3006 = vadd.f32 %v2749, %v2973
    %v3007 = vadd.f32 %v2750, %v2987
    %v3008 = vadd.f32 %v2751, %v3001
    %v3009 = vadd.f32 %v2752, %v2961
    %v3010 = vadd.f32 %v2753, %v2975
    %v3011 = vadd.f32 %v2754, %v2989
    %v3012 = vadd.f32 %v2755, %v3003
    %v3013 = vxor.u32 %v3005, 2147483648
    %v3014 = vxor.u32 %v3009, 2147483648
    %v3015 = vmul.f32 %v3013, 1.442695
    %v3016 = vpow.pop %v3015
    %v3017 = vmul.f32 %v3014, 1.442695
    %v3018 = vpow.pop %v3017
    %v3019 = vadd.f32 %v3016, 1.0
    %v3020 = vadd.f32 %v3018, 1.0
    %v3021 = vrcp.pop %v3019
    %v3022 = vmul.f32 %v3019, %v3021
    %v3023 = vsub.f32 1.0, %v3022
    %v3024 = vmul.f32 %v3021, %v3023
    %v3025 = vadd.f32 %v3021, %v3024
    %vm3026 = vweird.f32 %v3019
    %vm3027 = vweird.f32 %v3021
    %vm3028 = vmor %vm3026, %vm3027
    %v3029 = vsel %vm3028, %v3021, %v3025
    %v3030 = vand.u32 2147483647, %v3019
    %vm3031 = vcmp.eq.f32.partialorder %v3030, 8.507059e+37
    %v3032 = vand.u32 %v3019, 2147483648
    %v3033 = vor.u32 1.1754944e-38, %v3032
    %v3034 = vsel %vm3031, %v3033, %v3029
    %v3035 = vmul.f32 1.0, %v3034
    %v3036 = vrcp.pop %v3020
    %v3037 = vmul.f32 %v3020, %v3036
    %v3038 = vsub.f32 1.0, %v3037
    %v3039 = vmul.f32 %v3036, %v3038
    %v3040 = vadd.f32 %v3036, %v3039
    %vm3041 = vweird.f32 %v3020
    %vm3042 = vweird.f32 %v3036
    %vm3043 = vmor %vm3041, %vm3042
    %v3044 = vsel %vm3043, %v3036, %v3040
    %v3045 = vand.u32 2147483647, %v3020
    %vm3046 = vcmp.eq.f32.partialorder %v3045, 8.507059e+37
    %v3047 = vand.u32 %v3020, 2147483648
    %v3048 = vor.u32 1.1754944e-38, %v3047
    %v3049 = vsel %vm3046, %v3048, %v3044
    %v3050 = vmul.f32 1.0, %v3049
    %v3051 = vxor.u32 %v3006, 2147483648
    %v3052 = vxor.u32 %v3010, 2147483648
    %v3053 = vmul.f32 %v3051, 1.442695
    %v3054 = vpow.pop %v3053
    %v3055 = vmul.f32 %v3052, 1.442695
    %v3056 = vpow.pop %v3055
    %v3057 = vadd.f32 %v3054, 1.0
    %v3058 = vadd.f32 %v3056, 1.0
    %v3059 = vrcp.pop %v3057
    %v3060 = vmul.f32 %v3057, %v3059
    %v3061 = vsub.f32 1.0, %v3060
    %v3062 = vmul.f32 %v3059, %v3061
    %v3063 = vadd.f32 %v3059, %v3062
    %vm3064 = vweird.f32 %v3057
    %vm3065 = vweird.f32 %v3059
    %vm3066 = vmor %vm3064, %vm3065
    %v3067 = vsel %vm3066, %v3059, %v3063
    %v3068 = vand.u32 2147483647, %v3057
    %vm3069 = vcmp.eq.f32.partialorder %v3068, 8.507059e+37
    %v3070 = vand.u32 %v3057, 2147483648
    %v3071 = vor.u32 1.1754944e-38, %v3070
    %v3072 = vsel %vm3069, %v3071, %v3067
    %v3073 = vmul.f32 1.0, %v3072
    %v3074 = vrcp.pop %v3058
    %v3075 = vmul.f32 %v3058, %v3074
    %v3076 = vsub.f32 1.0, %v3075
    %v3077 = vmul.f32 %v3074, %v3076
    %v3078 = vadd.f32 %v3074, %v3077
    %vm3079 = vweird.f32 %v3058
    %vm3080 = vweird.f32 %v3074
    %vm3081 = vmor %vm3079, %vm3080
    %v3082 = vsel %vm3081, %v3074, %v3078
    %v3083 = vand.u32 2147483647, %v3058
    %vm3084 = vcmp.eq.f32.partialorder %v3083, 8.507059e+37
    %v3085 = vand.u32 %v3058, 2147483648
    %v3086 = vor.u32 1.1754944e-38, %v3085
    %v3087 = vsel %vm3084, %v3086, %v3082
    %v3088 = vmul.f32 1.0, %v3087
    %v3089 = vtanh.pop %v3007
    %v3090 = vtanh.pop %v3011
    %v3091 = vxor.u32 %v3008, 2147483648
    %v3092 = vxor.u32 %v3012, 2147483648
    %v3093 = vmul.f32 %v3091, 1.442695
    %v3094 = vpow.pop %v3093
    %v3095 = vmul.f32 %v3092, 1.442695
    %v3096 = vpow.pop %v3095
    %v3097 = vadd.f32 %v3094, 1.0
    %v3098 = vadd.f32 %v3096, 1.0
    %v3099 = vrcp.pop %v3097
    %v3100 = vmul.f32 %v3097, %v3099
    %v3101 = vsub.f32 1.0, %v3100
    %v3102 = vmul.f32 %v3099, %v3101
    %v3103 = vadd.f32 %v3099, %v3102
    %vm3104 = vweird.f32 %v3097
    %vm3105 = vweird.f32 %v3099
    %vm3106 = vmor %vm3104, %vm3105
    %v3107 = vsel %vm3106, %v3099, %v3103
    %v3108 = vand.u32 2147483647, %v3097
    %vm3109 = vcmp.eq.f32.partialorder %v3108, 8.507059e+37
    %v3110 = vand.u32 %v3097, 2147483648
    %v3111 = vor.u32 1.1754944e-38, %v3110
    %v3112 = vsel %vm3109, %v3111, %v3107
    %v3113 = vmul.f32 1.0, %v3112
    %v3114 = vrcp.pop %v3098
    %v3115 = vmul.f32 %v3098, %v3114
    %v3116 = vsub.f32 1.0, %v3115
    %v3117 = vmul.f32 %v3114, %v3116
    %v3118 = vadd.f32 %v3114, %v3117
    %vm3119 = vweird.f32 %v3098
    %vm3120 = vweird.f32 %v3114
    %vm3121 = vmor %vm3119, %vm3120
    %v3122 = vsel %vm3121, %v3114, %v3118
    %v3123 = vand.u32 2147483647, %v3098
    %vm3124 = vcmp.eq.f32.partialorder %v3123, 8.507059e+37
    %v3125 = vand.u32 %v3098, 2147483648
    %v3126 = vor.u32 1.1754944e-38, %v3125
    %v3127 = vsel %vm3124, %v3126, %v3122
    %v3128 = vmul.f32 1.0, %v3127
    %v3129 = vmul.f32 %v3073, %v2740
    %v3130 = vmul.f32 %v3088, %v2741
    %v3131 = vmul.f32 %v3035, %v3089
    %v3132 = vmul.f32 %v3050, %v3090
    %v3133 = vadd.f32 %v3129, %v3131
    %v3134 = vadd.f32 %v3130, %v3132
    %v3135 = vtanh.pop %v3133
    %v3136 = vtanh.pop %v3134
    %v3137 = vmul.f32 %v3113, %v3135
    %v3138 = vmul.f32 %v3128, %v3136
    %v3139 = vpack.c.bf16 %v3137, %v3137
    %v3140 = vpack.c.bf16 %v3138, %v3138
    %s3141 = smul.addr %s2743, 4
    %s3142 = scalar_lea.vmem [#allocation2], %s3141
    %3143 = vst [vmem:[%s3142] sm:$0xf] %v3139
    %3144 = vst [vmem:[%s3142 + $0x4] sm:$0xf] %v3140
    %s3145 = smul.u32 %s2733, 4
    %s3146 = sadd.s32 %s3145, 1
    %s3147 = smul.u32 %s3146, 16
    %s3148 = sshra.s32 %s3147, 3
    %s3149 = sand.u32 %s3147, 7
    %s3150 = smul.u32 %s3148, 4
    %s3151 = smul.addr %s3150, 8
    %s3152 = scalar_lea.vmem [#allocation3], %s3151
    %v3153 = vld [vmem:[%s3152] sm:$0xff]
    %v3154 = vld [vmem:[%s3152 + $0x8] sm:$0xff]
    %v3155 = vld [vmem:[%s3152 + $0x10] sm:$0xff]
    %v3156 = vld [vmem:[%s3152 + $0x18] sm:$0xff]
    %v3157 = vld [vmem:[%s3152 + $0x20] sm:$0xff]
    %v3158 = vld [vmem:[%s3152 + $0x28] sm:$0xff]
    %v3159 = vld [vmem:[%s3152 + $0x30] sm:$0xff]
    %v3160 = vld [vmem:[%s3152 + $0x38] sm:$0xff]
    %v3161 = vld [vmem:[%s7] sm:$0xff]
    %v3162 = vld [vmem:[%s7 + $0x8] sm:$0xff]
    %v3163 = vld [vmem:[%s7 + $0x10] sm:$0xff]
    %v3164 = vld [vmem:[%s7 + $0x18] sm:$0xff]
    %v3165 = vld [vmem:[%s7 + $0x20] sm:$0xff]
    %v3166 = vld [vmem:[%s7 + $0x28] sm:$0xff]
    %v3167 = vld [vmem:[%s7 + $0x30] sm:$0xff]
    %v3168 = vld [vmem:[%s7 + $0x38] sm:$0xff]
    %v3169 = vld [vmem:[%s7 + $0x40] sm:$0xff]
    %v3170 = vld [vmem:[%s7 + $0x48] sm:$0xff]
    %v3171 = vld [vmem:[%s7 + $0x50] sm:$0xff]
    %v3172 = vld [vmem:[%s7 + $0x58] sm:$0xff]
    %v3173 = vld [vmem:[%s7 + $0x60] sm:$0xff]
    %v3174 = vld [vmem:[%s7 + $0x68] sm:$0xff]
    %v3175 = vld [vmem:[%s7 + $0x70] sm:$0xff]
    %v3176 = vld [vmem:[%s7 + $0x78] sm:$0xff]
    %v3177 = vld [vmem:[%s7 + $0x80] sm:$0xff]
    %v3178 = vld [vmem:[%s7 + $0x88] sm:$0xff]
    %v3179 = vld [vmem:[%s7 + $0x90] sm:$0xff]
    %v3180 = vld [vmem:[%s7 + $0x98] sm:$0xff]
    %v3181 = vld [vmem:[%s7 + $0xa0] sm:$0xff]
    %v3182 = vld [vmem:[%s7 + $0xa8] sm:$0xff]
    %v3183 = vld [vmem:[%s7 + $0xb0] sm:$0xff]
    %v3184 = vld [vmem:[%s7 + $0xb8] sm:$0xff]
    %v3185 = vld [vmem:[%s7 + $0xc0] sm:$0xff]
    %v3186 = vld [vmem:[%s7 + $0xc8] sm:$0xff]
    %v3187 = vld [vmem:[%s7 + $0xd0] sm:$0xff]
    %v3188 = vld [vmem:[%s7 + $0xd8] sm:$0xff]
    %v3189 = vld [vmem:[%s7 + $0xe0] sm:$0xff]
    %v3190 = vld [vmem:[%s7 + $0xe8] sm:$0xff]
    %v3191 = vld [vmem:[%s7 + $0xf0] sm:$0xff]
    %v3192 = vld [vmem:[%s7 + $0xf8] sm:$0xff]
    %v3195 = vunpack.c.l.b16 %v3139
    %v3196 = vunpack.c.l.b16 %v3140
    %v3197 = vpack.c.b16 %v3196, %v3195
    %v3231 = vunpack.c.l.b16 %v3161
    %v3232 = vunpack.c.h.b16 %v3161
    %v3233 = vunpack.c.l.b16 %v3162
    %v3234 = vunpack.c.h.b16 %v3162
    %v3235 = vunpack.c.l.b16 %v3163
    %v3236 = vunpack.c.h.b16 %v3163
    %v3237 = vunpack.c.l.b16 %v3164
    %v3238 = vunpack.c.h.b16 %v3164
    %v3239 = vunpack.c.l.b16 %v3165
    %v3240 = vunpack.c.h.b16 %v3165
    %v3241 = vunpack.c.l.b16 %v3166
    %v3242 = vunpack.c.h.b16 %v3166
    %v3243 = vunpack.c.l.b16 %v3167
    %v3244 = vunpack.c.h.b16 %v3167
    %v3245 = vunpack.c.l.b16 %v3168
    %v3246 = vunpack.c.h.b16 %v3168
    %v3247 = vunpack.c.l.b16 %v3169
    %v3248 = vunpack.c.h.b16 %v3169
    %v3249 = vunpack.c.l.b16 %v3170
    %v3250 = vunpack.c.h.b16 %v3170
    %v3251 = vunpack.c.l.b16 %v3171
    %v3252 = vunpack.c.h.b16 %v3171
    %v3253 = vunpack.c.l.b16 %v3172
    %v3254 = vunpack.c.h.b16 %v3172
    %v3255 = vunpack.c.l.b16 %v3173
    %v3256 = vunpack.c.h.b16 %v3173
    %v3257 = vunpack.c.l.b16 %v3174
    %v3258 = vunpack.c.h.b16 %v3174
    %v3259 = vunpack.c.l.b16 %v3175
    %v3260 = vunpack.c.h.b16 %v3175
    %v3261 = vunpack.c.l.b16 %v3176
    %v3262 = vunpack.c.h.b16 %v3176
    %v3263 = vunpack.c.l.b16 %v3177
    %v3264 = vunpack.c.h.b16 %v3177
    %v3265 = vunpack.c.l.b16 %v3178
    %v3266 = vunpack.c.h.b16 %v3178
    %v3267 = vunpack.c.l.b16 %v3179
    %v3268 = vunpack.c.h.b16 %v3179
    %v3269 = vunpack.c.l.b16 %v3180
    %v3270 = vunpack.c.h.b16 %v3180
    %v3271 = vunpack.c.l.b16 %v3181
    %v3272 = vunpack.c.h.b16 %v3181
    %v3273 = vunpack.c.l.b16 %v3182
    %v3274 = vunpack.c.h.b16 %v3182
    %v3275 = vunpack.c.l.b16 %v3183
    %v3276 = vunpack.c.h.b16 %v3183
    %v3277 = vunpack.c.l.b16 %v3184
    %v3278 = vunpack.c.h.b16 %v3184
    %v3279 = vunpack.c.l.b16 %v3185
    %v3280 = vunpack.c.h.b16 %v3185
    %v3281 = vunpack.c.l.b16 %v3186
    %v3282 = vunpack.c.h.b16 %v3186
    %v3283 = vunpack.c.l.b16 %v3187
    %v3284 = vunpack.c.h.b16 %v3187
    %v3285 = vunpack.c.l.b16 %v3188
    %v3286 = vunpack.c.h.b16 %v3188
    %v3287 = vunpack.c.l.b16 %v3189
    %v3288 = vunpack.c.h.b16 %v3189
    %v3289 = vunpack.c.l.b16 %v3190
    %v3290 = vunpack.c.h.b16 %v3190
    %v3291 = vunpack.c.l.b16 %v3191
    %v3292 = vunpack.c.h.b16 %v3191
    %v3293 = vunpack.c.l.b16 %v3192
    %v3294 = vunpack.c.h.b16 %v3192
    %v3295 = vpack.c.b16 %v3235, %v3231
    %v3296 = vpack.c.b16 %v3236, %v3232
    %v3297 = vpack.c.b16 %v3237, %v3233
    %v3298 = vpack.c.b16 %v3238, %v3234
    %v3299 = vpack.c.b16 %v3243, %v3239
    %v3300 = vpack.c.b16 %v3244, %v3240
    %v3301 = vpack.c.b16 %v3245, %v3241
    %v3302 = vpack.c.b16 %v3246, %v3242
    %v3303 = vpack.c.b16 %v3251, %v3247
    %v3304 = vpack.c.b16 %v3252, %v3248
    %v3305 = vpack.c.b16 %v3253, %v3249
    %v3306 = vpack.c.b16 %v3254, %v3250
    %v3307 = vpack.c.b16 %v3259, %v3255
    %v3308 = vpack.c.b16 %v3260, %v3256
    %v3309 = vpack.c.b16 %v3261, %v3257
    %v3310 = vpack.c.b16 %v3262, %v3258
    %v3311 = vpack.c.b16 %v3267, %v3263
    %v3312 = vpack.c.b16 %v3268, %v3264
    %v3313 = vpack.c.b16 %v3269, %v3265
    %v3314 = vpack.c.b16 %v3270, %v3266
    %v3315 = vpack.c.b16 %v3275, %v3271
    %v3316 = vpack.c.b16 %v3276, %v3272
    %v3317 = vpack.c.b16 %v3277, %v3273
    %v3318 = vpack.c.b16 %v3278, %v3274
    %v3319 = vpack.c.b16 %v3283, %v3279
    %v3320 = vpack.c.b16 %v3284, %v3280
    %v3321 = vpack.c.b16 %v3285, %v3281
    %v3322 = vpack.c.b16 %v3286, %v3282
    %v3323 = vpack.c.b16 %v3291, %v3287
    %v3324 = vpack.c.b16 %v3292, %v3288
    %v3325 = vpack.c.b16 %v3293, %v3289
    %v3326 = vpack.c.b16 %v3294, %v3290
    %3359 = vmatpush.bf16.msra.mxu0 %v3323
    %3360 = vmatpush.bf16.msra.mxu0 %v3319
    %3361 = vmatpush.bf16.msra.mxu0 %v3315
    %3362 = vmatpush.bf16.msra.mxu0 %v3311
    %3363 = vmatpush.bf16.msra.mxu0 %v3307
    %3364 = vmatpush.bf16.msra.mxu0 %v3303
    %3365 = vmatpush.bf16.msra.mxu0 %v3299
    %3366 = vmatpush.bf16.msra.mxu0 %v3295
    %3367 = vmatmul.bf16.gmra.mxu0 %v3197
    %v3368 = vpop.f32.mrf.mxu0
    %v3369 = vadd.f32 0.0, %v3368
    %v3370 = vpop.f32.mrf.mxu0
    %v3371 = vadd.f32 0.0, %v3370
    %3372 = vdwg.mxu0
    %3373 = vmatpush.bf16.msra.mxu0 %v3324
    %3374 = vmatpush.bf16.msra.mxu0 %v3320
    %3375 = vmatpush.bf16.msra.mxu0 %v3316
    %3376 = vmatpush.bf16.msra.mxu0 %v3312
    %3377 = vmatpush.bf16.msra.mxu0 %v3308
    %3378 = vmatpush.bf16.msra.mxu0 %v3304
    %3379 = vmatpush.bf16.msra.mxu0 %v3300
    %3380 = vmatpush.bf16.msra.mxu0 %v3296
    %3381 = vmatmul.bf16.gmra.mxu0 %v3197
    %v3382 = vpop.f32.mrf.mxu0
    %v3383 = vadd.f32 0.0, %v3382
    %v3384 = vpop.f32.mrf.mxu0
    %v3385 = vadd.f32 0.0, %v3384
    %3386 = vdwg.mxu0
    %3387 = vmatpush.bf16.msra.mxu0 %v3325
    %3388 = vmatpush.bf16.msra.mxu0 %v3321
    %3389 = vmatpush.bf16.msra.mxu0 %v3317
    %3390 = vmatpush.bf16.msra.mxu0 %v3313
    %3391 = vmatpush.bf16.msra.mxu0 %v3309
    %3392 = vmatpush.bf16.msra.mxu0 %v3305
    %3393 = vmatpush.bf16.msra.mxu0 %v3301
    %3394 = vmatpush.bf16.msra.mxu0 %v3297
    %3395 = vmatmul.bf16.gmra.mxu0 %v3197
    %v3396 = vpop.f32.mrf.mxu0
    %v3397 = vadd.f32 0.0, %v3396
    %v3398 = vpop.f32.mrf.mxu0
    %v3399 = vadd.f32 0.0, %v3398
    %3400 = vdwg.mxu0
    %3401 = vmatpush.bf16.msra.mxu0 %v3326
    %3402 = vmatpush.bf16.msra.mxu0 %v3322
    %3403 = vmatpush.bf16.msra.mxu0 %v3318
    %3404 = vmatpush.bf16.msra.mxu0 %v3314
    %3405 = vmatpush.bf16.msra.mxu0 %v3310
    %3406 = vmatpush.bf16.msra.mxu0 %v3306
    %3407 = vmatpush.bf16.msra.mxu0 %v3302
    %3408 = vmatpush.bf16.msra.mxu0 %v3298
    %3409 = vmatmul.bf16.gmra.mxu0 %v3197
    %v3410 = vpop.f32.mrf.mxu0
    %v3411 = vadd.f32 0.0, %v3410
    %v3412 = vpop.f32.mrf.mxu0
    %v3413 = vadd.f32 0.0, %v3412
    %3414 = vdwg.mxu0
    %v3415 = vadd.f32 %v3153, %v3369
    %v3416 = vadd.f32 %v3154, %v3383
    %v3417 = vadd.f32 %v3155, %v3397
    %v3418 = vadd.f32 %v3156, %v3411
    %v3419 = vadd.f32 %v3157, %v3371
    %v3420 = vadd.f32 %v3158, %v3385
    %v3421 = vadd.f32 %v3159, %v3399
    %v3422 = vadd.f32 %v3160, %v3413
    %v3423 = vxor.u32 %v3415, 2147483648
    %v3424 = vxor.u32 %v3419, 2147483648
    %v3425 = vmul.f32 %v3423, 1.442695
    %v3426 = vpow.pop %v3425
    %v3427 = vmul.f32 %v3424, 1.442695
    %v3428 = vpow.pop %v3427
    %v3429 = vadd.f32 %v3426, 1.0
    %v3430 = vadd.f32 %v3428, 1.0
    %v3431 = vrcp.pop %v3429
    %v3432 = vmul.f32 %v3429, %v3431
    %v3433 = vsub.f32 1.0, %v3432
    %v3434 = vmul.f32 %v3431, %v3433
    %v3435 = vadd.f32 %v3431, %v3434
    %vm3436 = vweird.f32 %v3429
    %vm3437 = vweird.f32 %v3431
    %vm3438 = vmor %vm3436, %vm3437
    %v3439 = vsel %vm3438, %v3431, %v3435
    %v3440 = vand.u32 2147483647, %v3429
    %vm3441 = vcmp.eq.f32.partialorder %v3440, 8.507059e+37
    %v3442 = vand.u32 %v3429, 2147483648
    %v3443 = vor.u32 1.1754944e-38, %v3442
    %v3444 = vsel %vm3441, %v3443, %v3439
    %v3445 = vmul.f32 1.0, %v3444
    %v3446 = vrcp.pop %v3430
    %v3447 = vmul.f32 %v3430, %v3446
    %v3448 = vsub.f32 1.0, %v3447
    %v3449 = vmul.f32 %v3446, %v3448
    %v3450 = vadd.f32 %v3446, %v3449
    %vm3451 = vweird.f32 %v3430
    %vm3452 = vweird.f32 %v3446
    %vm3453 = vmor %vm3451, %vm3452
    %v3454 = vsel %vm3453, %v3446, %v3450
    %v3455 = vand.u32 2147483647, %v3430
    %vm3456 = vcmp.eq.f32.partialorder %v3455, 8.507059e+37
    %v3457 = vand.u32 %v3430, 2147483648
    %v3458 = vor.u32 1.1754944e-38, %v3457
    %v3459 = vsel %vm3456, %v3458, %v3454
    %v3460 = vmul.f32 1.0, %v3459
    %v3461 = vxor.u32 %v3416, 2147483648
    %v3462 = vxor.u32 %v3420, 2147483648
    %v3463 = vmul.f32 %v3461, 1.442695
    %v3464 = vpow.pop %v3463
    %v3465 = vmul.f32 %v3462, 1.442695
    %v3466 = vpow.pop %v3465
    %v3467 = vadd.f32 %v3464, 1.0
    %v3468 = vadd.f32 %v3466, 1.0
    %v3469 = vrcp.pop %v3467
    %v3470 = vmul.f32 %v3467, %v3469
    %v3471 = vsub.f32 1.0, %v3470
    %v3472 = vmul.f32 %v3469, %v3471
    %v3473 = vadd.f32 %v3469, %v3472
    %vm3474 = vweird.f32 %v3467
    %vm3475 = vweird.f32 %v3469
    %vm3476 = vmor %vm3474, %vm3475
    %v3477 = vsel %vm3476, %v3469, %v3473
    %v3478 = vand.u32 2147483647, %v3467
    %vm3479 = vcmp.eq.f32.partialorder %v3478, 8.507059e+37
    %v3480 = vand.u32 %v3467, 2147483648
    %v3481 = vor.u32 1.1754944e-38, %v3480
    %v3482 = vsel %vm3479, %v3481, %v3477
    %v3483 = vmul.f32 1.0, %v3482
    %v3484 = vrcp.pop %v3468
    %v3485 = vmul.f32 %v3468, %v3484
    %v3486 = vsub.f32 1.0, %v3485
    %v3487 = vmul.f32 %v3484, %v3486
    %v3488 = vadd.f32 %v3484, %v3487
    %vm3489 = vweird.f32 %v3468
    %vm3490 = vweird.f32 %v3484
    %vm3491 = vmor %vm3489, %vm3490
    %v3492 = vsel %vm3491, %v3484, %v3488
    %v3493 = vand.u32 2147483647, %v3468
    %vm3494 = vcmp.eq.f32.partialorder %v3493, 8.507059e+37
    %v3495 = vand.u32 %v3468, 2147483648
    %v3496 = vor.u32 1.1754944e-38, %v3495
    %v3497 = vsel %vm3494, %v3496, %v3492
    %v3498 = vmul.f32 1.0, %v3497
    %v3499 = vtanh.pop %v3417
    %v3500 = vtanh.pop %v3421
    %v3501 = vxor.u32 %v3418, 2147483648
    %v3502 = vxor.u32 %v3422, 2147483648
    %v3503 = vmul.f32 %v3501, 1.442695
    %v3504 = vpow.pop %v3503
    %v3505 = vmul.f32 %v3502, 1.442695
    %v3506 = vpow.pop %v3505
    %v3507 = vadd.f32 %v3504, 1.0
    %v3508 = vadd.f32 %v3506, 1.0
    %v3509 = vrcp.pop %v3507
    %v3510 = vmul.f32 %v3507, %v3509
    %v3511 = vsub.f32 1.0, %v3510
    %v3512 = vmul.f32 %v3509, %v3511
    %v3513 = vadd.f32 %v3509, %v3512
    %vm3514 = vweird.f32 %v3507
    %vm3515 = vweird.f32 %v3509
    %vm3516 = vmor %vm3514, %vm3515
    %v3517 = vsel %vm3516, %v3509, %v3513
    %v3518 = vand.u32 2147483647, %v3507
    %vm3519 = vcmp.eq.f32.partialorder %v3518, 8.507059e+37
    %v3520 = vand.u32 %v3507, 2147483648
    %v3521 = vor.u32 1.1754944e-38, %v3520
    %v3522 = vsel %vm3519, %v3521, %v3517
    %v3523 = vmul.f32 1.0, %v3522
    %v3524 = vrcp.pop %v3508
    %v3525 = vmul.f32 %v3508, %v3524
    %v3526 = vsub.f32 1.0, %v3525
    %v3527 = vmul.f32 %v3524, %v3526
    %v3528 = vadd.f32 %v3524, %v3527
    %vm3529 = vweird.f32 %v3508
    %vm3530 = vweird.f32 %v3524
    %vm3531 = vmor %vm3529, %vm3530
    %v3532 = vsel %vm3531, %v3524, %v3528
    %v3533 = vand.u32 2147483647, %v3508
    %vm3534 = vcmp.eq.f32.partialorder %v3533, 8.507059e+37
    %v3535 = vand.u32 %v3508, 2147483648
    %v3536 = vor.u32 1.1754944e-38, %v3535
    %v3537 = vsel %vm3534, %v3536, %v3532
    %v3538 = vmul.f32 1.0, %v3537
    %v3539 = vmul.f32 %v3483, %v3133
    %v3540 = vmul.f32 %v3498, %v3134
    %v3541 = vmul.f32 %v3445, %v3499
    %v3542 = vmul.f32 %v3460, %v3500
    %v3543 = vadd.f32 %v3539, %v3541
    %v3544 = vadd.f32 %v3540, %v3542
    %v3545 = vtanh.pop %v3543
    %v3546 = vtanh.pop %v3544
    %v3547 = vmul.f32 %v3523, %v3545
    %v3548 = vmul.f32 %v3538, %v3546
    %v3549 = vpack.c.bf16 %v3547, %v3547
    %v3550 = vpack.c.bf16 %v3548, %v3548
    %s3551 = smul.addr %s3148, 4
    %s3552 = scalar_lea.vmem [#allocation2], %s3551
    %3553 = vst [vmem:[%s3552] sm:$0xf] %v3549
    %3554 = vst [vmem:[%s3552 + $0x4] sm:$0xf] %v3550
    %s3555 = sadd.s32 %s3145, 2
    %s3556 = smul.u32 %s3555, 16
    %s3557 = sshra.s32 %s3556, 3
    %s3558 = sand.u32 %s3556, 7
    %s3559 = smul.u32 %s3557, 4
    %s3560 = smul.addr %s3559, 8
    %s3561 = scalar_lea.vmem [#allocation3], %s3560
    %v3562 = vld [vmem:[%s3561] sm:$0xff]
    %v3563 = vld [vmem:[%s3561 + $0x8] sm:$0xff]
    %v3564 = vld [vmem:[%s3561 + $0x10] sm:$0xff]
    %v3565 = vld [vmem:[%s3561 + $0x18] sm:$0xff]
    %v3566 = vld [vmem:[%s3561 + $0x20] sm:$0xff]
    %v3567 = vld [vmem:[%s3561 + $0x28] sm:$0xff]
    %v3568 = vld [vmem:[%s3561 + $0x30] sm:$0xff]
    %v3569 = vld [vmem:[%s3561 + $0x38] sm:$0xff]
    %v3570 = vld [vmem:[%s7] sm:$0xff]
    %v3571 = vld [vmem:[%s7 + $0x8] sm:$0xff]
    %v3572 = vld [vmem:[%s7 + $0x10] sm:$0xff]
    %v3573 = vld [vmem:[%s7 + $0x18] sm:$0xff]
    %v3574 = vld [vmem:[%s7 + $0x20] sm:$0xff]
    %v3575 = vld [vmem:[%s7 + $0x28] sm:$0xff]
    %v3576 = vld [vmem:[%s7 + $0x30] sm:$0xff]
    %v3577 = vld [vmem:[%s7 + $0x38] sm:$0xff]
    %v3578 = vld [vmem:[%s7 + $0x40] sm:$0xff]
    %v3579 = vld [vmem:[%s7 + $0x48] sm:$0xff]
    %v3580 = vld [vmem:[%s7 + $0x50] sm:$0xff]
    %v3581 = vld [vmem:[%s7 + $0x58] sm:$0xff]
    %v3582 = vld [vmem:[%s7 + $0x60] sm:$0xff]
    %v3583 = vld [vmem:[%s7 + $0x68] sm:$0xff]
    %v3584 = vld [vmem:[%s7 + $0x70] sm:$0xff]
    %v3585 = vld [vmem:[%s7 + $0x78] sm:$0xff]
    %v3586 = vld [vmem:[%s7 + $0x80] sm:$0xff]
    %v3587 = vld [vmem:[%s7 + $0x88] sm:$0xff]
    %v3588 = vld [vmem:[%s7 + $0x90] sm:$0xff]
    %v3589 = vld [vmem:[%s7 + $0x98] sm:$0xff]
    %v3590 = vld [vmem:[%s7 + $0xa0] sm:$0xff]
    %v3591 = vld [vmem:[%s7 + $0xa8] sm:$0xff]
    %v3592 = vld [vmem:[%s7 + $0xb0] sm:$0xff]
    %v3593 = vld [vmem:[%s7 + $0xb8] sm:$0xff]
    %v3594 = vld [vmem:[%s7 + $0xc0] sm:$0xff]
    %v3595 = vld [vmem:[%s7 + $0xc8] sm:$0xff]
    %v3596 = vld [vmem:[%s7 + $0xd0] sm:$0xff]
    %v3597 = vld [vmem:[%s7 + $0xd8] sm:$0xff]
    %v3598 = vld [vmem:[%s7 + $0xe0] sm:$0xff]
    %v3599 = vld [vmem:[%s7 + $0xe8] sm:$0xff]
    %v3600 = vld [vmem:[%s7 + $0xf0] sm:$0xff]
    %v3601 = vld [vmem:[%s7 + $0xf8] sm:$0xff]
    %v3604 = vunpack.c.l.b16 %v3549
    %v3605 = vunpack.c.l.b16 %v3550
    %v3606 = vpack.c.b16 %v3605, %v3604
    %v3640 = vunpack.c.l.b16 %v3570
    %v3641 = vunpack.c.h.b16 %v3570
    %v3642 = vunpack.c.l.b16 %v3571
    %v3643 = vunpack.c.h.b16 %v3571
    %v3644 = vunpack.c.l.b16 %v3572
    %v3645 = vunpack.c.h.b16 %v3572
    %v3646 = vunpack.c.l.b16 %v3573
    %v3647 = vunpack.c.h.b16 %v3573
    %v3648 = vunpack.c.l.b16 %v3574
    %v3649 = vunpack.c.h.b16 %v3574
    %v3650 = vunpack.c.l.b16 %v3575
    %v3651 = vunpack.c.h.b16 %v3575
    %v3652 = vunpack.c.l.b16 %v3576
    %v3653 = vunpack.c.h.b16 %v3576
    %v3654 = vunpack.c.l.b16 %v3577
    %v3655 = vunpack.c.h.b16 %v3577
    %v3656 = vunpack.c.l.b16 %v3578
    %v3657 = vunpack.c.h.b16 %v3578
    %v3658 = vunpack.c.l.b16 %v3579
    %v3659 = vunpack.c.h.b16 %v3579
    %v3660 = vunpack.c.l.b16 %v3580
    %v3661 = vunpack.c.h.b16 %v3580
    %v3662 = vunpack.c.l.b16 %v3581
    %v3663 = vunpack.c.h.b16 %v3581
    %v3664 = vunpack.c.l.b16 %v3582
    %v3665 = vunpack.c.h.b16 %v3582
    %v3666 = vunpack.c.l.b16 %v3583
    %v3667 = vunpack.c.h.b16 %v3583
    %v3668 = vunpack.c.l.b16 %v3584
    %v3669 = vunpack.c.h.b16 %v3584
    %v3670 = vunpack.c.l.b16 %v3585
    %v3671 = vunpack.c.h.b16 %v3585
    %v3672 = vunpack.c.l.b16 %v3586
    %v3673 = vunpack.c.h.b16 %v3586
    %v3674 = vunpack.c.l.b16 %v3587
    %v3675 = vunpack.c.h.b16 %v3587
    %v3676 = vunpack.c.l.b16 %v3588
    %v3677 = vunpack.c.h.b16 %v3588
    %v3678 = vunpack.c.l.b16 %v3589
    %v3679 = vunpack.c.h.b16 %v3589
    %v3680 = vunpack.c.l.b16 %v3590
    %v3681 = vunpack.c.h.b16 %v3590
    %v3682 = vunpack.c.l.b16 %v3591
    %v3683 = vunpack.c.h.b16 %v3591
    %v3684 = vunpack.c.l.b16 %v3592
    %v3685 = vunpack.c.h.b16 %v3592
    %v3686 = vunpack.c.l.b16 %v3593
    %v3687 = vunpack.c.h.b16 %v3593
    %v3688 = vunpack.c.l.b16 %v3594
    %v3689 = vunpack.c.h.b16 %v3594
    %v3690 = vunpack.c.l.b16 %v3595
    %v3691 = vunpack.c.h.b16 %v3595
    %v3692 = vunpack.c.l.b16 %v3596
    %v3693 = vunpack.c.h.b16 %v3596
    %v3694 = vunpack.c.l.b16 %v3597
    %v3695 = vunpack.c.h.b16 %v3597
    %v3696 = vunpack.c.l.b16 %v3598
    %v3697 = vunpack.c.h.b16 %v3598
    %v3698 = vunpack.c.l.b16 %v3599
    %v3699 = vunpack.c.h.b16 %v3599
    %v3700 = vunpack.c.l.b16 %v3600
    %v3701 = vunpack.c.h.b16 %v3600
    %v3702 = vunpack.c.l.b16 %v3601
    %v3703 = vunpack.c.h.b16 %v3601
    %v3704 = vpack.c.b16 %v3644, %v3640
    %v3705 = vpack.c.b16 %v3645, %v3641
    %v3706 = vpack.c.b16 %v3646, %v3642
    %v3707 = vpack.c.b16 %v3647, %v3643
    %v3708 = vpack.c.b16 %v3652, %v3648
    %v3709 = vpack.c.b16 %v3653, %v3649
    %v3710 = vpack.c.b16 %v3654, %v3650
    %v3711 = vpack.c.b16 %v3655, %v3651
    %v3712 = vpack.c.b16 %v3660, %v3656
    %v3713 = vpack.c.b16 %v3661, %v3657
    %v3714 = vpack.c.b16 %v3662, %v3658
    %v3715 = vpack.c.b16 %v3663, %v3659
    %v3716 = vpack.c.b16 %v3668, %v3664
    %v3717 = vpack.c.b16 %v3669, %v3665
    %v3718 = vpack.c.b16 %v3670, %v3666
    %v3719 = vpack.c.b16 %v3671, %v3667
    %v3720 = vpack.c.b16 %v3676, %v3672
    %v3721 = vpack.c.b16 %v3677, %v3673
    %v3722 = vpack.c.b16 %v3678, %v3674
    %v3723 = vpack.c.b16 %v3679, %v3675
    %v3724 = vpack.c.b16 %v3684, %v3680
    %v3725 = vpack.c.b16 %v3685, %v3681
    %v3726 = vpack.c.b16 %v3686, %v3682
    %v3727 = vpack.c.b16 %v3687, %v3683
    %v3728 = vpack.c.b16 %v3692, %v3688
    %v3729 = vpack.c.b16 %v3693, %v3689
    %v3730 = vpack.c.b16 %v3694, %v3690
    %v3731 = vpack.c.b16 %v3695, %v3691
    %v3732 = vpack.c.b16 %v3700, %v3696
    %v3733 = vpack.c.b16 %v3701, %v3697
    %v3734 = vpack.c.b16 %v3702, %v3698
    %v3735 = vpack.c.b16 %v3703, %v3699
    %3768 = vmatpush.bf16.msra.mxu0 %v3732
    %3769 = vmatpush.bf16.msra.mxu0 %v3728
    %3770 = vmatpush.bf16.msra.mxu0 %v3724
    %3771 = vmatpush.bf16.msra.mxu0 %v3720
    %3772 = vmatpush.bf16.msra.mxu0 %v3716
    %3773 = vmatpush.bf16.msra.mxu0 %v3712
    %3774 = vmatpush.bf16.msra.mxu0 %v3708
    %3775 = vmatpush.bf16.msra.mxu0 %v3704
    %3776 = vmatmul.bf16.gmra.mxu0 %v3606
    %v3777 = vpop.f32.mrf.mxu0
    %v3778 = vadd.f32 0.0, %v3777
    %v3779 = vpop.f32.mrf.mxu0
    %v3780 = vadd.f32 0.0, %v3779
    %3781 = vdwg.mxu0
    %3782 = vmatpush.bf16.msra.mxu0 %v3733
    %3783 = vmatpush.bf16.msra.mxu0 %v3729
    %3784 = vmatpush.bf16.msra.mxu0 %v3725
    %3785 = vmatpush.bf16.msra.mxu0 %v3721
    %3786 = vmatpush.bf16.msra.mxu0 %v3717
    %3787 = vmatpush.bf16.msra.mxu0 %v3713
    %3788 = vmatpush.bf16.msra.mxu0 %v3709
    %3789 = vmatpush.bf16.msra.mxu0 %v3705
    %3790 = vmatmul.bf16.gmra.mxu0 %v3606
    %v3791 = vpop.f32.mrf.mxu0
    %v3792 = vadd.f32 0.0, %v3791
    %v3793 = vpop.f32.mrf.mxu0
    %v3794 = vadd.f32 0.0, %v3793
    %3795 = vdwg.mxu0
    %3796 = vmatpush.bf16.msra.mxu0 %v3734
    %3797 = vmatpush.bf16.msra.mxu0 %v3730
    %3798 = vmatpush.bf16.msra.mxu0 %v3726
    %3799 = vmatpush.bf16.msra.mxu0 %v3722
    %3800 = vmatpush.bf16.msra.mxu0 %v3718
    %3801 = vmatpush.bf16.msra.mxu0 %v3714
    %3802 = vmatpush.bf16.msra.mxu0 %v3710
    %3803 = vmatpush.bf16.msra.mxu0 %v3706
    %3804 = vmatmul.bf16.gmra.mxu0 %v3606
    %v3805 = vpop.f32.mrf.mxu0
    %v3806 = vadd.f32 0.0, %v3805
    %v3807 = vpop.f32.mrf.mxu0
    %v3808 = vadd.f32 0.0, %v3807
    %3809 = vdwg.mxu0
    %3810 = vmatpush.bf16.msra.mxu0 %v3735
    %3811 = vmatpush.bf16.msra.mxu0 %v3731
    %3812 = vmatpush.bf16.msra.mxu0 %v3727
    %3813 = vmatpush.bf16.msra.mxu0 %v3723
    %3814 = vmatpush.bf16.msra.mxu0 %v3719
    %3815 = vmatpush.bf16.msra.mxu0 %v3715
    %3816 = vmatpush.bf16.msra.mxu0 %v3711
    %3817 = vmatpush.bf16.msra.mxu0 %v3707
    %3818 = vmatmul.bf16.gmra.mxu0 %v3606
    %v3819 = vpop.f32.mrf.mxu0
    %v3820 = vadd.f32 0.0, %v3819
    %v3821 = vpop.f32.mrf.mxu0
    %v3822 = vadd.f32 0.0, %v3821
    %3823 = vdwg.mxu0
    %v3824 = vadd.f32 %v3562, %v3778
    %v3825 = vadd.f32 %v3563, %v3792
    %v3826 = vadd.f32 %v3564, %v3806
    %v3827 = vadd.f32 %v3565, %v3820
    %v3828 = vadd.f32 %v3566, %v3780
    %v3829 = vadd.f32 %v3567, %v3794
    %v3830 = vadd.f32 %v3568, %v3808
    %v3831 = vadd.f32 %v3569, %v3822
    %v3832 = vxor.u32 %v3824, 2147483648
    %v3833 = vxor.u32 %v3828, 2147483648
    %v3834 = vmul.f32 %v3832, 1.442695
    %v3835 = vpow.pop %v3834
    %v3836 = vmul.f32 %v3833, 1.442695
    %v3837 = vpow.pop %v3836
    %v3838 = vadd.f32 %v3835, 1.0
    %v3839 = vadd.f32 %v3837, 1.0
    %v3840 = vrcp.pop %v3838
    %v3841 = vmul.f32 %v3838, %v3840
    %v3842 = vsub.f32 1.0, %v3841
    %v3843 = vmul.f32 %v3840, %v3842
    %v3844 = vadd.f32 %v3840, %v3843
    %vm3845 = vweird.f32 %v3838
    %vm3846 = vweird.f32 %v3840
    %vm3847 = vmor %vm3845, %vm3846
    %v3848 = vsel %vm3847, %v3840, %v3844
    %v3849 = vand.u32 2147483647, %v3838
    %vm3850 = vcmp.eq.f32.partialorder %v3849, 8.507059e+37
    %v3851 = vand.u32 %v3838, 2147483648
    %v3852 = vor.u32 1.1754944e-38, %v3851
    %v3853 = vsel %vm3850, %v3852, %v3848
    %v3854 = vmul.f32 1.0, %v3853
    %v3855 = vrcp.pop %v3839
    %v3856 = vmul.f32 %v3839, %v3855
    %v3857 = vsub.f32 1.0, %v3856
    %v3858 = vmul.f32 %v3855, %v3857
    %v3859 = vadd.f32 %v3855, %v3858
    %vm3860 = vweird.f32 %v3839
    %vm3861 = vweird.f32 %v3855
    %vm3862 = vmor %vm3860, %vm3861
    %v3863 = vsel %vm3862, %v3855, %v3859
    %v3864 = vand.u32 2147483647, %v3839
    %vm3865 = vcmp.eq.f32.partialorder %v3864, 8.507059e+37
    %v3866 = vand.u32 %v3839, 2147483648
    %v3867 = vor.u32 1.1754944e-38, %v3866
    %v3868 = vsel %vm3865, %v3867, %v3863
    %v3869 = vmul.f32 1.0, %v3868
    %v3870 = vxor.u32 %v3825, 2147483648
    %v3871 = vxor.u32 %v3829, 2147483648
    %v3872 = vmul.f32 %v3870, 1.442695
    %v3873 = vpow.pop %v3872
    %v3874 = vmul.f32 %v3871, 1.442695
    %v3875 = vpow.pop %v3874
    %v3876 = vadd.f32 %v3873, 1.0
    %v3877 = vadd.f32 %v3875, 1.0
    %v3878 = vrcp.pop %v3876
    %v3879 = vmul.f32 %v3876, %v3878
    %v3880 = vsub.f32 1.0, %v3879
    %v3881 = vmul.f32 %v3878, %v3880
    %v3882 = vadd.f32 %v3878, %v3881
    %vm3883 = vweird.f32 %v3876
    %vm3884 = vweird.f32 %v3878
    %vm3885 = vmor %vm3883, %vm3884
    %v3886 = vsel %vm3885, %v3878, %v3882
    %v3887 = vand.u32 2147483647, %v3876
    %vm3888 = vcmp.eq.f32.partialorder %v3887, 8.507059e+37
    %v3889 = vand.u32 %v3876, 2147483648
    %v3890 = vor.u32 1.1754944e-38, %v3889
    %v3891 = vsel %vm3888, %v3890, %v3886
    %v3892 = vmul.f32 1.0, %v3891
    %v3893 = vrcp.pop %v3877
    %v3894 = vmul.f32 %v3877, %v3893
    %v3895 = vsub.f32 1.0, %v3894
    %v3896 = vmul.f32 %v3893, %v3895
    %v3897 = vadd.f32 %v3893, %v3896
    %vm3898 = vweird.f32 %v3877
    %vm3899 = vweird.f32 %v3893
    %vm3900 = vmor %vm3898, %vm3899
    %v3901 = vsel %vm3900, %v3893, %v3897
    %v3902 = vand.u32 2147483647, %v3877
    %vm3903 = vcmp.eq.f32.partialorder %v3902, 8.507059e+37
    %v3904 = vand.u32 %v3877, 2147483648
    %v3905 = vor.u32 1.1754944e-38, %v3904
    %v3906 = vsel %vm3903, %v3905, %v3901
    %v3907 = vmul.f32 1.0, %v3906
    %v3908 = vtanh.pop %v3826
    %v3909 = vtanh.pop %v3830
    %v3910 = vxor.u32 %v3827, 2147483648
    %v3911 = vxor.u32 %v3831, 2147483648
    %v3912 = vmul.f32 %v3910, 1.442695
    %v3913 = vpow.pop %v3912
    %v3914 = vmul.f32 %v3911, 1.442695
    %v3915 = vpow.pop %v3914
    %v3916 = vadd.f32 %v3913, 1.0
    %v3917 = vadd.f32 %v3915, 1.0
    %v3918 = vrcp.pop %v3916
    %v3919 = vmul.f32 %v3916, %v3918
    %v3920 = vsub.f32 1.0, %v3919
    %v3921 = vmul.f32 %v3918, %v3920
    %v3922 = vadd.f32 %v3918, %v3921
    %vm3923 = vweird.f32 %v3916
    %vm3924 = vweird.f32 %v3918
    %vm3925 = vmor %vm3923, %vm3924
    %v3926 = vsel %vm3925, %v3918, %v3922
    %v3927 = vand.u32 2147483647, %v3916
    %vm3928 = vcmp.eq.f32.partialorder %v3927, 8.507059e+37
    %v3929 = vand.u32 %v3916, 2147483648
    %v3930 = vor.u32 1.1754944e-38, %v3929
    %v3931 = vsel %vm3928, %v3930, %v3926
    %v3932 = vmul.f32 1.0, %v3931
    %v3933 = vrcp.pop %v3917
    %v3934 = vmul.f32 %v3917, %v3933
    %v3935 = vsub.f32 1.0, %v3934
    %v3936 = vmul.f32 %v3933, %v3935
    %v3937 = vadd.f32 %v3933, %v3936
    %vm3938 = vweird.f32 %v3917
    %vm3939 = vweird.f32 %v3933
    %vm3940 = vmor %vm3938, %vm3939
    %v3941 = vsel %vm3940, %v3933, %v3937
    %v3942 = vand.u32 2147483647, %v3917
    %vm3943 = vcmp.eq.f32.partialorder %v3942, 8.507059e+37
    %v3944 = vand.u32 %v3917, 2147483648
    %v3945 = vor.u32 1.1754944e-38, %v3944
    %v3946 = vsel %vm3943, %v3945, %v3941
    %v3947 = vmul.f32 1.0, %v3946
    %v3948 = vmul.f32 %v3892, %v3543
    %v3949 = vmul.f32 %v3907, %v3544
    %v3950 = vmul.f32 %v3854, %v3908
    %v3951 = vmul.f32 %v3869, %v3909
    %v3952 = vadd.f32 %v3948, %v3950
    %v3953 = vadd.f32 %v3949, %v3951
    %v3954 = vtanh.pop %v3952
    %v3955 = vtanh.pop %v3953
    %v3956 = vmul.f32 %v3932, %v3954
    %v3957 = vmul.f32 %v3947, %v3955
    %v3958 = vpack.c.bf16 %v3956, %v3956
    %v3959 = vpack.c.bf16 %v3957, %v3957
    %s3960 = smul.addr %s3557, 4
    %s3961 = scalar_lea.vmem [#allocation2], %s3960
    %3962 = vst [vmem:[%s3961] sm:$0xf] %v3958
    %3963 = vst [vmem:[%s3961 + $0x4] sm:$0xf] %v3959
    %s3964 = sadd.s32 %s3145, 3
    %s3965 = smul.u32 %s3964, 16
    %s3966 = sshra.s32 %s3965, 3
    %s3967 = sand.u32 %s3965, 7
    %s3968 = smul.u32 %s3966, 4
    %s3969 = smul.addr %s3968, 8
    %s3970 = scalar_lea.vmem [#allocation3], %s3969
    %v3971 = vld [vmem:[%s3970] sm:$0xff]
    %v3972 = vld [vmem:[%s3970 + $0x8] sm:$0xff]
    %v3973 = vld [vmem:[%s3970 + $0x10] sm:$0xff]
    %v3974 = vld [vmem:[%s3970 + $0x18] sm:$0xff]
    %v3975 = vld [vmem:[%s3970 + $0x20] sm:$0xff]
    %v3976 = vld [vmem:[%s3970 + $0x28] sm:$0xff]
    %v3977 = vld [vmem:[%s3970 + $0x30] sm:$0xff]
    %v3978 = vld [vmem:[%s3970 + $0x38] sm:$0xff]
    %v3979 = vld [vmem:[%s7] sm:$0xff]
    %v3980 = vld [vmem:[%s7 + $0x8] sm:$0xff]
    %v3981 = vld [vmem:[%s7 + $0x10] sm:$0xff]
    %v3982 = vld [vmem:[%s7 + $0x18] sm:$0xff]
    %v3983 = vld [vmem:[%s7 + $0x20] sm:$0xff]
    %v3984 = vld [vmem:[%s7 + $0x28] sm:$0xff]
    %v3985 = vld [vmem:[%s7 + $0x30] sm:$0xff]
    %v3986 = vld [vmem:[%s7 + $0x38] sm:$0xff]
    %v3987 = vld [vmem:[%s7 + $0x40] sm:$0xff]
    %v3988 = vld [vmem:[%s7 + $0x48] sm:$0xff]
    %v3989 = vld [vmem:[%s7 + $0x50] sm:$0xff]
    %v3990 = vld [vmem:[%s7 + $0x58] sm:$0xff]
    %v3991 = vld [vmem:[%s7 + $0x60] sm:$0xff]
    %v3992 = vld [vmem:[%s7 + $0x68] sm:$0xff]
    %v3993 = vld [vmem:[%s7 + $0x70] sm:$0xff]
    %v3994 = vld [vmem:[%s7 + $0x78] sm:$0xff]
    %v3995 = vld [vmem:[%s7 + $0x80] sm:$0xff]
    %v3996 = vld [vmem:[%s7 + $0x88] sm:$0xff]
    %v3997 = vld [vmem:[%s7 + $0x90] sm:$0xff]
    %v3998 = vld [vmem:[%s7 + $0x98] sm:$0xff]
    %v3999 = vld [vmem:[%s7 + $0xa0] sm:$0xff]
    %v4000 = vld [vmem:[%s7 + $0xa8] sm:$0xff]
    %v4001 = vld [vmem:[%s7 + $0xb0] sm:$0xff]
    %v4002 = vld [vmem:[%s7 + $0xb8] sm:$0xff]
    %v4003 = vld [vmem:[%s7 + $0xc0] sm:$0xff]
    %v4004 = vld [vmem:[%s7 + $0xc8] sm:$0xff]
    %v4005 = vld [vmem:[%s7 + $0xd0] sm:$0xff]
    %v4006 = vld [vmem:[%s7 + $0xd8] sm:$0xff]
    %v4007 = vld [vmem:[%s7 + $0xe0] sm:$0xff]
    %v4008 = vld [vmem:[%s7 + $0xe8] sm:$0xff]
    %v4009 = vld [vmem:[%s7 + $0xf0] sm:$0xff]
    %v4010 = vld [vmem:[%s7 + $0xf8] sm:$0xff]
    %v4013 = vunpack.c.l.b16 %v3958
    %v4014 = vunpack.c.l.b16 %v3959
    %v4015 = vpack.c.b16 %v4014, %v4013
    %v4049 = vunpack.c.l.b16 %v3979
    %v4050 = vunpack.c.h.b16 %v3979
    %v4051 = vunpack.c.l.b16 %v3980
    %v4052 = vunpack.c.h.b16 %v3980
    %v4053 = vunpack.c.l.b16 %v3981
    %v4054 = vunpack.c.h.b16 %v3981
    %v4055 = vunpack.c.l.b16 %v3982
    %v4056 = vunpack.c.h.b16 %v3982
    %v4057 = vunpack.c.l.b16 %v3983
    %v4058 = vunpack.c.h.b16 %v3983
    %v4059 = vunpack.c.l.b16 %v3984
    %v4060 = vunpack.c.h.b16 %v3984
    %v4061 = vunpack.c.l.b16 %v3985
    %v4062 = vunpack.c.h.b16 %v3985
    %v4063 = vunpack.c.l.b16 %v3986
    %v4064 = vunpack.c.h.b16 %v3986
    %v4065 = vunpack.c.l.b16 %v3987
    %v4066 = vunpack.c.h.b16 %v3987
    %v4067 = vunpack.c.l.b16 %v3988
    %v4068 = vunpack.c.h.b16 %v3988
    %v4069 = vunpack.c.l.b16 %v3989
    %v4070 = vunpack.c.h.b16 %v3989
    %v4071 = vunpack.c.l.b16 %v3990
    %v4072 = vunpack.c.h.b16 %v3990
    %v4073 = vunpack.c.l.b16 %v3991
    %v4074 = vunpack.c.h.b16 %v3991
    %v4075 = vunpack.c.l.b16 %v3992
    %v4076 = vunpack.c.h.b16 %v3992
    %v4077 = vunpack.c.l.b16 %v3993
    %v4078 = vunpack.c.h.b16 %v3993
    %v4079 = vunpack.c.l.b16 %v3994
    %v4080 = vunpack.c.h.b16 %v3994
    %v4081 = vunpack.c.l.b16 %v3995
    %v4082 = vunpack.c.h.b16 %v3995
    %v4083 = vunpack.c.l.b16 %v3996
    %v4084 = vunpack.c.h.b16 %v3996
    %v4085 = vunpack.c.l.b16 %v3997
    %v4086 = vunpack.c.h.b16 %v3997
    %v4087 = vunpack.c.l.b16 %v3998
    %v4088 = vunpack.c.h.b16 %v3998
    %v4089 = vunpack.c.l.b16 %v3999
    %v4090 = vunpack.c.h.b16 %v3999
    %v4091 = vunpack.c.l.b16 %v4000
    %v4092 = vunpack.c.h.b16 %v4000
    %v4093 = vunpack.c.l.b16 %v4001
    %v4094 = vunpack.c.h.b16 %v4001
    %v4095 = vunpack.c.l.b16 %v4002
    %v4096 = vunpack.c.h.b16 %v4002
    %v4097 = vunpack.c.l.b16 %v4003
    %v4098 = vunpack.c.h.b16 %v4003
    %v4099 = vunpack.c.l.b16 %v4004
    %v4100 = vunpack.c.h.b16 %v4004
    %v4101 = vunpack.c.l.b16 %v4005
    %v4102 = vunpack.c.h.b16 %v4005
    %v4103 = vunpack.c.l.b16 %v4006
    %v4104 = vunpack.c.h.b16 %v4006
    %v4105 = vunpack.c.l.b16 %v4007
    %v4106 = vunpack.c.h.b16 %v4007
    %v4107 = vunpack.c.l.b16 %v4008
    %v4108 = vunpack.c.h.b16 %v4008
    %v4109 = vunpack.c.l.b16 %v4009
    %v4110 = vunpack.c.h.b16 %v4009
    %v4111 = vunpack.c.l.b16 %v4010
    %v4112 = vunpack.c.h.b16 %v4010
    %v4113 = vpack.c.b16 %v4053, %v4049
    %v4114 = vpack.c.b16 %v4054, %v4050
    %v4115 = vpack.c.b16 %v4055, %v4051
    %v4116 = vpack.c.b16 %v4056, %v4052
    %v4117 = vpack.c.b16 %v4061, %v4057
    %v4118 = vpack.c.b16 %v4062, %v4058
    %v4119 = vpack.c.b16 %v4063, %v4059
    %v4120 = vpack.c.b16 %v4064, %v4060
    %v4121 = vpack.c.b16 %v4069, %v4065
    %v4122 = vpack.c.b16 %v4070, %v4066
    %v4123 = vpack.c.b16 %v4071, %v4067
    %v4124 = vpack.c.b16 %v4072, %v4068
    %v4125 = vpack.c.b16 %v4077, %v4073
    %v4126 = vpack.c.b16 %v4078, %v4074
    %v4127 = vpack.c.b16 %v4079, %v4075
    %v4128 = vpack.c.b16 %v4080, %v4076
    %v4129 = vpack.c.b16 %v4085, %v4081
    %v4130 = vpack.c.b16 %v4086, %v4082
    %v4131 = vpack.c.b16 %v4087, %v4083
    %v4132 = vpack.c.b16 %v4088, %v4084
    %v4133 = vpack.c.b16 %v4093, %v4089
    %v4134 = vpack.c.b16 %v4094, %v4090
    %v4135 = vpack.c.b16 %v4095, %v4091
    %v4136 = vpack.c.b16 %v4096, %v4092
    %v4137 = vpack.c.b16 %v4101, %v4097
    %v4138 = vpack.c.b16 %v4102, %v4098
    %v4139 = vpack.c.b16 %v4103, %v4099
    %v4140 = vpack.c.b16 %v4104, %v4100
    %v4141 = vpack.c.b16 %v4109, %v4105
    %v4142 = vpack.c.b16 %v4110, %v4106
    %v4143 = vpack.c.b16 %v4111, %v4107
    %v4144 = vpack.c.b16 %v4112, %v4108
    %4177 = vmatpush.bf16.msra.mxu0 %v4141
    %4178 = vmatpush.bf16.msra.mxu0 %v4137
    %4179 = vmatpush.bf16.msra.mxu0 %v4133
    %4180 = vmatpush.bf16.msra.mxu0 %v4129
    %4181 = vmatpush.bf16.msra.mxu0 %v4125
    %4182 = vmatpush.bf16.msra.mxu0 %v4121
    %4183 = vmatpush.bf16.msra.mxu0 %v4117
    %4184 = vmatpush.bf16.msra.mxu0 %v4113
    %4185 = vmatmul.bf16.gmra.mxu0 %v4015
    %v4186 = vpop.f32.mrf.mxu0
    %v4187 = vadd.f32 0.0, %v4186
    %v4188 = vpop.f32.mrf.mxu0
    %v4189 = vadd.f32 0.0, %v4188
    %4190 = vdwg.mxu0
    %4191 = vmatpush.bf16.msra.mxu0 %v4142
    %4192 = vmatpush.bf16.msra.mxu0 %v4138
    %4193 = vmatpush.bf16.msra.mxu0 %v4134
    %4194 = vmatpush.bf16.msra.mxu0 %v4130
    %4195 = vmatpush.bf16.msra.mxu0 %v4126
    %4196 = vmatpush.bf16.msra.mxu0 %v4122
    %4197 = vmatpush.bf16.msra.mxu0 %v4118
    %4198 = vmatpush.bf16.msra.mxu0 %v4114
    %4199 = vmatmul.bf16.gmra.mxu0 %v4015
    %v4200 = vpop.f32.mrf.mxu0
    %v4201 = vadd.f32 0.0, %v4200
    %v4202 = vpop.f32.mrf.mxu0
    %v4203 = vadd.f32 0.0, %v4202
    %4204 = vdwg.mxu0
    %4205 = vmatpush.bf16.msra.mxu0 %v4143
    %4206 = vmatpush.bf16.msra.mxu0 %v4139
    %4207 = vmatpush.bf16.msra.mxu0 %v4135
    %4208 = vmatpush.bf16.msra.mxu0 %v4131
    %4209 = vmatpush.bf16.msra.mxu0 %v4127
    %4210 = vmatpush.bf16.msra.mxu0 %v4123
    %4211 = vmatpush.bf16.msra.mxu0 %v4119
    %4212 = vmatpush.bf16.msra.mxu0 %v4115
    %4213 = vmatmul.bf16.gmra.mxu0 %v4015
    %v4214 = vpop.f32.mrf.mxu0
    %v4215 = vadd.f32 0.0, %v4214
    %v4216 = vpop.f32.mrf.mxu0
    %v4217 = vadd.f32 0.0, %v4216
    %4218 = vdwg.mxu0
    %4219 = vmatpush.bf16.msra.mxu0 %v4144
    %4220 = vmatpush.bf16.msra.mxu0 %v4140
    %4221 = vmatpush.bf16.msra.mxu0 %v4136
    %4222 = vmatpush.bf16.msra.mxu0 %v4132
    %4223 = vmatpush.bf16.msra.mxu0 %v4128
    %4224 = vmatpush.bf16.msra.mxu0 %v4124
    %4225 = vmatpush.bf16.msra.mxu0 %v4120
    %4226 = vmatpush.bf16.msra.mxu0 %v4116
    %4227 = vmatmul.bf16.gmra.mxu0 %v4015
    %v4228 = vpop.f32.mrf.mxu0
    %v4229 = vadd.f32 0.0, %v4228
    %v4230 = vpop.f32.mrf.mxu0
    %v4231 = vadd.f32 0.0, %v4230
    %4232 = vdwg.mxu0
    %v4233 = vadd.f32 %v3971, %v4187
    %v4234 = vadd.f32 %v3972, %v4201
    %v4235 = vadd.f32 %v3973, %v4215
    %v4236 = vadd.f32 %v3974, %v4229
    %v4237 = vadd.f32 %v3975, %v4189
    %v4238 = vadd.f32 %v3976, %v4203
    %v4239 = vadd.f32 %v3977, %v4217
    %v4240 = vadd.f32 %v3978, %v4231
    %v4241 = vxor.u32 %v4233, 2147483648
    %v4242 = vxor.u32 %v4237, 2147483648
    %v4243 = vmul.f32 %v4241, 1.442695
    %v4244 = vpow.pop %v4243
    %v4245 = vmul.f32 %v4242, 1.442695
    %v4246 = vpow.pop %v4245
    %v4247 = vadd.f32 %v4244, 1.0
    %v4248 = vadd.f32 %v4246, 1.0
    %v4249 = vrcp.pop %v4247
    %v4250 = vmul.f32 %v4247, %v4249
    %v4251 = vsub.f32 1.0, %v4250
    %v4252 = vmul.f32 %v4249, %v4251
    %v4253 = vadd.f32 %v4249, %v4252
    %vm4254 = vweird.f32 %v4247
    %vm4255 = vweird.f32 %v4249
    %vm4256 = vmor %vm4254, %vm4255
    %v4257 = vsel %vm4256, %v4249, %v4253
    %v4258 = vand.u32 2147483647, %v4247
    %vm4259 = vcmp.eq.f32.partialorder %v4258, 8.507059e+37
    %v4260 = vand.u32 %v4247, 2147483648
    %v4261 = vor.u32 1.1754944e-38, %v4260
    %v4262 = vsel %vm4259, %v4261, %v4257
    %v4263 = vmul.f32 1.0, %v4262
    %v4264 = vrcp.pop %v4248
    %v4265 = vmul.f32 %v4248, %v4264
    %v4266 = vsub.f32 1.0, %v4265
    %v4267 = vmul.f32 %v4264, %v4266
    %v4268 = vadd.f32 %v4264, %v4267
    %vm4269 = vweird.f32 %v4248
    %vm4270 = vweird.f32 %v4264
    %vm4271 = vmor %vm4269, %vm4270
    %v4272 = vsel %vm4271, %v4264, %v4268
    %v4273 = vand.u32 2147483647, %v4248
    %vm4274 = vcmp.eq.f32.partialorder %v4273, 8.507059e+37
    %v4275 = vand.u32 %v4248, 2147483648
    %v4276 = vor.u32 1.1754944e-38, %v4275
    %v4277 = vsel %vm4274, %v4276, %v4272
    %v4278 = vmul.f32 1.0, %v4277
    %v4279 = vxor.u32 %v4234, 2147483648
    %v4280 = vxor.u32 %v4238, 2147483648
    %v4281 = vmul.f32 %v4279, 1.442695
    %v4282 = vpow.pop %v4281
    %v4283 = vmul.f32 %v4280, 1.442695
    %v4284 = vpow.pop %v4283
    %v4285 = vadd.f32 %v4282, 1.0
    %v4286 = vadd.f32 %v4284, 1.0
    %v4287 = vrcp.pop %v4285
    %v4288 = vmul.f32 %v4285, %v4287
    %v4289 = vsub.f32 1.0, %v4288
    %v4290 = vmul.f32 %v4287, %v4289
    %v4291 = vadd.f32 %v4287, %v4290
    %vm4292 = vweird.f32 %v4285
    %vm4293 = vweird.f32 %v4287
    %vm4294 = vmor %vm4292, %vm4293
    %v4295 = vsel %vm4294, %v4287, %v4291
    %v4296 = vand.u32 2147483647, %v4285
    %vm4297 = vcmp.eq.f32.partialorder %v4296, 8.507059e+37
    %v4298 = vand.u32 %v4285, 2147483648
    %v4299 = vor.u32 1.1754944e-38, %v4298
    %v4300 = vsel %vm4297, %v4299, %v4295
    %v4301 = vmul.f32 1.0, %v4300
    %v4302 = vrcp.pop %v4286
    %v4303 = vmul.f32 %v4286, %v4302
    %v4304 = vsub.f32 1.0, %v4303
    %v4305 = vmul.f32 %v4302, %v4304
    %v4306 = vadd.f32 %v4302, %v4305
    %vm4307 = vweird.f32 %v4286
    %vm4308 = vweird.f32 %v4302
    %vm4309 = vmor %vm4307, %vm4308
    %v4310 = vsel %vm4309, %v4302, %v4306
    %v4311 = vand.u32 2147483647, %v4286
    %vm4312 = vcmp.eq.f32.partialorder %v4311, 8.507059e+37
    %v4313 = vand.u32 %v4286, 2147483648
    %v4314 = vor.u32 1.1754944e-38, %v4313
    %v4315 = vsel %vm4312, %v4314, %v4310
    %v4316 = vmul.f32 1.0, %v4315
    %v4317 = vtanh.pop %v4235
    %v4318 = vtanh.pop %v4239
    %v4319 = vxor.u32 %v4236, 2147483648
    %v4320 = vxor.u32 %v4240, 2147483648
    %v4321 = vmul.f32 %v4319, 1.442695
    %v4322 = vpow.pop %v4321
    %v4323 = vmul.f32 %v4320, 1.442695
    %v4324 = vpow.pop %v4323
    %v4325 = vadd.f32 %v4322, 1.0
    %v4326 = vadd.f32 %v4324, 1.0
    %v4327 = vrcp.pop %v4325
    %v4328 = vmul.f32 %v4325, %v4327
    %v4329 = vsub.f32 1.0, %v4328
    %v4330 = vmul.f32 %v4327, %v4329
    %v4331 = vadd.f32 %v4327, %v4330
    %vm4332 = vweird.f32 %v4325
    %vm4333 = vweird.f32 %v4327
    %vm4334 = vmor %vm4332, %vm4333
    %v4335 = vsel %vm4334, %v4327, %v4331
    %v4336 = vand.u32 2147483647, %v4325
    %vm4337 = vcmp.eq.f32.partialorder %v4336, 8.507059e+37
    %v4338 = vand.u32 %v4325, 2147483648
    %v4339 = vor.u32 1.1754944e-38, %v4338
    %v4340 = vsel %vm4337, %v4339, %v4335
    %v4341 = vmul.f32 1.0, %v4340
    %v4342 = vrcp.pop %v4326
    %v4343 = vmul.f32 %v4326, %v4342
    %v4344 = vsub.f32 1.0, %v4343
    %v4345 = vmul.f32 %v4342, %v4344
    %v4346 = vadd.f32 %v4342, %v4345
    %vm4347 = vweird.f32 %v4326
    %vm4348 = vweird.f32 %v4342
    %vm4349 = vmor %vm4347, %vm4348
    %v4350 = vsel %vm4349, %v4342, %v4346
    %v4351 = vand.u32 2147483647, %v4326
    %vm4352 = vcmp.eq.f32.partialorder %v4351, 8.507059e+37
    %v4353 = vand.u32 %v4326, 2147483648
    %v4354 = vor.u32 1.1754944e-38, %v4353
    %v4355 = vsel %vm4352, %v4354, %v4350
    %v4356 = vmul.f32 1.0, %v4355
    %v4357 = vmul.f32 %v4301, %v3952
    %v4358 = vmul.f32 %v4316, %v3953
    %v4359 = vmul.f32 %v4263, %v4317
    %v4360 = vmul.f32 %v4278, %v4318
    %v4361 = vadd.f32 %v4357, %v4359
    %v4362 = vadd.f32 %v4358, %v4360
    %v4363 = vtanh.pop %v4361
    %v4364 = vtanh.pop %v4362
    %v4365 = vmul.f32 %v4341, %v4363
    %v4366 = vmul.f32 %v4356, %v4364
    %v4367 = vpack.c.bf16 %v4365, %v4365
    %v4368 = vpack.c.bf16 %v4366, %v4366
    %s4369 = smul.addr %s3966, 4
    %s4370 = scalar_lea.vmem [#allocation2], %s4369
    %4371 = vst [vmem:[%s4370] sm:$0xf] %v4367
    %4372 = vst [vmem:[%s4370 + $0x4] sm:$0xf] %v4368
  $region57: #{rnn_classifier_forward.1} parent=0 // loop_footer
    %s2737 = sadd.s32 1, %s2733
  $region58: #{rnn_classifier_forward.1} parent=0 // loop_footer_branch
    %2732 = sbr.rel target = $region54
  $region59: #{rnn_classifier_forward.1} parent=0 // loop_exit
    _
  %s4373 = sld [smem:[#allocation4]]
  %s4374 = smul.u32 %s4373, 16
  %s4375 = sshra.s32 %s4374, 3
  %s4376 = sand.u32 %s4374, 7
  %s4377 = smul.addr %s4375, 4
  %s4378 = scalar_lea.vmem [#allocation2], %s4377
  %v4379 = vld [vmem:[%s4378] sm:$0xf]
  %v4380 = vld [vmem:[%s4378 + $0x4] sm:$0xf]
  %v4381 = vunpack.c.l.bf16 %v4379
  %v4382 = vunpack.c.l.bf16 %v4380
  %v4383 = vld [vmem:[%s1] sm:$0xff]
  %v4384 = vld [vmem:[%s1 + $0x8] sm:$0xff]
  %4386 = vset.pattern.permute.xlu0 0
  %4387 = vperm.xlu0 %4386, %v4383
  %v4388 = vpop.permute.xlu0 %4387
  %4391 = vset.pattern.permute.xlu0 0
  %4392 = vperm.xlu0 %4391, %v4384
  %v4393 = vpop.permute.xlu0 %4392
  %v4395 = vmul.f32 %v4381, %v4388
  %v4396 = vmul.f32 %v4382, %v4393
  %v4397 = vpack.c.bf16 %v4396, %v4395
  %v4398 = vld [vmem:[%s9] sm:$0xf]
  %v4399 = vld [vmem:[%s9 + $0x4] sm:$0xf]
  %v4400 = vld [vmem:[%s9 + $0x8] sm:$0xf]
  %v4401 = vld [vmem:[%s9 + $0xc] sm:$0xf]
  %v4402 = vld [vmem:[%s9 + $0x10] sm:$0xf]
  %v4403 = vld [vmem:[%s9 + $0x14] sm:$0xf]
  %v4404 = vld [vmem:[%s9 + $0x18] sm:$0xf]
  %v4405 = vld [vmem:[%s9 + $0x1c] sm:$0xf]
  %v4406 = vld [vmem:[%s9 + $0x20] sm:$0xf]
  %v4407 = vld [vmem:[%s9 + $0x24] sm:$0xf]
  %v4408 = vld [vmem:[%s9 + $0x28] sm:$0xf]
  %v4409 = vld [vmem:[%s9 + $0x2c] sm:$0xf]
  %v4410 = vld [vmem:[%s9 + $0x30] sm:$0xf]
  %v4411 = vld [vmem:[%s9 + $0x34] sm:$0xf]
  %v4412 = vld [vmem:[%s9 + $0x38] sm:$0xf]
  %v4413 = vld [vmem:[%s9 + $0x3c] sm:$0xf]
  %v4414 = vld [vmem:[%s10] sm:$0x1]
  %v4416 = vperm.slane %v4414, 0
  %v4434 = vunpack.c.l.b16 %v4398
  %v4435 = vunpack.c.l.b16 %v4399
  %v4436 = vunpack.c.l.b16 %v4400
  %v4437 = vunpack.c.l.b16 %v4401
  %v4438 = vunpack.c.l.b16 %v4402
  %v4439 = vunpack.c.l.b16 %v4403
  %v4440 = vunpack.c.l.b16 %v4404
  %v4441 = vunpack.c.l.b16 %v4405
  %v4442 = vunpack.c.l.b16 %v4406
  %v4443 = vunpack.c.l.b16 %v4407
  %v4444 = vunpack.c.l.b16 %v4408
  %v4445 = vunpack.c.l.b16 %v4409
  %v4446 = vunpack.c.l.b16 %v4410
  %v4447 = vunpack.c.l.b16 %v4411
  %v4448 = vunpack.c.l.b16 %v4412
  %v4449 = vunpack.c.l.b16 %v4413
  %v4450 = vpack.c.b16 %v4435, %v4434
  %v4451 = vpack.c.b16 %v4437, %v4436
  %v4452 = vpack.c.b16 %v4439, %v4438
  %v4453 = vpack.c.b16 %v4441, %v4440
  %v4454 = vpack.c.b16 %v4443, %v4442
  %v4455 = vpack.c.b16 %v4445, %v4444
  %v4456 = vpack.c.b16 %v4447, %v4446
  %v4457 = vpack.c.b16 %v4449, %v4448
  %4466 = vmatpush.bf16.msra.mxu0 %v4457
  %4467 = vmatpush.bf16.msra.mxu0 %v4456
  %4468 = vmatpush.bf16.msra.mxu0 %v4455
  %4469 = vmatpush.bf16.msra.mxu0 %v4454
  %4470 = vmatpush.bf16.msra.mxu0 %v4453
  %4471 = vmatpush.bf16.msra.mxu0 %v4452
  %4472 = vmatpush.bf16.msra.mxu0 %v4451
  %4473 = vmatpush.bf16.msra.mxu0 %v4450
  %4474 = vmatmul.bf16.gmra.mxu0 %v4397
  %v4475 = vpop.f32.mrf.mxu0
  %v4476 = vadd.f32 %v4416, %v4475
  %v4477 = vpop.f32.mrf.mxu0
  %v4478 = vadd.f32 %v4416, %v4477
  %4479 = vdwg.mxu0
  %4480 = vst [vmem:[%s11] sm:$0xff] %v4476
  %4481 = vst [vmem:[%s11 + $0x8] sm:$0xff] %v4478
  // Predicated region
  $region60: #{rnn_classifier_forward.1} parent=0 // pred_check
    _
  $region61: #{rnn_classifier_forward.1} parent=0 // pred_check_branch
    %4483 = sbr.rel (0) target = $region63
  $region62: #{rnn_classifier_forward.1} parent=0 // pred_region
    _
  $region63: #{rnn_classifier_forward.1} parent=0 // pred_fallthru
    _
  // Predicated region
  $region64: #{rnn_classifier_forward.1} parent=0 // pred_check
    _
  $region65: #{rnn_classifier_forward.1} parent=0 // pred_check_branch
    %4485 = sbr.rel (0) target = $region67
  $region66: #{rnn_classifier_forward.1} parent=0 // pred_region
    _
  $region67: #{rnn_classifier_forward.1} parent=0 // pred_fallthru
    _

</llo_original>
